<compile_context>
chip_gen: v6e
topology: v6e:2x2x1
jax: 0.10.0
libtpu: 0.0.40
codegen_flags: <defaults>
</compile_context>

<pallas_src>
import jax
import jax.numpy as jnp
import numpy as np
from jax.experimental import pallas as pl
from jax.experimental.pallas import tpu as pltpu

C = 600     # conv filters per n-gram branch (fixed by the module)
CP = 640    # lane-padded channel count (multiple of 128)


def bert_cnn_kernel(x_ref, wc_ref, bc_ref, mask_ref, wl_ref, bl_ref, out_ref):
    tb, S, E = x_ref.shape
    cp3 = wc_ref.shape[1]

    # Shared LHS for the three conv branches: [x_t, x_{t+1}, x_{t+2}] along K.
    # Row rolls wrap only into time positions zeroed by mask_ref below.
    # Rolls are done on unpacked f32 sublanes (proven lowering path); the MXU
    # operands are bf16.
    x0 = x_ref[...].reshape(tb * S, E)                        # bf16
    xf32 = x0.astype(jnp.float32)
    x1 = jnp.roll(xf32, -1, axis=0).astype(jnp.bfloat16)
    x2 = jnp.roll(xf32, -2, axis=0).astype(jnp.bfloat16)
    lhs = jnp.concatenate([x0, x1, x2], axis=1)               # (tb*S, 3E) bf16

    # One wide MXU matmul, f32 accumulation.  Column block j of the result is
    # the dk-summed conv activation of branch j+1.
    conv = jnp.dot(lhs, wc_ref[...], preferred_element_type=jnp.float32)
    conv = conv.reshape(tb, S, cp3)

    # Bias + ReLU in f32; zero invalid time steps with the precomputed,
    # grid-invariant mask (exact: ReLU >= 0 and max-pool follows), then
    # max-pool over time.
    h = jnp.maximum(conv + bc_ref[...], 0.0) * mask_ref[...]
    flat = jnp.max(h, axis=1)                                 # (tb, 3*CP) f32

    # TODO(synk): nn.Dropout layers are identity in eval/inference mode.
    out = jnp.dot(flat.astype(jnp.bfloat16), wl_ref[...],
                  preferred_element_type=jnp.float32)
    out_ref[...] = out + bl_ref[...]


def _pad2(a, rows, cols):
    return jnp.pad(a, ((0, rows - a.shape[0]), (0, cols - a.shape[1])))


def _vmem_budget_bytes():
    """Generation-aware working-set budget (v7x: 64 MiB VMEM, v5e/v6e: 128)."""
    try:
        cap = int(pltpu.get_tpu_info().vmem_capacity_bytes)
    except Exception:
        cap = 64 * 1024 * 1024          # assume the tightest (v7x-like) chip
    return min(44 * 1024 * 1024, (cap * 3) // 5)


def _choose_tb(B, S_pad, E_pad):
    """Batch tile: fill the MXU (conv-dot M = TB*S >= 512, classifier-dot
    M = TB >= 128), capped by the VMEM budget and by the batch (keep >= 2
    grid steps where possible so v7x's two TensorCores both get work)."""
    budget = _vmem_budget_bytes()
    # Per-unit-of-TB VMEM bytes (dominant terms):
    #   x tile bf16 x2 buffers: 4*S*E   | f32 roll temps: 12*S*E
    #   lhs bf16:               6*S*E   | conv + masked h (f32): 24*S*CP
    per_tb = S_pad * (22 * E_pad + 24 * CP)
    # Grid-invariant residents: bf16 weights, default double-buffered, + mask.
    fixed = 2 * 2 * (3 * E_pad * 3 * CP + 3 * CP * 128) \
        + 4 * S_pad * 3 * CP + (2 << 20)
    tb_vmem = max(8, ((max(budget - fixed, 0)) // per_tb) // 8 * 8)

    # MXU-fill target: TB >= 128 and TB*S >= 512, rounded to a sublane tile.
    tb_target = 8 * pl.cdiv(max(128, pl.cdiv(512, S_pad)), 8)

    # Don't over-pad tiny batches; keep >= 2 grid steps once the batch allows.
    b_pad8 = 8 * pl.cdiv(B, 8)
    tb_batch = max(8, (b_pad8 // 2) // 8 * 8) if b_pad8 >= 16 else 8

    return max(8, min(tb_target, tb_vmem, tb_batch))


@jax.jit
def bert_cnn_forward(x, params):
    w1, b1, w2, b2, w3, b3, wl, bl = params
    B, S, E = x.shape
    U = wl.shape[1]

    S_pad = 8 * pl.cdiv(S, 8)
    E_pad = 128 * pl.cdiv(E, 128)
    UP = 128 * pl.cdiv(U, 128)
    TB = _choose_tb(B, S_pad, E_pad)
    B_pad = TB * pl.cdiv(B, TB)

    # ---- weights: zero-pad channels to CP lanes, E to E_pad, pack branches --
    zero_ec = jnp.zeros((E_pad, CP), jnp.float32)

    def pad_c(w):                      # (E, C) -> (E_pad, CP)
        return _pad2(w, E_pad, CP)

    # Block RHS: column block j holds branch j+1; row blocks are the dk taps.
    col1 = jnp.concatenate([pad_c(w1[0]), zero_ec, zero_ec], axis=0)
    col2 = jnp.concatenate([pad_c(w2[0]), pad_c(w2[1]), zero_ec], axis=0)
    col3 = jnp.concatenate([pad_c(w3[0]), pad_c(w3[1]), pad_c(w3[2])], axis=0)
    w_conv = jnp.concatenate([col1, col2, col3], axis=1).astype(jnp.bfloat16)

    b_conv = jnp.concatenate(
        [_pad2(b1, 1, CP), _pad2(b2, 1, CP), _pad2(b3, 1, CP)], axis=1)

    w_lin = jnp.concatenate(
        [_pad2(wl[0 * C:1 * C], CP, UP),
         _pad2(wl[1 * C:2 * C], CP, UP),
         _pad2(wl[2 * C:3 * C], CP, UP)], axis=0).astype(jnp.bfloat16)
    b_lin = _pad2(bl, 1, UP)

    # Grid-invariant time-validity mask: 1 where conv position t exists for a
    # branch's window, 0 on the (k-1) tail rows and on the S padding.
    t_idx = jnp.arange(S_pad, dtype=jnp.int32)[:, None]            # (S_pad, 1)
    km1 = jnp.repeat(jnp.arange(3, dtype=jnp.int32), CP)[None, :]  # (1, 3*CP)
    mask = (t_idx < (S - km1)).astype(jnp.float32)                 # (S_pad, 3*CP)

    # bf16 input DMA (the kernel feeds the MXU bf16 anyway); pad B, S, E.
    x = jnp.pad(x, ((0, B_pad - B), (0, S_pad - S), (0, E_pad - E)))
    x = x.astype(jnp.bfloat16)

    out = pl.pallas_call(
        bert_cnn_kernel,
        out_shape=jax.ShapeDtypeStruct((B_pad, UP), jnp.float32),
        grid_spec=pltpu.PrefetchScalarGridSpec(
            num_scalar_prefetch=0,
            grid=(B_pad // TB,),
            in_specs=[
                pl.BlockSpec((TB, S_pad, E_pad), lambda i: (i, 0, 0)),
                # Grid-invariant operands (constant index maps): fetched once;
                # only the spare double-buffer copy costs VMEM, which the TB
                # budget above already accounts for.
                pl.BlockSpec((3 * E_pad, 3 * CP), lambda i: (0, 0)),
                pl.BlockSpec((1, 3 * CP), lambda i: (0, 0)),
                pl.BlockSpec((S_pad, 3 * CP), lambda i: (0, 0)),
                pl.BlockSpec((3 * CP, UP), lambda i: (0, 0)),
                pl.BlockSpec((1, UP), lambda i: (0, 0)),
            ],
            out_specs=pl.BlockSpec((TB, UP), lambda i: (i, 0)),
        ),
        compiler_params=pltpu.CompilerParams(
            dimension_semantics=("parallel",),
            # Above v5e's 16 MiB scoped default, below v7x's 64 MiB physical.
            vmem_limit_bytes=48 * 1024 * 1024,
        ),
    )(x, w_conv, b_conv, mask, w_lin, b_lin)
    return out[:B, :U]


def bert_cnn_reference(x, params):
    """Pure-JAX reference of the PyTorch forward (eval mode), f32 HIGHEST."""
    w1, b1, w2, b2, w3, b3, wl, bl = params
    B, S, E = x.shape

    def conv_pool(w, b, k):
        t = S - k + 1
        h = sum(
            jnp.einsum('bte,ec->btc', x[:, dk:dk + t, :], w[dk],
                       precision=jax.lax.Precision.HIGHEST)
            for dk in range(k)
        ) + b
        return jnp.max(jax.nn.relu(h), axis=1)

    flat = jnp.concatenate(
        [conv_pool(w1, b1, 1), conv_pool(w2, b2, 2), conv_pool(w3, b3, 3)],
        axis=1)
    return jnp.dot(flat, wl, precision=jax.lax.Precision.HIGHEST) + bl


def init_params(key, embedding_dim, user_num):
    ks = jax.random.split(key, 8)
    scale = 0.05
    w1 = scale * jax.random.normal(ks[0], (1, embedding_dim, C), jnp.float32)
    b1 = scale * jax.random.normal(ks[1], (1, C), jnp.float32)
    w2 = scale * jax.random.normal(ks[2], (2, embedding_dim, C), jnp.float32)
    b2 = scale * jax.random.normal(ks[3], (1, C), jnp.float32)
    w3 = scale * jax.random.normal(ks[4], (3, embedding_dim, C), jnp.float32)
    b3 = scale * jax.random.normal(ks[5], (1, C), jnp.float32)
    wl = scale * jax.random.normal(ks[6], (3 * C, user_num), jnp.float32)
    bl = scale * jax.random.normal(ks[7], (1, user_num), jnp.float32)
    return (w1, b1, w2, b2, w3, b3, wl, bl)


if __name__ == "__main__":
    key = jax.random.PRNGKey(0)
    k_x, k_p, k_x2 = jax.random.split(key, 3)

    # Small shapes consistent with the module: batch=4, seq=8, emb=128, users=16.
    B, S, E, U = 4, 8, 128, 16
    x = jax.random.normal(k_x, (B, S, E), jnp.float32)
    params = init_params(k_p, E, U)

    out = jax.block_until_ready(bert_cnn_forward(x, params))
    ref = bert_cnn_reference(x, params)
    # bf16 MXU operands (f32 accumulation) vs f32 HIGHEST reference.
    np.testing.assert_allclose(np.asarray(out), np.asarray(ref),
                               rtol=5e-2, atol=5e-2)
    assert out.shape == (B, U)

    # Also exercise the larger batch tile / multi-step-grid path.
    B2 = 48
    x2 = jax.random.normal(k_x2, (B2, S, E), jnp.float32)
    out2 = jax.block_until_ready(bert_cnn_forward(x2, params))
    ref2 = bert_cnn_reference(x2, params)
    np.testing.assert_allclose(np.asarray(out2), np.asarray(ref2),
                               rtol=5e-2, atol=5e-2)
    assert out2.shape == (B2, U)

    print("KERNEL_OK")
</pallas_src>

<mosaic_0001>
module attributes {stable_mosaic.version = 11 : i64} {
  func.func @bert_cnn_kernel(%arg0: i32, %arg1: memref<8x8x128xbf16, #tpu.memory_space<vmem>>, %arg2: memref<384x1920xbf16, #tpu.memory_space<vmem>>, %arg3: memref<1x1920xf32, #tpu.memory_space<vmem>>, %arg4: memref<8x1920xf32, #tpu.memory_space<vmem>>, %arg5: memref<1920x128xbf16, #tpu.memory_space<vmem>>, %arg6: memref<1x128xf32, #tpu.memory_space<vmem>>, %arg7: memref<8x128xf32, #tpu.memory_space<vmem>>) attributes {dimension_semantics = [#tpu.dimension_semantics<parallel>], iteration_bounds = array<i64: 1>, scalar_prefetch = 0 : i64, scratch_operands = 0 : i64, tpu.core_type = #tpu.core_type<tc>, window_params = [{transform_indices = @transform_0, window_bounds = array<i64: 8, 8, 128>}, {pipeline_mode = #tpu.pipeline_mode<synchronous>, transform_indices = @transform_1, window_bounds = array<i64: 384, 1920>}, {pipeline_mode = #tpu.pipeline_mode<synchronous>, transform_indices = @transform_2, window_bounds = array<i64: 1, 1920>}, {pipeline_mode = #tpu.pipeline_mode<synchronous>, transform_indices = @transform_3, window_bounds = array<i64: 8, 1920>}, {pipeline_mode = #tpu.pipeline_mode<synchronous>, transform_indices = @transform_4, window_bounds = array<i64: 1920, 128>}, {pipeline_mode = #tpu.pipeline_mode<synchronous>, transform_indices = @transform_5, window_bounds = array<i64: 1, 128>}, {transform_indices = @transform_6, window_bounds = array<i64: 8, 128>}]} {
    %c0 = arith.constant 0 : index
    %c0_0 = arith.constant 0 : index
    %c0_1 = arith.constant 0 : index
    %0 = vector.load %arg1[%c0, %c0_0, %c0_1] : memref<8x8x128xbf16, #tpu.memory_space<vmem>>, vector<8x8x128xbf16>
    %1 = vector.shape_cast %0 : vector<8x8x128xbf16> to vector<64x128xbf16>
    %2 = arith.extf %1 : vector<64x128xbf16> to vector<64x128xf32>
    %3 = vector.extract_strided_slice %2 {offsets = [1, 0], sizes = [63, 128], strides = [1, 1]} : vector<64x128xf32> to vector<63x128xf32>
    %4 = vector.extract_strided_slice %2 {offsets = [0, 0], sizes = [1, 128], strides = [1, 1]} : vector<64x128xf32> to vector<1x128xf32>
    %5 = tpu.concatenate %3, %4 in 0 : vector<63x128xf32>, vector<1x128xf32> -> vector<64x128xf32>
    %6 = arith.truncf %5 : vector<64x128xf32> to vector<64x128xbf16>
    %7 = vector.extract_strided_slice %2 {offsets = [2, 0], sizes = [62, 128], strides = [1, 1]} : vector<64x128xf32> to vector<62x128xf32>
    %8 = vector.extract_strided_slice %2 {offsets = [0, 0], sizes = [2, 128], strides = [1, 1]} : vector<64x128xf32> to vector<2x128xf32>
    %9 = tpu.concatenate %7, %8 in 0 : vector<62x128xf32>, vector<2x128xf32> -> vector<64x128xf32>
    %10 = arith.truncf %9 : vector<64x128xf32> to vector<64x128xbf16>
    %11 = tpu.concatenate %1, %6, %10 in 1 : vector<64x128xbf16>, vector<64x128xbf16>, vector<64x128xbf16> -> vector<64x384xbf16>
    %c0_2 = arith.constant 0 : index
    %c0_3 = arith.constant 0 : index
    %12 = vector.load %arg2[%c0_2, %c0_3] : memref<384x1920xbf16, #tpu.memory_space<vmem>>, vector<384x1920xbf16>
    %cst = arith.constant dense<0.000000e+00> : vector<64x1920xf32>
    %13 = tpu.matmul %11, %12, %cst {dimension_numbers = #tpu.dot_dimension_numbers<[1], [0], [0], [1], [0, 0, 1, 1], [], []>} : vector<64x384xbf16>, vector<384x1920xbf16>, vector<64x1920xf32> -> vector<64x1920xf32>
    %14 = vector.shape_cast %13 : vector<64x1920xf32> to vector<8x8x1920xf32>
    %c0_4 = arith.constant 0 : index
    %c0_5 = arith.constant 0 : index
    %15 = vector.load %arg3[%c0_4, %c0_5] : memref<1x1920xf32, #tpu.memory_space<vmem>>, vector<1x1920xf32>
    %16 = vector.shape_cast %15 : vector<1x1920xf32> to vector<1x1x1920xf32>
    %17 = vector.broadcast %16 : vector<1x1x1920xf32> to vector<8x8x1920xf32>
    %18 = arith.addf %14, %17 : vector<8x8x1920xf32>
    %cst_6 = arith.constant 0.000000e+00 : f32
    %19 = vector.broadcast %cst_6 : f32 to vector<8x8x1920xf32>
    %20 = arith.maximumf %18, %19 : vector<8x8x1920xf32>
    %c0_7 = arith.constant 0 : index
    %c0_8 = arith.constant 0 : index
    %21 = vector.load %arg4[%c0_7, %c0_8] : memref<8x1920xf32, #tpu.memory_space<vmem>>, vector<8x1920xf32>
    %22 = vector.shape_cast %21 : vector<8x1920xf32> to vector<1x8x1920xf32>
    %23 = vector.broadcast %22 : vector<1x8x1920xf32> to vector<8x8x1920xf32>
    %24 = arith.mulf %20, %23 : vector<8x8x1920xf32>
    %cst_9 = arith.constant dense<0xFF800000> : vector<8x1920xf32>
    %25 = vector.multi_reduction <maximumf>, %24, %cst_9 [1] : vector<8x8x1920xf32> to vector<8x1920xf32>
    %26 = arith.truncf %25 : vector<8x1920xf32> to vector<8x1920xbf16>
    %c0_10 = arith.constant 0 : index
    %c0_11 = arith.constant 0 : index
    %27 = vector.load %arg5[%c0_10, %c0_11] : memref<1920x128xbf16, #tpu.memory_space<vmem>>, vector<1920x128xbf16>
    %cst_12 = arith.constant dense<0.000000e+00> : vector<8x128xf32>
    %28 = tpu.matmul %26, %27, %cst_12 {dimension_numbers = #tpu.dot_dimension_numbers<[1], [0], [0], [1], [0, 0, 1, 1], [], []>} : vector<8x1920xbf16>, vector<1920x128xbf16>, vector<8x128xf32> -> vector<8x128xf32>
    %c0_13 = arith.constant 0 : index
    %c0_14 = arith.constant 0 : index
    %29 = vector.load %arg6[%c0_13, %c0_14] : memref<1x128xf32, #tpu.memory_space<vmem>>, vector<1x128xf32>
    %30 = vector.broadcast %29 : vector<1x128xf32> to vector<8x128xf32>
    %31 = arith.addf %28, %30 : vector<8x128xf32>
    %c0_15 = arith.constant 0 : index
    %c0_16 = arith.constant 0 : index
    %32 = vector.load %arg7[%c0_15, %c0_16] : memref<8x128xf32, #tpu.memory_space<vmem>>, vector<8x128xf32>
    tpu.vector_store %arg7[%c0_15, %c0_16], %31 {strides = array<i32>} : memref<8x128xf32, #tpu.memory_space<vmem>>, vector<8x128xf32>,
    return
  }
  func.func @transform_0(%arg0: i32) -> (i32, i32, i32) {
    %c0_i32 = arith.constant 0 : i32
    %c0_i32_0 = arith.constant 0 : i32
    %c0_i32_1 = arith.constant 0 : i32
    return %arg0, %c0_i32, %c0_i32_0 : i32, i32, i32
  }
  func.func @transform_1(%arg0: i32) -> (i32, i32) {
    %c0_i32 = arith.constant 0 : i32
    %c0_i32_0 = arith.constant 0 : i32
    %c0_i32_1 = arith.constant 0 : i32
    return %c0_i32, %c0_i32_0 : i32, i32
  }
  func.func @transform_2(%arg0: i32) -> (i32, i32) {
    %c0_i32 = arith.constant 0 : i32
    %c0_i32_0 = arith.constant 0 : i32
    %c0_i32_1 = arith.constant 0 : i32
    return %c0_i32, %c0_i32_0 : i32, i32
  }
  func.func @transform_3(%arg0: i32) -> (i32, i32) {
    %c0_i32 = arith.constant 0 : i32
    %c0_i32_0 = arith.constant 0 : i32
    %c0_i32_1 = arith.constant 0 : i32
    return %c0_i32, %c0_i32_0 : i32, i32
  }
  func.func @transform_4(%arg0: i32) -> (i32, i32) {
    %c0_i32 = arith.constant 0 : i32
    %c0_i32_0 = arith.constant 0 : i32
    %c0_i32_1 = arith.constant 0 : i32
    return %c0_i32, %c0_i32_0 : i32, i32
  }
  func.func @transform_5(%arg0: i32) -> (i32, i32) {
    %c0_i32 = arith.constant 0 : i32
    %c0_i32_0 = arith.constant 0 : i32
    %c0_i32_1 = arith.constant 0 : i32
    return %c0_i32, %c0_i32_0 : i32, i32
  }
  func.func @transform_6(%arg0: i32) -> (i32, i32) {
    %c0_i32 = arith.constant 0 : i32
    %c0_i32_0 = arith.constant 0 : i32
    return %arg0, %c0_i32 : i32, i32
  }
}

</mosaic_0001>

<llo_original>
// kernel: bert_cnn_forward.1
$region0: #{bert_cnn_forward.1}
  #allocation0 [shape = 'u32[]', space=smem, size = 0x4, offset = 0x4, fixed_abs, tag = 'smem constant byte address 0x4 - core index']
  #allocation1 [shape = 'u32[144,128]{1,0:T(1,128)}', space=vmem, size = 0x12000, scoped, tag = 'internal scratch']
  %s0 = inlined_call_operand.vmem [shape: bf16[8,8,128], index: 0, kind: input, shape index: {}]
  %s1 = inlined_call_operand.vmem [shape: bf16[384,1920], index: 1, kind: input, shape index: {}]
  %s2 = inlined_call_operand.vmem [shape: f32[1,1920], index: 2, kind: input, shape index: {}]
  %s3 = inlined_call_operand.vmem [shape: f32[8,1920], index: 3, kind: input, shape index: {}]
  %s4 = inlined_call_operand.vmem [shape: bf16[1920,128], index: 4, kind: input, shape index: {}]
  %s5 = inlined_call_operand.vmem [shape: f32[1,128], index: 5, kind: input, shape index: {}]
  %s6 = inlined_call_operand.vmem [shape: f32[8,128], index: 6, kind: output, shape index: {}]
  %s7 = sld [smem:[#allocation0]]
  $region34: #{bert_cnn_forward.1} parent=0
    _
  %s9 = ssub.s32 1, %s7
  %s10 = scalar_select 0, %s9, %s7
  // Predicated region
  $region2: #{bert_cnn_forward.1} parent=0 // pred_check
    _
  $region3: #{bert_cnn_forward.1} parent=0 // pred_check_branch
    %12 = sbr.rel (0) target = $region5
  $region4: #{bert_cnn_forward.1} parent=0 // pred_region
    _
  $region5: #{bert_cnn_forward.1} parent=0 // pred_fallthru
    _
  // Predicated region
  $region6: #{bert_cnn_forward.1} parent=0 // pred_check
    _
  $region7: #{bert_cnn_forward.1} parent=0 // pred_check_branch
    %14 = sbr.rel (0) target = $region9
  $region8: #{bert_cnn_forward.1} parent=0 // pred_region
    _
  $region9: #{bert_cnn_forward.1} parent=0 // pred_fallthru
    _
  // Predicated region
  $region10: #{bert_cnn_forward.1} parent=0 // pred_check
    _
  $region11: #{bert_cnn_forward.1} parent=0 // pred_check_branch
    %16 = sbr.rel (0) target = $region13
  $region12: #{bert_cnn_forward.1} parent=0 // pred_region
    _
  $region13: #{bert_cnn_forward.1} parent=0 // pred_fallthru
    _
  // Predicated region
  $region14: #{bert_cnn_forward.1} parent=0 // pred_check
    _
  $region15: #{bert_cnn_forward.1} parent=0 // pred_check_branch
    %18 = sbr.rel (0) target = $region17
  $region16: #{bert_cnn_forward.1} parent=0 // pred_region
    _
  $region17: #{bert_cnn_forward.1} parent=0 // pred_fallthru
    _
  // Predicated region
  $region18: #{bert_cnn_forward.1} parent=0 // pred_check
    _
  $region19: #{bert_cnn_forward.1} parent=0 // pred_check_branch
    %20 = sbr.rel (0) target = $region21
  $region20: #{bert_cnn_forward.1} parent=0 // pred_region
    _
  $region21: #{bert_cnn_forward.1} parent=0 // pred_fallthru
    _
  // Predicated region
  $region22: #{bert_cnn_forward.1} parent=0 // pred_check
    _
  $region23: #{bert_cnn_forward.1} parent=0 // pred_check_branch
    %22 = sbr.rel (0) target = $region25
  $region24: #{bert_cnn_forward.1} parent=0 // pred_region
    _
  $region25: #{bert_cnn_forward.1} parent=0 // pred_fallthru
    _
  %v24 = vld [vmem:[%s0] sm:$0xf]
  %v25 = vld [vmem:[%s0 + $0x4] sm:$0xf]
  %v26 = vld [vmem:[%s0 + $0x8] sm:$0xf]
  %v27 = vld [vmem:[%s0 + $0xc] sm:$0xf]
  %v28 = vld [vmem:[%s0 + $0x10] sm:$0xf]
  %v29 = vld [vmem:[%s0 + $0x14] sm:$0xf]
  %v30 = vld [vmem:[%s0 + $0x18] sm:$0xf]
  %v31 = vld [vmem:[%s0 + $0x1c] sm:$0xf]
  %v32 = vunpack.c.l.bf16 %v24
  %v33 = vunpack.c.l.bf16 %v25
  %v34 = vunpack.c.l.bf16 %v26
  %v35 = vunpack.c.l.bf16 %v27
  %v36 = vunpack.c.l.bf16 %v28
  %v37 = vunpack.c.l.bf16 %v29
  %v38 = vunpack.c.l.bf16 %v30
  %v39 = vunpack.c.l.bf16 %v31
  %vm48 = vcmask 1046528
  %v49 = vrot.slane %v32, 1
  %v50 = vrot.slane %v33, 1
  %v51 = vsel %vm48, %v49, %v50
  %v52 = vrot.slane %v34, 1
  %v53 = vsel %vm48, %v50, %v52
  %v54 = vrot.slane %v35, 1
  %v55 = vsel %vm48, %v52, %v54
  %v56 = vrot.slane %v36, 1
  %v57 = vsel %vm48, %v54, %v56
  %v58 = vrot.slane %v37, 1
  %v59 = vsel %vm48, %v56, %v58
  %v60 = vrot.slane %v38, 1
  %v61 = vsel %vm48, %v58, %v60
  %v62 = vrot.slane %v39, 1
  %v63 = vsel %vm48, %v60, %v62
  %v73 = vsel %vm48, %v62, %v49
  %v74 = vpack.c.bf16 %v53, %v51
  %v75 = vpack.c.bf16 %v57, %v55
  %v76 = vpack.c.bf16 %v61, %v59
  %v77 = vpack.c.bf16 %v73, %v63
  %vm78 = vcmask 1045504
  %v79 = vrot.slane %v32, 2
  %v80 = vrot.slane %v33, 2
  %v81 = vsel %vm78, %v79, %v80
  %v82 = vrot.slane %v34, 2
  %v83 = vsel %vm78, %v80, %v82
  %v84 = vrot.slane %v35, 2
  %v85 = vsel %vm78, %v82, %v84
  %v86 = vrot.slane %v36, 2
  %v87 = vsel %vm78, %v84, %v86
  %v88 = vrot.slane %v37, 2
  %v89 = vsel %vm78, %v86, %v88
  %v90 = vrot.slane %v38, 2
  %v91 = vsel %vm78, %v88, %v90
  %v92 = vrot.slane %v39, 2
  %v93 = vsel %vm78, %v90, %v92
  %v103 = vsel %vm78, %v92, %v79
  %v104 = vpack.c.bf16 %v83, %v81
  %v105 = vpack.c.bf16 %v87, %v85
  %v106 = vpack.c.bf16 %v91, %v89
  %v107 = vpack.c.bf16 %v103, %v93
  %v116 = vunpack.c.l.b16 %v24
  %v117 = vunpack.c.l.b16 %v25
  %v118 = vunpack.c.l.b16 %v26
  %v119 = vunpack.c.l.b16 %v27
  %v120 = vunpack.c.l.b16 %v28
  %v121 = vunpack.c.l.b16 %v29
  %v122 = vunpack.c.l.b16 %v30
  %v123 = vunpack.c.l.b16 %v31
  %v124 = vpack.c.b16 %v117, %v116
  %v125 = vpack.c.b16 %v119, %v118
  %v126 = vpack.c.b16 %v121, %v120
  %v127 = vpack.c.b16 %v123, %v122
  %v132 = vld [vmem:[%s1] sm:$0xff]
  %v133 = vld [vmem:[%s1 + $0x8] sm:$0xff]
  %v134 = vld [vmem:[%s1 + $0x10] sm:$0xff]
  %v135 = vld [vmem:[%s1 + $0x18] sm:$0xff]
  %v136 = vld [vmem:[%s1 + $0x20] sm:$0xff]
  %v137 = vld [vmem:[%s1 + $0x28] sm:$0xff]
  %v138 = vld [vmem:[%s1 + $0x30] sm:$0xff]
  %v139 = vld [vmem:[%s1 + $0x38] sm:$0xf]
  %v140 = vld [vmem:[%s1 + $0x3c] sm:$0xff]
  %v141 = vld [vmem:[%s1 + $0x44] sm:$0xff]
  %v142 = vld [vmem:[%s1 + $0x4c] sm:$0xff]
  %v143 = vld [vmem:[%s1 + $0x54] sm:$0xff]
  %v144 = vld [vmem:[%s1 + $0x5c] sm:$0xff]
  %v145 = vld [vmem:[%s1 + $0x64] sm:$0xff]
  %v146 = vld [vmem:[%s1 + $0x6c] sm:$0xff]
  %v147 = vld [vmem:[%s1 + $0x74] sm:$0xf]
  %v148 = vld [vmem:[%s1 + $0x78] sm:$0xff]
  %v149 = vld [vmem:[%s1 + $0x80] sm:$0xff]
  %v150 = vld [vmem:[%s1 + $0x88] sm:$0xff]
  %v151 = vld [vmem:[%s1 + $0x90] sm:$0xff]
  %v152 = vld [vmem:[%s1 + $0x98] sm:$0xff]
  %v153 = vld [vmem:[%s1 + $0xa0] sm:$0xff]
  %v154 = vld [vmem:[%s1 + $0xa8] sm:$0xff]
  %v155 = vld [vmem:[%s1 + $0xb0] sm:$0xf]
  %v156 = vld [vmem:[%s1 + $0xb4] sm:$0xff]
  %v157 = vld [vmem:[%s1 + $0xbc] sm:$0xff]
  %v158 = vld [vmem:[%s1 + $0xc4] sm:$0xff]
  %v159 = vld [vmem:[%s1 + $0xcc] sm:$0xff]
  %v160 = vld [vmem:[%s1 + $0xd4] sm:$0xff]
  %v161 = vld [vmem:[%s1 + $0xdc] sm:$0xff]
  %v162 = vld [vmem:[%s1 + $0xe4] sm:$0xff]
  %v163 = vld [vmem:[%s1 + $0xec] sm:$0xf]
  %v164 = vld [vmem:[%s1 + $0xf0] sm:$0xff]
  %v165 = vld [vmem:[%s1 + $0xf8] sm:$0xff]
  %v166 = vld [vmem:[%s1 + $0x100] sm:$0xff]
  %v167 = vld [vmem:[%s1 + $0x108] sm:$0xff]
  %v168 = vld [vmem:[%s1 + $0x110] sm:$0xff]
  %v169 = vld [vmem:[%s1 + $0x118] sm:$0xff]
  %v170 = vld [vmem:[%s1 + $0x120] sm:$0xff]
  %v171 = vld [vmem:[%s1 + $0x128] sm:$0xf]
  %v172 = vld [vmem:[%s1 + $0x12c] sm:$0xff]
  %v173 = vld [vmem:[%s1 + $0x134] sm:$0xff]
  %v174 = vld [vmem:[%s1 + $0x13c] sm:$0xff]
  %v175 = vld [vmem:[%s1 + $0x144] sm:$0xff]
  %v176 = vld [vmem:[%s1 + $0x14c] sm:$0xff]
  %v177 = vld [vmem:[%s1 + $0x154] sm:$0xff]
  %v178 = vld [vmem:[%s1 + $0x15c] sm:$0xff]
  %v179 = vld [vmem:[%s1 + $0x164] sm:$0xf]
  %v180 = vld [vmem:[%s1 + $0x168] sm:$0xff]
  %v181 = vld [vmem:[%s1 + $0x170] sm:$0xff]
  %v182 = vld [vmem:[%s1 + $0x178] sm:$0xff]
  %v183 = vld [vmem:[%s1 + $0x180] sm:$0xff]
  %v184 = vld [vmem:[%s1 + $0x188] sm:$0xff]
  %v185 = vld [vmem:[%s1 + $0x190] sm:$0xff]
  %v186 = vld [vmem:[%s1 + $0x198] sm:$0xff]
  %v187 = vld [vmem:[%s1 + $0x1a0] sm:$0xf]
  %v188 = vld [vmem:[%s1 + $0x1a4] sm:$0xff]
  %v189 = vld [vmem:[%s1 + $0x1ac] sm:$0xff]
  %v190 = vld [vmem:[%s1 + $0x1b4] sm:$0xff]
  %v191 = vld [vmem:[%s1 + $0x1bc] sm:$0xff]
  %v192 = vld [vmem:[%s1 + $0x1c4] sm:$0xff]
  %v193 = vld [vmem:[%s1 + $0x1cc] sm:$0xff]
  %v194 = vld [vmem:[%s1 + $0x1d4] sm:$0xff]
  %v195 = vld [vmem:[%s1 + $0x1dc] sm:$0xf]
  %v196 = vld [vmem:[%s1 + $0x1e0] sm:$0xff]
  %v197 = vld [vmem:[%s1 + $0x1e8] sm:$0xff]
  %v198 = vld [vmem:[%s1 + $0x1f0] sm:$0xff]
  %v199 = vld [vmem:[%s1 + $0x1f8] sm:$0xff]
  %v200 = vld [vmem:[%s1 + $0x200] sm:$0xff]
  %v201 = vld [vmem:[%s1 + $0x208] sm:$0xff]
  %v202 = vld [vmem:[%s1 + $0x210] sm:$0xff]
  %v203 = vld [vmem:[%s1 + $0x218] sm:$0xf]
  %v204 = vld [vmem:[%s1 + $0x21c] sm:$0xff]
  %v205 = vld [vmem:[%s1 + $0x224] sm:$0xff]
  %v206 = vld [vmem:[%s1 + $0x22c] sm:$0xff]
  %v207 = vld [vmem:[%s1 + $0x234] sm:$0xff]
  %v208 = vld [vmem:[%s1 + $0x23c] sm:$0xff]
  %v209 = vld [vmem:[%s1 + $0x244] sm:$0xff]
  %v210 = vld [vmem:[%s1 + $0x24c] sm:$0xff]
  %v211 = vld [vmem:[%s1 + $0x254] sm:$0xf]
  %v212 = vld [vmem:[%s1 + $0x258] sm:$0xff]
  %v213 = vld [vmem:[%s1 + $0x260] sm:$0xff]
  %v214 = vld [vmem:[%s1 + $0x268] sm:$0xff]
  %v215 = vld [vmem:[%s1 + $0x270] sm:$0xff]
  %v216 = vld [vmem:[%s1 + $0x278] sm:$0xff]
  %v217 = vld [vmem:[%s1 + $0x280] sm:$0xff]
  %v218 = vld [vmem:[%s1 + $0x288] sm:$0xff]
  %v219 = vld [vmem:[%s1 + $0x290] sm:$0xf]
  %v220 = vld [vmem:[%s1 + $0x294] sm:$0xff]
  %v221 = vld [vmem:[%s1 + $0x29c] sm:$0xff]
  %v222 = vld [vmem:[%s1 + $0x2a4] sm:$0xff]
  %v223 = vld [vmem:[%s1 + $0x2ac] sm:$0xff]
  %v224 = vld [vmem:[%s1 + $0x2b4] sm:$0xff]
  %v225 = vld [vmem:[%s1 + $0x2bc] sm:$0xff]
  %v226 = vld [vmem:[%s1 + $0x2c4] sm:$0xff]
  %v227 = vld [vmem:[%s1 + $0x2cc] sm:$0xf]
  %v228 = vld [vmem:[%s1 + $0x2d0] sm:$0xff]
  %v229 = vld [vmem:[%s1 + $0x2d8] sm:$0xff]
  %v230 = vld [vmem:[%s1 + $0x2e0] sm:$0xff]
  %v231 = vld [vmem:[%s1 + $0x2e8] sm:$0xff]
  %v232 = vld [vmem:[%s1 + $0x2f0] sm:$0xff]
  %v233 = vld [vmem:[%s1 + $0x2f8] sm:$0xff]
  %v234 = vld [vmem:[%s1 + $0x300] sm:$0xff]
  %v235 = vld [vmem:[%s1 + $0x308] sm:$0xf]
  %v236 = vld [vmem:[%s1 + $0x30c] sm:$0xff]
  %v237 = vld [vmem:[%s1 + $0x314] sm:$0xff]
  %v238 = vld [vmem:[%s1 + $0x31c] sm:$0xff]
  %v239 = vld [vmem:[%s1 + $0x324] sm:$0xff]
  %v240 = vld [vmem:[%s1 + $0x32c] sm:$0xff]
  %v241 = vld [vmem:[%s1 + $0x334] sm:$0xff]
  %v242 = vld [vmem:[%s1 + $0x33c] sm:$0xff]
  %v243 = vld [vmem:[%s1 + $0x344] sm:$0xf]
  %v244 = vld [vmem:[%s1 + $0x348] sm:$0xff]
  %v245 = vld [vmem:[%s1 + $0x350] sm:$0xff]
  %v246 = vld [vmem:[%s1 + $0x358] sm:$0xff]
  %v247 = vld [vmem:[%s1 + $0x360] sm:$0xff]
  %v248 = vld [vmem:[%s1 + $0x368] sm:$0xff]
  %v249 = vld [vmem:[%s1 + $0x370] sm:$0xff]
  %v250 = vld [vmem:[%s1 + $0x378] sm:$0xff]
  %v251 = vld [vmem:[%s1 + $0x380] sm:$0xf]
  %v252 = vld [vmem:[%s1 + $0x384] sm:$0xff]
  %v253 = vld [vmem:[%s1 + $0x38c] sm:$0xff]
  %v254 = vld [vmem:[%s1 + $0x394] sm:$0xff]
  %v255 = vld [vmem:[%s1 + $0x39c] sm:$0xff]
  %v256 = vld [vmem:[%s1 + $0x3a4] sm:$0xff]
  %v257 = vld [vmem:[%s1 + $0x3ac] sm:$0xff]
  %v258 = vld [vmem:[%s1 + $0x3b4] sm:$0xff]
  %v259 = vld [vmem:[%s1 + $0x3bc] sm:$0xf]
  %v260 = vld [vmem:[%s1 + $0x3c0] sm:$0xff]
  %v261 = vld [vmem:[%s1 + $0x3c8] sm:$0xff]
  %v262 = vld [vmem:[%s1 + $0x3d0] sm:$0xff]
  %v263 = vld [vmem:[%s1 + $0x3d8] sm:$0xff]
  %v264 = vld [vmem:[%s1 + $0x3e0] sm:$0xff]
  %v265 = vld [vmem:[%s1 + $0x3e8] sm:$0xff]
  %v266 = vld [vmem:[%s1 + $0x3f0] sm:$0xff]
  %v267 = vld [vmem:[%s1 + $0x3f8] sm:$0xf]
  %v268 = vld [vmem:[%s1 + $0x3fc] sm:$0xff]
  %v269 = vld [vmem:[%s1 + $0x404] sm:$0xff]
  %v270 = vld [vmem:[%s1 + $0x40c] sm:$0xff]
  %v271 = vld [vmem:[%s1 + $0x414] sm:$0xff]
  %v272 = vld [vmem:[%s1 + $0x41c] sm:$0xff]
  %v273 = vld [vmem:[%s1 + $0x424] sm:$0xff]
  %v274 = vld [vmem:[%s1 + $0x42c] sm:$0xff]
  %v275 = vld [vmem:[%s1 + $0x434] sm:$0xf]
  %v276 = vld [vmem:[%s1 + $0x438] sm:$0xff]
  %v277 = vld [vmem:[%s1 + $0x440] sm:$0xff]
  %v278 = vld [vmem:[%s1 + $0x448] sm:$0xff]
  %v279 = vld [vmem:[%s1 + $0x450] sm:$0xff]
  %v280 = vld [vmem:[%s1 + $0x458] sm:$0xff]
  %v281 = vld [vmem:[%s1 + $0x460] sm:$0xff]
  %v282 = vld [vmem:[%s1 + $0x468] sm:$0xff]
  %v283 = vld [vmem:[%s1 + $0x470] sm:$0xf]
  %v284 = vld [vmem:[%s1 + $0x474] sm:$0xff]
  %v285 = vld [vmem:[%s1 + $0x47c] sm:$0xff]
  %v286 = vld [vmem:[%s1 + $0x484] sm:$0xff]
  %v287 = vld [vmem:[%s1 + $0x48c] sm:$0xff]
  %v288 = vld [vmem:[%s1 + $0x494] sm:$0xff]
  %v289 = vld [vmem:[%s1 + $0x49c] sm:$0xff]
  %v290 = vld [vmem:[%s1 + $0x4a4] sm:$0xff]
  %v291 = vld [vmem:[%s1 + $0x4ac] sm:$0xf]
  %v292 = vld [vmem:[%s1 + $0x4b0] sm:$0xff]
  %v293 = vld [vmem:[%s1 + $0x4b8] sm:$0xff]
  %v294 = vld [vmem:[%s1 + $0x4c0] sm:$0xff]
  %v295 = vld [vmem:[%s1 + $0x4c8] sm:$0xff]
  %v296 = vld [vmem:[%s1 + $0x4d0] sm:$0xff]
  %v297 = vld [vmem:[%s1 + $0x4d8] sm:$0xff]
  %v298 = vld [vmem:[%s1 + $0x4e0] sm:$0xff]
  %v299 = vld [vmem:[%s1 + $0x4e8] sm:$0xf]
  %v300 = vld [vmem:[%s1 + $0x4ec] sm:$0xff]
  %v301 = vld [vmem:[%s1 + $0x4f4] sm:$0xff]
  %v302 = vld [vmem:[%s1 + $0x4fc] sm:$0xff]
  %v303 = vld [vmem:[%s1 + $0x504] sm:$0xff]
  %v304 = vld [vmem:[%s1 + $0x50c] sm:$0xff]
  %v305 = vld [vmem:[%s1 + $0x514] sm:$0xff]
  %v306 = vld [vmem:[%s1 + $0x51c] sm:$0xff]
  %v307 = vld [vmem:[%s1 + $0x524] sm:$0xf]
  %v308 = vld [vmem:[%s1 + $0x528] sm:$0xff]
  %v309 = vld [vmem:[%s1 + $0x530] sm:$0xff]
  %v310 = vld [vmem:[%s1 + $0x538] sm:$0xff]
  %v311 = vld [vmem:[%s1 + $0x540] sm:$0xff]
  %v312 = vld [vmem:[%s1 + $0x548] sm:$0xff]
  %v313 = vld [vmem:[%s1 + $0x550] sm:$0xff]
  %v314 = vld [vmem:[%s1 + $0x558] sm:$0xff]
  %v315 = vld [vmem:[%s1 + $0x560] sm:$0xf]
  %v316 = vld [vmem:[%s1 + $0x564] sm:$0xff]
  %v317 = vld [vmem:[%s1 + $0x56c] sm:$0xff]
  %v318 = vld [vmem:[%s1 + $0x574] sm:$0xff]
  %v319 = vld [vmem:[%s1 + $0x57c] sm:$0xff]
  %v320 = vld [vmem:[%s1 + $0x584] sm:$0xff]
  %v321 = vld [vmem:[%s1 + $0x58c] sm:$0xff]
  %v322 = vld [vmem:[%s1 + $0x594] sm:$0xff]
  %v323 = vld [vmem:[%s1 + $0x59c] sm:$0xf]
  %v324 = vld [vmem:[%s1 + $0x5a0] sm:$0xff]
  %v325 = vld [vmem:[%s1 + $0x5a8] sm:$0xff]
  %v326 = vld [vmem:[%s1 + $0x5b0] sm:$0xff]
  %v327 = vld [vmem:[%s1 + $0x5b8] sm:$0xff]
  %v328 = vld [vmem:[%s1 + $0x5c0] sm:$0xff]
  %v329 = vld [vmem:[%s1 + $0x5c8] sm:$0xff]
  %v330 = vld [vmem:[%s1 + $0x5d0] sm:$0xff]
  %v331 = vld [vmem:[%s1 + $0x5d8] sm:$0xf]
  %v332 = vld [vmem:[%s1 + $0x5dc] sm:$0xff]
  %v333 = vld [vmem:[%s1 + $0x5e4] sm:$0xff]
  %v334 = vld [vmem:[%s1 + $0x5ec] sm:$0xff]
  %v335 = vld [vmem:[%s1 + $0x5f4] sm:$0xff]
  %v336 = vld [vmem:[%s1 + $0x5fc] sm:$0xff]
  %v337 = vld [vmem:[%s1 + $0x604] sm:$0xff]
  %v338 = vld [vmem:[%s1 + $0x60c] sm:$0xff]
  %v339 = vld [vmem:[%s1 + $0x614] sm:$0xf]
  %v340 = vld [vmem:[%s1 + $0x618] sm:$0xff]
  %v341 = vld [vmem:[%s1 + $0x620] sm:$0xff]
  %v342 = vld [vmem:[%s1 + $0x628] sm:$0xff]
  %v343 = vld [vmem:[%s1 + $0x630] sm:$0xff]
  %v344 = vld [vmem:[%s1 + $0x638] sm:$0xff]
  %v345 = vld [vmem:[%s1 + $0x640] sm:$0xff]
  %v346 = vld [vmem:[%s1 + $0x648] sm:$0xff]
  %v347 = vld [vmem:[%s1 + $0x650] sm:$0xf]
  %v348 = vld [vmem:[%s1 + $0x654] sm:$0xff]
  %v349 = vld [vmem:[%s1 + $0x65c] sm:$0xff]
  %v350 = vld [vmem:[%s1 + $0x664] sm:$0xff]
  %v351 = vld [vmem:[%s1 + $0x66c] sm:$0xff]
  %v352 = vld [vmem:[%s1 + $0x674] sm:$0xff]
  %v353 = vld [vmem:[%s1 + $0x67c] sm:$0xff]
  %v354 = vld [vmem:[%s1 + $0x684] sm:$0xff]
  %v355 = vld [vmem:[%s1 + $0x68c] sm:$0xf]
  %v356 = vld [vmem:[%s1 + $0x690] sm:$0xff]
  %v357 = vld [vmem:[%s1 + $0x698] sm:$0xff]
  %v358 = vld [vmem:[%s1 + $0x6a0] sm:$0xff]
  %v359 = vld [vmem:[%s1 + $0x6a8] sm:$0xff]
  %v360 = vld [vmem:[%s1 + $0x6b0] sm:$0xff]
  %v361 = vld [vmem:[%s1 + $0x6b8] sm:$0xff]
  %v362 = vld [vmem:[%s1 + $0x6c0] sm:$0xff]
  %v363 = vld [vmem:[%s1 + $0x6c8] sm:$0xf]
  %v364 = vld [vmem:[%s1 + $0x6cc] sm:$0xff]
  %v365 = vld [vmem:[%s1 + $0x6d4] sm:$0xff]
  %v366 = vld [vmem:[%s1 + $0x6dc] sm:$0xff]
  %v367 = vld [vmem:[%s1 + $0x6e4] sm:$0xff]
  %v368 = vld [vmem:[%s1 + $0x6ec] sm:$0xff]
  %v369 = vld [vmem:[%s1 + $0x6f4] sm:$0xff]
  %v370 = vld [vmem:[%s1 + $0x6fc] sm:$0xff]
  %v371 = vld [vmem:[%s1 + $0x704] sm:$0xf]
  %v372 = vld [vmem:[%s1 + $0x708] sm:$0xff]
  %v373 = vld [vmem:[%s1 + $0x710] sm:$0xff]
  %v374 = vld [vmem:[%s1 + $0x718] sm:$0xff]
  %v375 = vld [vmem:[%s1 + $0x720] sm:$0xff]
  %v376 = vld [vmem:[%s1 + $0x728] sm:$0xff]
  %v377 = vld [vmem:[%s1 + $0x730] sm:$0xff]
  %v378 = vld [vmem:[%s1 + $0x738] sm:$0xff]
  %v379 = vld [vmem:[%s1 + $0x740] sm:$0xf]
  %v380 = vld [vmem:[%s1 + $0x744] sm:$0xff]
  %v381 = vld [vmem:[%s1 + $0x74c] sm:$0xff]
  %v382 = vld [vmem:[%s1 + $0x754] sm:$0xff]
  %v383 = vld [vmem:[%s1 + $0x75c] sm:$0xff]
  %v384 = vld [vmem:[%s1 + $0x764] sm:$0xff]
  %v385 = vld [vmem:[%s1 + $0x76c] sm:$0xff]
  %v386 = vld [vmem:[%s1 + $0x774] sm:$0xff]
  %v387 = vld [vmem:[%s1 + $0x77c] sm:$0xf]
  %v388 = vld [vmem:[%s1 + $0x780] sm:$0xff]
  %v389 = vld [vmem:[%s1 + $0x788] sm:$0xff]
  %v390 = vld [vmem:[%s1 + $0x790] sm:$0xff]
  %v391 = vld [vmem:[%s1 + $0x798] sm:$0xff]
  %v392 = vld [vmem:[%s1 + $0x7a0] sm:$0xff]
  %v393 = vld [vmem:[%s1 + $0x7a8] sm:$0xff]
  %v394 = vld [vmem:[%s1 + $0x7b0] sm:$0xff]
  %v395 = vld [vmem:[%s1 + $0x7b8] sm:$0xf]
  %v396 = vld [vmem:[%s1 + $0x7bc] sm:$0xff]
  %v397 = vld [vmem:[%s1 + $0x7c4] sm:$0xff]
  %v398 = vld [vmem:[%s1 + $0x7cc] sm:$0xff]
  %v399 = vld [vmem:[%s1 + $0x7d4] sm:$0xff]
  %v400 = vld [vmem:[%s1 + $0x7dc] sm:$0xff]
  %v401 = vld [vmem:[%s1 + $0x7e4] sm:$0xff]
  %v402 = vld [vmem:[%s1 + $0x7ec] sm:$0xff]
  %v403 = vld [vmem:[%s1 + $0x7f4] sm:$0xf]
  %v404 = vld [vmem:[%s1 + $0x7f8] sm:$0xff]
  %v405 = vld [vmem:[%s1 + $0x800] sm:$0xff]
  %v406 = vld [vmem:[%s1 + $0x808] sm:$0xff]
  %v407 = vld [vmem:[%s1 + $0x810] sm:$0xff]
  %v408 = vld [vmem:[%s1 + $0x818] sm:$0xff]
  %v409 = vld [vmem:[%s1 + $0x820] sm:$0xff]
  %v410 = vld [vmem:[%s1 + $0x828] sm:$0xff]
  %v411 = vld [vmem:[%s1 + $0x830] sm:$0xf]
  %v412 = vld [vmem:[%s1 + $0x834] sm:$0xff]
  %v413 = vld [vmem:[%s1 + $0x83c] sm:$0xff]
  %v414 = vld [vmem:[%s1 + $0x844] sm:$0xff]
  %v415 = vld [vmem:[%s1 + $0x84c] sm:$0xff]
  %v416 = vld [vmem:[%s1 + $0x854] sm:$0xff]
  %v417 = vld [vmem:[%s1 + $0x85c] sm:$0xff]
  %v418 = vld [vmem:[%s1 + $0x864] sm:$0xff]
  %v419 = vld [vmem:[%s1 + $0x86c] sm:$0xf]
  %v420 = vld [vmem:[%s1 + $0x870] sm:$0xff]
  %v421 = vld [vmem:[%s1 + $0x878] sm:$0xff]
  %v422 = vld [vmem:[%s1 + $0x880] sm:$0xff]
  %v423 = vld [vmem:[%s1 + $0x888] sm:$0xff]
  %v424 = vld [vmem:[%s1 + $0x890] sm:$0xff]
  %v425 = vld [vmem:[%s1 + $0x898] sm:$0xff]
  %v426 = vld [vmem:[%s1 + $0x8a0] sm:$0xff]
  %v427 = vld [vmem:[%s1 + $0x8a8] sm:$0xf]
  %v428 = vld [vmem:[%s1 + $0x8ac] sm:$0xff]
  %v429 = vld [vmem:[%s1 + $0x8b4] sm:$0xff]
  %v430 = vld [vmem:[%s1 + $0x8bc] sm:$0xff]
  %v431 = vld [vmem:[%s1 + $0x8c4] sm:$0xff]
  %v432 = vld [vmem:[%s1 + $0x8cc] sm:$0xff]
  %v433 = vld [vmem:[%s1 + $0x8d4] sm:$0xff]
  %v434 = vld [vmem:[%s1 + $0x8dc] sm:$0xff]
  %v435 = vld [vmem:[%s1 + $0x8e4] sm:$0xf]
  %v436 = vld [vmem:[%s1 + $0x8e8] sm:$0xff]
  %v437 = vld [vmem:[%s1 + $0x8f0] sm:$0xff]
  %v438 = vld [vmem:[%s1 + $0x8f8] sm:$0xff]
  %v439 = vld [vmem:[%s1 + $0x900] sm:$0xff]
  %v440 = vld [vmem:[%s1 + $0x908] sm:$0xff]
  %v441 = vld [vmem:[%s1 + $0x910] sm:$0xff]
  %v442 = vld [vmem:[%s1 + $0x918] sm:$0xff]
  %v443 = vld [vmem:[%s1 + $0x920] sm:$0xf]
  %v444 = vld [vmem:[%s1 + $0x924] sm:$0xff]
  %v445 = vld [vmem:[%s1 + $0x92c] sm:$0xff]
  %v446 = vld [vmem:[%s1 + $0x934] sm:$0xff]
  %v447 = vld [vmem:[%s1 + $0x93c] sm:$0xff]
  %v448 = vld [vmem:[%s1 + $0x944] sm:$0xff]
  %v449 = vld [vmem:[%s1 + $0x94c] sm:$0xff]
  %v450 = vld [vmem:[%s1 + $0x954] sm:$0xff]
  %v451 = vld [vmem:[%s1 + $0x95c] sm:$0xf]
  %v452 = vld [vmem:[%s1 + $0x960] sm:$0xff]
  %v453 = vld [vmem:[%s1 + $0x968] sm:$0xff]
  %v454 = vld [vmem:[%s1 + $0x970] sm:$0xff]
  %v455 = vld [vmem:[%s1 + $0x978] sm:$0xff]
  %v456 = vld [vmem:[%s1 + $0x980] sm:$0xff]
  %v457 = vld [vmem:[%s1 + $0x988] sm:$0xff]
  %v458 = vld [vmem:[%s1 + $0x990] sm:$0xff]
  %v459 = vld [vmem:[%s1 + $0x998] sm:$0xf]
  %v460 = vld [vmem:[%s1 + $0x99c] sm:$0xff]
  %v461 = vld [vmem:[%s1 + $0x9a4] sm:$0xff]
  %v462 = vld [vmem:[%s1 + $0x9ac] sm:$0xff]
  %v463 = vld [vmem:[%s1 + $0x9b4] sm:$0xff]
  %v464 = vld [vmem:[%s1 + $0x9bc] sm:$0xff]
  %v465 = vld [vmem:[%s1 + $0x9c4] sm:$0xff]
  %v466 = vld [vmem:[%s1 + $0x9cc] sm:$0xff]
  %v467 = vld [vmem:[%s1 + $0x9d4] sm:$0xf]
  %v468 = vld [vmem:[%s1 + $0x9d8] sm:$0xff]
  %v469 = vld [vmem:[%s1 + $0x9e0] sm:$0xff]
  %v470 = vld [vmem:[%s1 + $0x9e8] sm:$0xff]
  %v471 = vld [vmem:[%s1 + $0x9f0] sm:$0xff]
  %v472 = vld [vmem:[%s1 + $0x9f8] sm:$0xff]
  %v473 = vld [vmem:[%s1 + $0xa00] sm:$0xff]
  %v474 = vld [vmem:[%s1 + $0xa08] sm:$0xff]
  %v475 = vld [vmem:[%s1 + $0xa10] sm:$0xf]
  %v476 = vld [vmem:[%s1 + $0xa14] sm:$0xff]
  %v477 = vld [vmem:[%s1 + $0xa1c] sm:$0xff]
  %v478 = vld [vmem:[%s1 + $0xa24] sm:$0xff]
  %v479 = vld [vmem:[%s1 + $0xa2c] sm:$0xff]
  %v480 = vld [vmem:[%s1 + $0xa34] sm:$0xff]
  %v481 = vld [vmem:[%s1 + $0xa3c] sm:$0xff]
  %v482 = vld [vmem:[%s1 + $0xa44] sm:$0xff]
  %v483 = vld [vmem:[%s1 + $0xa4c] sm:$0xf]
  %v484 = vld [vmem:[%s1 + $0xa50] sm:$0xff]
  %v485 = vld [vmem:[%s1 + $0xa58] sm:$0xff]
  %v486 = vld [vmem:[%s1 + $0xa60] sm:$0xff]
  %v487 = vld [vmem:[%s1 + $0xa68] sm:$0xff]
  %v488 = vld [vmem:[%s1 + $0xa70] sm:$0xff]
  %v489 = vld [vmem:[%s1 + $0xa78] sm:$0xff]
  %v490 = vld [vmem:[%s1 + $0xa80] sm:$0xff]
  %v491 = vld [vmem:[%s1 + $0xa88] sm:$0xf]
  %v492 = vld [vmem:[%s1 + $0xa8c] sm:$0xff]
  %v493 = vld [vmem:[%s1 + $0xa94] sm:$0xff]
  %v494 = vld [vmem:[%s1 + $0xa9c] sm:$0xff]
  %v495 = vld [vmem:[%s1 + $0xaa4] sm:$0xff]
  %v496 = vld [vmem:[%s1 + $0xaac] sm:$0xff]
  %v497 = vld [vmem:[%s1 + $0xab4] sm:$0xff]
  %v498 = vld [vmem:[%s1 + $0xabc] sm:$0xff]
  %v499 = vld [vmem:[%s1 + $0xac4] sm:$0xf]
  %v500 = vld [vmem:[%s1 + $0xac8] sm:$0xff]
  %v501 = vld [vmem:[%s1 + $0xad0] sm:$0xff]
  %v502 = vld [vmem:[%s1 + $0xad8] sm:$0xff]
  %v503 = vld [vmem:[%s1 + $0xae0] sm:$0xff]
  %v504 = vld [vmem:[%s1 + $0xae8] sm:$0xff]
  %v505 = vld [vmem:[%s1 + $0xaf0] sm:$0xff]
  %v506 = vld [vmem:[%s1 + $0xaf8] sm:$0xff]
  %v507 = vld [vmem:[%s1 + $0xb00] sm:$0xf]
  %v508 = vld [vmem:[%s1 + $0xb04] sm:$0xff]
  %v509 = vld [vmem:[%s1 + $0xb0c] sm:$0xff]
  %v510 = vld [vmem:[%s1 + $0xb14] sm:$0xff]
  %v511 = vld [vmem:[%s1 + $0xb1c] sm:$0xff]
  %v512 = vld [vmem:[%s1 + $0xb24] sm:$0xff]
  %v513 = vld [vmem:[%s1 + $0xb2c] sm:$0xff]
  %v514 = vld [vmem:[%s1 + $0xb34] sm:$0xff]
  %v515 = vld [vmem:[%s1 + $0xb3c] sm:$0xf]
  %v900 = vunpack.c.l.b16 %v132
  %v901 = vunpack.c.h.b16 %v132
  %v902 = vunpack.c.l.b16 %v133
  %v903 = vunpack.c.h.b16 %v133
  %v904 = vunpack.c.l.b16 %v134
  %v905 = vunpack.c.h.b16 %v134
  %v906 = vunpack.c.l.b16 %v135
  %v907 = vunpack.c.h.b16 %v135
  %v908 = vunpack.c.l.b16 %v136
  %v909 = vunpack.c.h.b16 %v136
  %v910 = vunpack.c.l.b16 %v137
  %v911 = vunpack.c.h.b16 %v137
  %v912 = vunpack.c.l.b16 %v138
  %v913 = vunpack.c.h.b16 %v138
  %v914 = vunpack.c.l.b16 %v139
  %v915 = vunpack.c.l.b16 %v140
  %v916 = vunpack.c.h.b16 %v140
  %v917 = vunpack.c.l.b16 %v141
  %v918 = vunpack.c.h.b16 %v141
  %v919 = vunpack.c.l.b16 %v142
  %v920 = vunpack.c.h.b16 %v142
  %v921 = vunpack.c.l.b16 %v143
  %v922 = vunpack.c.h.b16 %v143
  %v923 = vunpack.c.l.b16 %v144
  %v924 = vunpack.c.h.b16 %v144
  %v925 = vunpack.c.l.b16 %v145
  %v926 = vunpack.c.h.b16 %v145
  %v927 = vunpack.c.l.b16 %v146
  %v928 = vunpack.c.h.b16 %v146
  %v929 = vunpack.c.l.b16 %v147
  %v930 = vunpack.c.l.b16 %v148
  %v931 = vunpack.c.h.b16 %v148
  %v932 = vunpack.c.l.b16 %v149
  %v933 = vunpack.c.h.b16 %v149
  %v934 = vunpack.c.l.b16 %v150
  %v935 = vunpack.c.h.b16 %v150
  %v936 = vunpack.c.l.b16 %v151
  %v937 = vunpack.c.h.b16 %v151
  %v938 = vunpack.c.l.b16 %v152
  %v939 = vunpack.c.h.b16 %v152
  %v940 = vunpack.c.l.b16 %v153
  %v941 = vunpack.c.h.b16 %v153
  %v942 = vunpack.c.l.b16 %v154
  %v943 = vunpack.c.h.b16 %v154
  %v944 = vunpack.c.l.b16 %v155
  %v945 = vunpack.c.l.b16 %v156
  %v946 = vunpack.c.h.b16 %v156
  %v947 = vunpack.c.l.b16 %v157
  %v948 = vunpack.c.h.b16 %v157
  %v949 = vunpack.c.l.b16 %v158
  %v950 = vunpack.c.h.b16 %v158
  %v951 = vunpack.c.l.b16 %v159
  %v952 = vunpack.c.h.b16 %v159
  %v953 = vunpack.c.l.b16 %v160
  %v954 = vunpack.c.h.b16 %v160
  %v955 = vunpack.c.l.b16 %v161
  %v956 = vunpack.c.h.b16 %v161
  %v957 = vunpack.c.l.b16 %v162
  %v958 = vunpack.c.h.b16 %v162
  %v959 = vunpack.c.l.b16 %v163
  %v960 = vunpack.c.l.b16 %v164
  %v961 = vunpack.c.h.b16 %v164
  %v962 = vunpack.c.l.b16 %v165
  %v963 = vunpack.c.h.b16 %v165
  %v964 = vunpack.c.l.b16 %v166
  %v965 = vunpack.c.h.b16 %v166
  %v966 = vunpack.c.l.b16 %v167
  %v967 = vunpack.c.h.b16 %v167
  %v968 = vunpack.c.l.b16 %v168
  %v969 = vunpack.c.h.b16 %v168
  %v970 = vunpack.c.l.b16 %v169
  %v971 = vunpack.c.h.b16 %v169
  %v972 = vunpack.c.l.b16 %v170
  %v973 = vunpack.c.h.b16 %v170
  %v974 = vunpack.c.l.b16 %v171
  %v975 = vunpack.c.l.b16 %v172
  %v976 = vunpack.c.h.b16 %v172
  %v977 = vunpack.c.l.b16 %v173
  %v978 = vunpack.c.h.b16 %v173
  %v979 = vunpack.c.l.b16 %v174
  %v980 = vunpack.c.h.b16 %v174
  %v981 = vunpack.c.l.b16 %v175
  %v982 = vunpack.c.h.b16 %v175
  %v983 = vunpack.c.l.b16 %v176
  %v984 = vunpack.c.h.b16 %v176
  %v985 = vunpack.c.l.b16 %v177
  %v986 = vunpack.c.h.b16 %v177
  %v987 = vunpack.c.l.b16 %v178
  %v988 = vunpack.c.h.b16 %v178
  %v989 = vunpack.c.l.b16 %v179
  %v990 = vunpack.c.l.b16 %v180
  %v991 = vunpack.c.h.b16 %v180
  %v992 = vunpack.c.l.b16 %v181
  %v993 = vunpack.c.h.b16 %v181
  %v994 = vunpack.c.l.b16 %v182
  %v995 = vunpack.c.h.b16 %v182
  %v996 = vunpack.c.l.b16 %v183
  %v997 = vunpack.c.h.b16 %v183
  %v998 = vunpack.c.l.b16 %v184
  %v999 = vunpack.c.h.b16 %v184
  %v1000 = vunpack.c.l.b16 %v185
  %v1001 = vunpack.c.h.b16 %v185
  %v1002 = vunpack.c.l.b16 %v186
  %v1003 = vunpack.c.h.b16 %v186
  %v1004 = vunpack.c.l.b16 %v187
  %v1005 = vunpack.c.l.b16 %v188
  %v1006 = vunpack.c.h.b16 %v188
  %v1007 = vunpack.c.l.b16 %v189
  %v1008 = vunpack.c.h.b16 %v189
  %v1009 = vunpack.c.l.b16 %v190
  %v1010 = vunpack.c.h.b16 %v190
  %v1011 = vunpack.c.l.b16 %v191
  %v1012 = vunpack.c.h.b16 %v191
  %v1013 = vunpack.c.l.b16 %v192
  %v1014 = vunpack.c.h.b16 %v192
  %v1015 = vunpack.c.l.b16 %v193
  %v1016 = vunpack.c.h.b16 %v193
  %v1017 = vunpack.c.l.b16 %v194
  %v1018 = vunpack.c.h.b16 %v194
  %v1019 = vunpack.c.l.b16 %v195
  %v1020 = vunpack.c.l.b16 %v196
  %v1021 = vunpack.c.h.b16 %v196
  %v1022 = vunpack.c.l.b16 %v197
  %v1023 = vunpack.c.h.b16 %v197
  %v1024 = vunpack.c.l.b16 %v198
  %v1025 = vunpack.c.h.b16 %v198
  %v1026 = vunpack.c.l.b16 %v199
  %v1027 = vunpack.c.h.b16 %v199
  %v1028 = vunpack.c.l.b16 %v200
  %v1029 = vunpack.c.h.b16 %v200
  %v1030 = vunpack.c.l.b16 %v201
  %v1031 = vunpack.c.h.b16 %v201
  %v1032 = vunpack.c.l.b16 %v202
  %v1033 = vunpack.c.h.b16 %v202
  %v1034 = vunpack.c.l.b16 %v203
  %v1035 = vunpack.c.l.b16 %v204
  %v1036 = vunpack.c.h.b16 %v204
  %v1037 = vunpack.c.l.b16 %v205
  %v1038 = vunpack.c.h.b16 %v205
  %v1039 = vunpack.c.l.b16 %v206
  %v1040 = vunpack.c.h.b16 %v206
  %v1041 = vunpack.c.l.b16 %v207
  %v1042 = vunpack.c.h.b16 %v207
  %v1043 = vunpack.c.l.b16 %v208
  %v1044 = vunpack.c.h.b16 %v208
  %v1045 = vunpack.c.l.b16 %v209
  %v1046 = vunpack.c.h.b16 %v209
  %v1047 = vunpack.c.l.b16 %v210
  %v1048 = vunpack.c.h.b16 %v210
  %v1049 = vunpack.c.l.b16 %v211
  %v1050 = vunpack.c.l.b16 %v212
  %v1051 = vunpack.c.h.b16 %v212
  %v1052 = vunpack.c.l.b16 %v213
  %v1053 = vunpack.c.h.b16 %v213
  %v1054 = vunpack.c.l.b16 %v214
  %v1055 = vunpack.c.h.b16 %v214
  %v1056 = vunpack.c.l.b16 %v215
  %v1057 = vunpack.c.h.b16 %v215
  %v1058 = vunpack.c.l.b16 %v216
  %v1059 = vunpack.c.h.b16 %v216
  %v1060 = vunpack.c.l.b16 %v217
  %v1061 = vunpack.c.h.b16 %v217
  %v1062 = vunpack.c.l.b16 %v218
  %v1063 = vunpack.c.h.b16 %v218
  %v1064 = vunpack.c.l.b16 %v219
  %v1065 = vunpack.c.l.b16 %v220
  %v1066 = vunpack.c.h.b16 %v220
  %v1067 = vunpack.c.l.b16 %v221
  %v1068 = vunpack.c.h.b16 %v221
  %v1069 = vunpack.c.l.b16 %v222
  %v1070 = vunpack.c.h.b16 %v222
  %v1071 = vunpack.c.l.b16 %v223
  %v1072 = vunpack.c.h.b16 %v223
  %v1073 = vunpack.c.l.b16 %v224
  %v1074 = vunpack.c.h.b16 %v224
  %v1075 = vunpack.c.l.b16 %v225
  %v1076 = vunpack.c.h.b16 %v225
  %v1077 = vunpack.c.l.b16 %v226
  %v1078 = vunpack.c.h.b16 %v226
  %v1079 = vunpack.c.l.b16 %v227
  %v1080 = vunpack.c.l.b16 %v228
  %v1081 = vunpack.c.h.b16 %v228
  %v1082 = vunpack.c.l.b16 %v229
  %v1083 = vunpack.c.h.b16 %v229
  %v1084 = vunpack.c.l.b16 %v230
  %v1085 = vunpack.c.h.b16 %v230
  %v1086 = vunpack.c.l.b16 %v231
  %v1087 = vunpack.c.h.b16 %v231
  %v1088 = vunpack.c.l.b16 %v232
  %v1089 = vunpack.c.h.b16 %v232
  %v1090 = vunpack.c.l.b16 %v233
  %v1091 = vunpack.c.h.b16 %v233
  %v1092 = vunpack.c.l.b16 %v234
  %v1093 = vunpack.c.h.b16 %v234
  %v1094 = vunpack.c.l.b16 %v235
  %v1095 = vunpack.c.l.b16 %v236
  %v1096 = vunpack.c.h.b16 %v236
  %v1097 = vunpack.c.l.b16 %v237
  %v1098 = vunpack.c.h.b16 %v237
  %v1099 = vunpack.c.l.b16 %v238
  %v1100 = vunpack.c.h.b16 %v238
  %v1101 = vunpack.c.l.b16 %v239
  %v1102 = vunpack.c.h.b16 %v239
  %v1103 = vunpack.c.l.b16 %v240
  %v1104 = vunpack.c.h.b16 %v240
  %v1105 = vunpack.c.l.b16 %v241
  %v1106 = vunpack.c.h.b16 %v241
  %v1107 = vunpack.c.l.b16 %v242
  %v1108 = vunpack.c.h.b16 %v242
  %v1109 = vunpack.c.l.b16 %v243
  %v1110 = vunpack.c.l.b16 %v244
  %v1111 = vunpack.c.h.b16 %v244
  %v1112 = vunpack.c.l.b16 %v245
  %v1113 = vunpack.c.h.b16 %v245
  %v1114 = vunpack.c.l.b16 %v246
  %v1115 = vunpack.c.h.b16 %v246
  %v1116 = vunpack.c.l.b16 %v247
  %v1117 = vunpack.c.h.b16 %v247
  %v1118 = vunpack.c.l.b16 %v248
  %v1119 = vunpack.c.h.b16 %v248
  %v1120 = vunpack.c.l.b16 %v249
  %v1121 = vunpack.c.h.b16 %v249
  %v1122 = vunpack.c.l.b16 %v250
  %v1123 = vunpack.c.h.b16 %v250
  %v1124 = vunpack.c.l.b16 %v251
  %v1125 = vunpack.c.l.b16 %v252
  %v1126 = vunpack.c.h.b16 %v252
  %v1127 = vunpack.c.l.b16 %v253
  %v1128 = vunpack.c.h.b16 %v253
  %v1129 = vunpack.c.l.b16 %v254
  %v1130 = vunpack.c.h.b16 %v254
  %v1131 = vunpack.c.l.b16 %v255
  %v1132 = vunpack.c.h.b16 %v255
  %v1133 = vunpack.c.l.b16 %v256
  %v1134 = vunpack.c.h.b16 %v256
  %v1135 = vunpack.c.l.b16 %v257
  %v1136 = vunpack.c.h.b16 %v257
  %v1137 = vunpack.c.l.b16 %v258
  %v1138 = vunpack.c.h.b16 %v258
  %v1139 = vunpack.c.l.b16 %v259
  %v1140 = vunpack.c.l.b16 %v260
  %v1141 = vunpack.c.h.b16 %v260
  %v1142 = vunpack.c.l.b16 %v261
  %v1143 = vunpack.c.h.b16 %v261
  %v1144 = vunpack.c.l.b16 %v262
  %v1145 = vunpack.c.h.b16 %v262
  %v1146 = vunpack.c.l.b16 %v263
  %v1147 = vunpack.c.h.b16 %v263
  %v1148 = vunpack.c.l.b16 %v264
  %v1149 = vunpack.c.h.b16 %v264
  %v1150 = vunpack.c.l.b16 %v265
  %v1151 = vunpack.c.h.b16 %v265
  %v1152 = vunpack.c.l.b16 %v266
  %v1153 = vunpack.c.h.b16 %v266
  %v1154 = vunpack.c.l.b16 %v267
  %v1155 = vunpack.c.l.b16 %v268
  %v1156 = vunpack.c.h.b16 %v268
  %v1157 = vunpack.c.l.b16 %v269
  %v1158 = vunpack.c.h.b16 %v269
  %v1159 = vunpack.c.l.b16 %v270
  %v1160 = vunpack.c.h.b16 %v270
  %v1161 = vunpack.c.l.b16 %v271
  %v1162 = vunpack.c.h.b16 %v271
  %v1163 = vunpack.c.l.b16 %v272
  %v1164 = vunpack.c.h.b16 %v272
  %v1165 = vunpack.c.l.b16 %v273
  %v1166 = vunpack.c.h.b16 %v273
  %v1167 = vunpack.c.l.b16 %v274
  %v1168 = vunpack.c.h.b16 %v274
  %v1169 = vunpack.c.l.b16 %v275
  %v1170 = vunpack.c.l.b16 %v276
  %v1171 = vunpack.c.h.b16 %v276
  %v1172 = vunpack.c.l.b16 %v277
  %v1173 = vunpack.c.h.b16 %v277
  %v1174 = vunpack.c.l.b16 %v278
  %v1175 = vunpack.c.h.b16 %v278
  %v1176 = vunpack.c.l.b16 %v279
  %v1177 = vunpack.c.h.b16 %v279
  %v1178 = vunpack.c.l.b16 %v280
  %v1179 = vunpack.c.h.b16 %v280
  %v1180 = vunpack.c.l.b16 %v281
  %v1181 = vunpack.c.h.b16 %v281
  %v1182 = vunpack.c.l.b16 %v282
  %v1183 = vunpack.c.h.b16 %v282
  %v1184 = vunpack.c.l.b16 %v283
  %v1185 = vunpack.c.l.b16 %v284
  %v1186 = vunpack.c.h.b16 %v284
  %v1187 = vunpack.c.l.b16 %v285
  %v1188 = vunpack.c.h.b16 %v285
  %v1189 = vunpack.c.l.b16 %v286
  %v1190 = vunpack.c.h.b16 %v286
  %v1191 = vunpack.c.l.b16 %v287
  %v1192 = vunpack.c.h.b16 %v287
  %v1193 = vunpack.c.l.b16 %v288
  %v1194 = vunpack.c.h.b16 %v288
  %v1195 = vunpack.c.l.b16 %v289
  %v1196 = vunpack.c.h.b16 %v289
  %v1197 = vunpack.c.l.b16 %v290
  %v1198 = vunpack.c.h.b16 %v290
  %v1199 = vunpack.c.l.b16 %v291
  %v1200 = vunpack.c.l.b16 %v292
  %v1201 = vunpack.c.h.b16 %v292
  %v1202 = vunpack.c.l.b16 %v293
  %v1203 = vunpack.c.h.b16 %v293
  %v1204 = vunpack.c.l.b16 %v294
  %v1205 = vunpack.c.h.b16 %v294
  %v1206 = vunpack.c.l.b16 %v295
  %v1207 = vunpack.c.h.b16 %v295
  %v1208 = vunpack.c.l.b16 %v296
  %v1209 = vunpack.c.h.b16 %v296
  %v1210 = vunpack.c.l.b16 %v297
  %v1211 = vunpack.c.h.b16 %v297
  %v1212 = vunpack.c.l.b16 %v298
  %v1213 = vunpack.c.h.b16 %v298
  %v1214 = vunpack.c.l.b16 %v299
  %v1215 = vunpack.c.l.b16 %v300
  %v1216 = vunpack.c.h.b16 %v300
  %v1217 = vunpack.c.l.b16 %v301
  %v1218 = vunpack.c.h.b16 %v301
  %v1219 = vunpack.c.l.b16 %v302
  %v1220 = vunpack.c.h.b16 %v302
  %v1221 = vunpack.c.l.b16 %v303
  %v1222 = vunpack.c.h.b16 %v303
  %v1223 = vunpack.c.l.b16 %v304
  %v1224 = vunpack.c.h.b16 %v304
  %v1225 = vunpack.c.l.b16 %v305
  %v1226 = vunpack.c.h.b16 %v305
  %v1227 = vunpack.c.l.b16 %v306
  %v1228 = vunpack.c.h.b16 %v306
  %v1229 = vunpack.c.l.b16 %v307
  %v1230 = vunpack.c.l.b16 %v308
  %v1231 = vunpack.c.h.b16 %v308
  %v1232 = vunpack.c.l.b16 %v309
  %v1233 = vunpack.c.h.b16 %v309
  %v1234 = vunpack.c.l.b16 %v310
  %v1235 = vunpack.c.h.b16 %v310
  %v1236 = vunpack.c.l.b16 %v311
  %v1237 = vunpack.c.h.b16 %v311
  %v1238 = vunpack.c.l.b16 %v312
  %v1239 = vunpack.c.h.b16 %v312
  %v1240 = vunpack.c.l.b16 %v313
  %v1241 = vunpack.c.h.b16 %v313
  %v1242 = vunpack.c.l.b16 %v314
  %v1243 = vunpack.c.h.b16 %v314
  %v1244 = vunpack.c.l.b16 %v315
  %v1245 = vunpack.c.l.b16 %v316
  %v1246 = vunpack.c.h.b16 %v316
  %v1247 = vunpack.c.l.b16 %v317
  %v1248 = vunpack.c.h.b16 %v317
  %v1249 = vunpack.c.l.b16 %v318
  %v1250 = vunpack.c.h.b16 %v318
  %v1251 = vunpack.c.l.b16 %v319
  %v1252 = vunpack.c.h.b16 %v319
  %v1253 = vunpack.c.l.b16 %v320
  %v1254 = vunpack.c.h.b16 %v320
  %v1255 = vunpack.c.l.b16 %v321
  %v1256 = vunpack.c.h.b16 %v321
  %v1257 = vunpack.c.l.b16 %v322
  %v1258 = vunpack.c.h.b16 %v322
  %v1259 = vunpack.c.l.b16 %v323
  %v1260 = vunpack.c.l.b16 %v324
  %v1261 = vunpack.c.h.b16 %v324
  %v1262 = vunpack.c.l.b16 %v325
  %v1263 = vunpack.c.h.b16 %v325
  %v1264 = vunpack.c.l.b16 %v326
  %v1265 = vunpack.c.h.b16 %v326
  %v1266 = vunpack.c.l.b16 %v327
  %v1267 = vunpack.c.h.b16 %v327
  %v1268 = vunpack.c.l.b16 %v328
  %v1269 = vunpack.c.h.b16 %v328
  %v1270 = vunpack.c.l.b16 %v329
  %v1271 = vunpack.c.h.b16 %v329
  %v1272 = vunpack.c.l.b16 %v330
  %v1273 = vunpack.c.h.b16 %v330
  %v1274 = vunpack.c.l.b16 %v331
  %v1275 = vunpack.c.l.b16 %v332
  %v1276 = vunpack.c.h.b16 %v332
  %v1277 = vunpack.c.l.b16 %v333
  %v1278 = vunpack.c.h.b16 %v333
  %v1279 = vunpack.c.l.b16 %v334
  %v1280 = vunpack.c.h.b16 %v334
  %v1281 = vunpack.c.l.b16 %v335
  %v1282 = vunpack.c.h.b16 %v335
  %v1283 = vunpack.c.l.b16 %v336
  %v1284 = vunpack.c.h.b16 %v336
  %v1285 = vunpack.c.l.b16 %v337
  %v1286 = vunpack.c.h.b16 %v337
  %v1287 = vunpack.c.l.b16 %v338
  %v1288 = vunpack.c.h.b16 %v338
  %v1289 = vunpack.c.l.b16 %v339
  %v1290 = vunpack.c.l.b16 %v340
  %v1291 = vunpack.c.h.b16 %v340
  %v1292 = vunpack.c.l.b16 %v341
  %v1293 = vunpack.c.h.b16 %v341
  %v1294 = vunpack.c.l.b16 %v342
  %v1295 = vunpack.c.h.b16 %v342
  %v1296 = vunpack.c.l.b16 %v343
  %v1297 = vunpack.c.h.b16 %v343
  %v1298 = vunpack.c.l.b16 %v344
  %v1299 = vunpack.c.h.b16 %v344
  %v1300 = vunpack.c.l.b16 %v345
  %v1301 = vunpack.c.h.b16 %v345
  %v1302 = vunpack.c.l.b16 %v346
  %v1303 = vunpack.c.h.b16 %v346
  %v1304 = vunpack.c.l.b16 %v347
  %v1305 = vunpack.c.l.b16 %v348
  %v1306 = vunpack.c.h.b16 %v348
  %v1307 = vunpack.c.l.b16 %v349
  %v1308 = vunpack.c.h.b16 %v349
  %v1309 = vunpack.c.l.b16 %v350
  %v1310 = vunpack.c.h.b16 %v350
  %v1311 = vunpack.c.l.b16 %v351
  %v1312 = vunpack.c.h.b16 %v351
  %v1313 = vunpack.c.l.b16 %v352
  %v1314 = vunpack.c.h.b16 %v352
  %v1315 = vunpack.c.l.b16 %v353
  %v1316 = vunpack.c.h.b16 %v353
  %v1317 = vunpack.c.l.b16 %v354
  %v1318 = vunpack.c.h.b16 %v354
  %v1319 = vunpack.c.l.b16 %v355
  %v1320 = vunpack.c.l.b16 %v356
  %v1321 = vunpack.c.h.b16 %v356
  %v1322 = vunpack.c.l.b16 %v357
  %v1323 = vunpack.c.h.b16 %v357
  %v1324 = vunpack.c.l.b16 %v358
  %v1325 = vunpack.c.h.b16 %v358
  %v1326 = vunpack.c.l.b16 %v359
  %v1327 = vunpack.c.h.b16 %v359
  %v1328 = vunpack.c.l.b16 %v360
  %v1329 = vunpack.c.h.b16 %v360
  %v1330 = vunpack.c.l.b16 %v361
  %v1331 = vunpack.c.h.b16 %v361
  %v1332 = vunpack.c.l.b16 %v362
  %v1333 = vunpack.c.h.b16 %v362
  %v1334 = vunpack.c.l.b16 %v363
  %v1335 = vunpack.c.l.b16 %v364
  %v1336 = vunpack.c.h.b16 %v364
  %v1337 = vunpack.c.l.b16 %v365
  %v1338 = vunpack.c.h.b16 %v365
  %v1339 = vunpack.c.l.b16 %v366
  %v1340 = vunpack.c.h.b16 %v366
  %v1341 = vunpack.c.l.b16 %v367
  %v1342 = vunpack.c.h.b16 %v367
  %v1343 = vunpack.c.l.b16 %v368
  %v1344 = vunpack.c.h.b16 %v368
  %v1345 = vunpack.c.l.b16 %v369
  %v1346 = vunpack.c.h.b16 %v369
  %v1347 = vunpack.c.l.b16 %v370
  %v1348 = vunpack.c.h.b16 %v370
  %v1349 = vunpack.c.l.b16 %v371
  %v1350 = vunpack.c.l.b16 %v372
  %v1351 = vunpack.c.h.b16 %v372
  %v1352 = vunpack.c.l.b16 %v373
  %v1353 = vunpack.c.h.b16 %v373
  %v1354 = vunpack.c.l.b16 %v374
  %v1355 = vunpack.c.h.b16 %v374
  %v1356 = vunpack.c.l.b16 %v375
  %v1357 = vunpack.c.h.b16 %v375
  %v1358 = vunpack.c.l.b16 %v376
  %v1359 = vunpack.c.h.b16 %v376
  %v1360 = vunpack.c.l.b16 %v377
  %v1361 = vunpack.c.h.b16 %v377
  %v1362 = vunpack.c.l.b16 %v378
  %v1363 = vunpack.c.h.b16 %v378
  %v1364 = vunpack.c.l.b16 %v379
  %v1365 = vunpack.c.l.b16 %v380
  %v1366 = vunpack.c.h.b16 %v380
  %v1367 = vunpack.c.l.b16 %v381
  %v1368 = vunpack.c.h.b16 %v381
  %v1369 = vunpack.c.l.b16 %v382
  %v1370 = vunpack.c.h.b16 %v382
  %v1371 = vunpack.c.l.b16 %v383
  %v1372 = vunpack.c.h.b16 %v383
  %v1373 = vunpack.c.l.b16 %v384
  %v1374 = vunpack.c.h.b16 %v384
  %v1375 = vunpack.c.l.b16 %v385
  %v1376 = vunpack.c.h.b16 %v385
  %v1377 = vunpack.c.l.b16 %v386
  %v1378 = vunpack.c.h.b16 %v386
  %v1379 = vunpack.c.l.b16 %v387
  %v1380 = vunpack.c.l.b16 %v388
  %v1381 = vunpack.c.h.b16 %v388
  %v1382 = vunpack.c.l.b16 %v389
  %v1383 = vunpack.c.h.b16 %v389
  %v1384 = vunpack.c.l.b16 %v390
  %v1385 = vunpack.c.h.b16 %v390
  %v1386 = vunpack.c.l.b16 %v391
  %v1387 = vunpack.c.h.b16 %v391
  %v1388 = vunpack.c.l.b16 %v392
  %v1389 = vunpack.c.h.b16 %v392
  %v1390 = vunpack.c.l.b16 %v393
  %v1391 = vunpack.c.h.b16 %v393
  %v1392 = vunpack.c.l.b16 %v394
  %v1393 = vunpack.c.h.b16 %v394
  %v1394 = vunpack.c.l.b16 %v395
  %v1395 = vunpack.c.l.b16 %v396
  %v1396 = vunpack.c.h.b16 %v396
  %v1397 = vunpack.c.l.b16 %v397
  %v1398 = vunpack.c.h.b16 %v397
  %v1399 = vunpack.c.l.b16 %v398
  %v1400 = vunpack.c.h.b16 %v398
  %v1401 = vunpack.c.l.b16 %v399
  %v1402 = vunpack.c.h.b16 %v399
  %v1403 = vunpack.c.l.b16 %v400
  %v1404 = vunpack.c.h.b16 %v400
  %v1405 = vunpack.c.l.b16 %v401
  %v1406 = vunpack.c.h.b16 %v401
  %v1407 = vunpack.c.l.b16 %v402
  %v1408 = vunpack.c.h.b16 %v402
  %v1409 = vunpack.c.l.b16 %v403
  %v1410 = vunpack.c.l.b16 %v404
  %v1411 = vunpack.c.h.b16 %v404
  %v1412 = vunpack.c.l.b16 %v405
  %v1413 = vunpack.c.h.b16 %v405
  %v1414 = vunpack.c.l.b16 %v406
  %v1415 = vunpack.c.h.b16 %v406
  %v1416 = vunpack.c.l.b16 %v407
  %v1417 = vunpack.c.h.b16 %v407
  %v1418 = vunpack.c.l.b16 %v408
  %v1419 = vunpack.c.h.b16 %v408
  %v1420 = vunpack.c.l.b16 %v409
  %v1421 = vunpack.c.h.b16 %v409
  %v1422 = vunpack.c.l.b16 %v410
  %v1423 = vunpack.c.h.b16 %v410
  %v1424 = vunpack.c.l.b16 %v411
  %v1425 = vunpack.c.l.b16 %v412
  %v1426 = vunpack.c.h.b16 %v412
  %v1427 = vunpack.c.l.b16 %v413
  %v1428 = vunpack.c.h.b16 %v413
  %v1429 = vunpack.c.l.b16 %v414
  %v1430 = vunpack.c.h.b16 %v414
  %v1431 = vunpack.c.l.b16 %v415
  %v1432 = vunpack.c.h.b16 %v415
  %v1433 = vunpack.c.l.b16 %v416
  %v1434 = vunpack.c.h.b16 %v416
  %v1435 = vunpack.c.l.b16 %v417
  %v1436 = vunpack.c.h.b16 %v417
  %v1437 = vunpack.c.l.b16 %v418
  %v1438 = vunpack.c.h.b16 %v418
  %v1439 = vunpack.c.l.b16 %v419
  %v1440 = vunpack.c.l.b16 %v420
  %v1441 = vunpack.c.h.b16 %v420
  %v1442 = vunpack.c.l.b16 %v421
  %v1443 = vunpack.c.h.b16 %v421
  %v1444 = vunpack.c.l.b16 %v422
  %v1445 = vunpack.c.h.b16 %v422
  %v1446 = vunpack.c.l.b16 %v423
  %v1447 = vunpack.c.h.b16 %v423
  %v1448 = vunpack.c.l.b16 %v424
  %v1449 = vunpack.c.h.b16 %v424
  %v1450 = vunpack.c.l.b16 %v425
  %v1451 = vunpack.c.h.b16 %v425
  %v1452 = vunpack.c.l.b16 %v426
  %v1453 = vunpack.c.h.b16 %v426
  %v1454 = vunpack.c.l.b16 %v427
  %v1455 = vunpack.c.l.b16 %v428
  %v1456 = vunpack.c.h.b16 %v428
  %v1457 = vunpack.c.l.b16 %v429
  %v1458 = vunpack.c.h.b16 %v429
  %v1459 = vunpack.c.l.b16 %v430
  %v1460 = vunpack.c.h.b16 %v430
  %v1461 = vunpack.c.l.b16 %v431
  %v1462 = vunpack.c.h.b16 %v431
  %v1463 = vunpack.c.l.b16 %v432
  %v1464 = vunpack.c.h.b16 %v432
  %v1465 = vunpack.c.l.b16 %v433
  %v1466 = vunpack.c.h.b16 %v433
  %v1467 = vunpack.c.l.b16 %v434
  %v1468 = vunpack.c.h.b16 %v434
  %v1469 = vunpack.c.l.b16 %v435
  %v1470 = vunpack.c.l.b16 %v436
  %v1471 = vunpack.c.h.b16 %v436
  %v1472 = vunpack.c.l.b16 %v437
  %v1473 = vunpack.c.h.b16 %v437
  %v1474 = vunpack.c.l.b16 %v438
  %v1475 = vunpack.c.h.b16 %v438
  %v1476 = vunpack.c.l.b16 %v439
  %v1477 = vunpack.c.h.b16 %v439
  %v1478 = vunpack.c.l.b16 %v440
  %v1479 = vunpack.c.h.b16 %v440
  %v1480 = vunpack.c.l.b16 %v441
  %v1481 = vunpack.c.h.b16 %v441
  %v1482 = vunpack.c.l.b16 %v442
  %v1483 = vunpack.c.h.b16 %v442
  %v1484 = vunpack.c.l.b16 %v443
  %v1485 = vunpack.c.l.b16 %v444
  %v1486 = vunpack.c.h.b16 %v444
  %v1487 = vunpack.c.l.b16 %v445
  %v1488 = vunpack.c.h.b16 %v445
  %v1489 = vunpack.c.l.b16 %v446
  %v1490 = vunpack.c.h.b16 %v446
  %v1491 = vunpack.c.l.b16 %v447
  %v1492 = vunpack.c.h.b16 %v447
  %v1493 = vunpack.c.l.b16 %v448
  %v1494 = vunpack.c.h.b16 %v448
  %v1495 = vunpack.c.l.b16 %v449
  %v1496 = vunpack.c.h.b16 %v449
  %v1497 = vunpack.c.l.b16 %v450
  %v1498 = vunpack.c.h.b16 %v450
  %v1499 = vunpack.c.l.b16 %v451
  %v1500 = vunpack.c.l.b16 %v452
  %v1501 = vunpack.c.h.b16 %v452
  %v1502 = vunpack.c.l.b16 %v453
  %v1503 = vunpack.c.h.b16 %v453
  %v1504 = vunpack.c.l.b16 %v454
  %v1505 = vunpack.c.h.b16 %v454
  %v1506 = vunpack.c.l.b16 %v455
  %v1507 = vunpack.c.h.b16 %v455
  %v1508 = vunpack.c.l.b16 %v456
  %v1509 = vunpack.c.h.b16 %v456
  %v1510 = vunpack.c.l.b16 %v457
  %v1511 = vunpack.c.h.b16 %v457
  %v1512 = vunpack.c.l.b16 %v458
  %v1513 = vunpack.c.h.b16 %v458
  %v1514 = vunpack.c.l.b16 %v459
  %v1515 = vunpack.c.l.b16 %v460
  %v1516 = vunpack.c.h.b16 %v460
  %v1517 = vunpack.c.l.b16 %v461
  %v1518 = vunpack.c.h.b16 %v461
  %v1519 = vunpack.c.l.b16 %v462
  %v1520 = vunpack.c.h.b16 %v462
  %v1521 = vunpack.c.l.b16 %v463
  %v1522 = vunpack.c.h.b16 %v463
  %v1523 = vunpack.c.l.b16 %v464
  %v1524 = vunpack.c.h.b16 %v464
  %v1525 = vunpack.c.l.b16 %v465
  %v1526 = vunpack.c.h.b16 %v465
  %v1527 = vunpack.c.l.b16 %v466
  %v1528 = vunpack.c.h.b16 %v466
  %v1529 = vunpack.c.l.b16 %v467
  %v1530 = vunpack.c.l.b16 %v468
  %v1531 = vunpack.c.h.b16 %v468
  %v1532 = vunpack.c.l.b16 %v469
  %v1533 = vunpack.c.h.b16 %v469
  %v1534 = vunpack.c.l.b16 %v470
  %v1535 = vunpack.c.h.b16 %v470
  %v1536 = vunpack.c.l.b16 %v471
  %v1537 = vunpack.c.h.b16 %v471
  %v1538 = vunpack.c.l.b16 %v472
  %v1539 = vunpack.c.h.b16 %v472
  %v1540 = vunpack.c.l.b16 %v473
  %v1541 = vunpack.c.h.b16 %v473
  %v1542 = vunpack.c.l.b16 %v474
  %v1543 = vunpack.c.h.b16 %v474
  %v1544 = vunpack.c.l.b16 %v475
  %v1545 = vunpack.c.l.b16 %v476
  %v1546 = vunpack.c.h.b16 %v476
  %v1547 = vunpack.c.l.b16 %v477
  %v1548 = vunpack.c.h.b16 %v477
  %v1549 = vunpack.c.l.b16 %v478
  %v1550 = vunpack.c.h.b16 %v478
  %v1551 = vunpack.c.l.b16 %v479
  %v1552 = vunpack.c.h.b16 %v479
  %v1553 = vunpack.c.l.b16 %v480
  %v1554 = vunpack.c.h.b16 %v480
  %v1555 = vunpack.c.l.b16 %v481
  %v1556 = vunpack.c.h.b16 %v481
  %v1557 = vunpack.c.l.b16 %v482
  %v1558 = vunpack.c.h.b16 %v482
  %v1559 = vunpack.c.l.b16 %v483
  %v1560 = vunpack.c.l.b16 %v484
  %v1561 = vunpack.c.h.b16 %v484
  %v1562 = vunpack.c.l.b16 %v485
  %v1563 = vunpack.c.h.b16 %v485
  %v1564 = vunpack.c.l.b16 %v486
  %v1565 = vunpack.c.h.b16 %v486
  %v1566 = vunpack.c.l.b16 %v487
  %v1567 = vunpack.c.h.b16 %v487
  %v1568 = vunpack.c.l.b16 %v488
  %v1569 = vunpack.c.h.b16 %v488
  %v1570 = vunpack.c.l.b16 %v489
  %v1571 = vunpack.c.h.b16 %v489
  %v1572 = vunpack.c.l.b16 %v490
  %v1573 = vunpack.c.h.b16 %v490
  %v1574 = vunpack.c.l.b16 %v491
  %v1575 = vunpack.c.l.b16 %v492
  %v1576 = vunpack.c.h.b16 %v492
  %v1577 = vunpack.c.l.b16 %v493
  %v1578 = vunpack.c.h.b16 %v493
  %v1579 = vunpack.c.l.b16 %v494
  %v1580 = vunpack.c.h.b16 %v494
  %v1581 = vunpack.c.l.b16 %v495
  %v1582 = vunpack.c.h.b16 %v495
  %v1583 = vunpack.c.l.b16 %v496
  %v1584 = vunpack.c.h.b16 %v496
  %v1585 = vunpack.c.l.b16 %v497
  %v1586 = vunpack.c.h.b16 %v497
  %v1587 = vunpack.c.l.b16 %v498
  %v1588 = vunpack.c.h.b16 %v498
  %v1589 = vunpack.c.l.b16 %v499
  %v1590 = vunpack.c.l.b16 %v500
  %v1591 = vunpack.c.h.b16 %v500
  %v1592 = vunpack.c.l.b16 %v501
  %v1593 = vunpack.c.h.b16 %v501
  %v1594 = vunpack.c.l.b16 %v502
  %v1595 = vunpack.c.h.b16 %v502
  %v1596 = vunpack.c.l.b16 %v503
  %v1597 = vunpack.c.h.b16 %v503
  %v1598 = vunpack.c.l.b16 %v504
  %v1599 = vunpack.c.h.b16 %v504
  %v1600 = vunpack.c.l.b16 %v505
  %v1601 = vunpack.c.h.b16 %v505
  %v1602 = vunpack.c.l.b16 %v506
  %v1603 = vunpack.c.h.b16 %v506
  %v1604 = vunpack.c.l.b16 %v507
  %v1605 = vunpack.c.l.b16 %v508
  %v1606 = vunpack.c.h.b16 %v508
  %v1607 = vunpack.c.l.b16 %v509
  %v1608 = vunpack.c.h.b16 %v509
  %v1609 = vunpack.c.l.b16 %v510
  %v1610 = vunpack.c.h.b16 %v510
  %v1611 = vunpack.c.l.b16 %v511
  %v1612 = vunpack.c.h.b16 %v511
  %v1613 = vunpack.c.l.b16 %v512
  %v1614 = vunpack.c.h.b16 %v512
  %v1615 = vunpack.c.l.b16 %v513
  %v1616 = vunpack.c.h.b16 %v513
  %v1617 = vunpack.c.l.b16 %v514
  %v1618 = vunpack.c.h.b16 %v514
  %v1619 = vunpack.c.l.b16 %v515
  %v1620 = vpack.c.b16 %v915, %v900
  %v1621 = vpack.c.b16 %v916, %v901
  %v1622 = vpack.c.b16 %v917, %v902
  %v1623 = vpack.c.b16 %v918, %v903
  %v1624 = vpack.c.b16 %v919, %v904
  %v1625 = vpack.c.b16 %v920, %v905
  %v1626 = vpack.c.b16 %v921, %v906
  %v1627 = vpack.c.b16 %v922, %v907
  %v1628 = vpack.c.b16 %v923, %v908
  %v1629 = vpack.c.b16 %v924, %v909
  %v1630 = vpack.c.b16 %v925, %v910
  %v1631 = vpack.c.b16 %v926, %v911
  %v1632 = vpack.c.b16 %v927, %v912
  %v1633 = vpack.c.b16 %v928, %v913
  %v1634 = vpack.c.b16 %v929, %v914
  %v1635 = vpack.c.b16 %v945, %v930
  %v1636 = vpack.c.b16 %v946, %v931
  %v1637 = vpack.c.b16 %v947, %v932
  %v1638 = vpack.c.b16 %v948, %v933
  %v1639 = vpack.c.b16 %v949, %v934
  %v1640 = vpack.c.b16 %v950, %v935
  %v1641 = vpack.c.b16 %v951, %v936
  %v1642 = vpack.c.b16 %v952, %v937
  %v1643 = vpack.c.b16 %v953, %v938
  %v1644 = vpack.c.b16 %v954, %v939
  %v1645 = vpack.c.b16 %v955, %v940
  %v1646 = vpack.c.b16 %v956, %v941
  %v1647 = vpack.c.b16 %v957, %v942
  %v1648 = vpack.c.b16 %v958, %v943
  %v1649 = vpack.c.b16 %v959, %v944
  %v1650 = vpack.c.b16 %v975, %v960
  %v1651 = vpack.c.b16 %v976, %v961
  %v1652 = vpack.c.b16 %v977, %v962
  %v1653 = vpack.c.b16 %v978, %v963
  %v1654 = vpack.c.b16 %v979, %v964
  %v1655 = vpack.c.b16 %v980, %v965
  %v1656 = vpack.c.b16 %v981, %v966
  %v1657 = vpack.c.b16 %v982, %v967
  %v1658 = vpack.c.b16 %v983, %v968
  %v1659 = vpack.c.b16 %v984, %v969
  %v1660 = vpack.c.b16 %v985, %v970
  %v1661 = vpack.c.b16 %v986, %v971
  %v1662 = vpack.c.b16 %v987, %v972
  %v1663 = vpack.c.b16 %v988, %v973
  %v1664 = vpack.c.b16 %v989, %v974
  %v1665 = vpack.c.b16 %v1005, %v990
  %v1666 = vpack.c.b16 %v1006, %v991
  %v1667 = vpack.c.b16 %v1007, %v992
  %v1668 = vpack.c.b16 %v1008, %v993
  %v1669 = vpack.c.b16 %v1009, %v994
  %v1670 = vpack.c.b16 %v1010, %v995
  %v1671 = vpack.c.b16 %v1011, %v996
  %v1672 = vpack.c.b16 %v1012, %v997
  %v1673 = vpack.c.b16 %v1013, %v998
  %v1674 = vpack.c.b16 %v1014, %v999
  %v1675 = vpack.c.b16 %v1015, %v1000
  %v1676 = vpack.c.b16 %v1016, %v1001
  %v1677 = vpack.c.b16 %v1017, %v1002
  %v1678 = vpack.c.b16 %v1018, %v1003
  %v1679 = vpack.c.b16 %v1019, %v1004
  %v1680 = vpack.c.b16 %v1035, %v1020
  %v1681 = vpack.c.b16 %v1036, %v1021
  %v1682 = vpack.c.b16 %v1037, %v1022
  %v1683 = vpack.c.b16 %v1038, %v1023
  %v1684 = vpack.c.b16 %v1039, %v1024
  %v1685 = vpack.c.b16 %v1040, %v1025
  %v1686 = vpack.c.b16 %v1041, %v1026
  %v1687 = vpack.c.b16 %v1042, %v1027
  %v1688 = vpack.c.b16 %v1043, %v1028
  %v1689 = vpack.c.b16 %v1044, %v1029
  %v1690 = vpack.c.b16 %v1045, %v1030
  %v1691 = vpack.c.b16 %v1046, %v1031
  %v1692 = vpack.c.b16 %v1047, %v1032
  %v1693 = vpack.c.b16 %v1048, %v1033
  %v1694 = vpack.c.b16 %v1049, %v1034
  %v1695 = vpack.c.b16 %v1065, %v1050
  %v1696 = vpack.c.b16 %v1066, %v1051
  %v1697 = vpack.c.b16 %v1067, %v1052
  %v1698 = vpack.c.b16 %v1068, %v1053
  %v1699 = vpack.c.b16 %v1069, %v1054
  %v1700 = vpack.c.b16 %v1070, %v1055
  %v1701 = vpack.c.b16 %v1071, %v1056
  %v1702 = vpack.c.b16 %v1072, %v1057
  %v1703 = vpack.c.b16 %v1073, %v1058
  %v1704 = vpack.c.b16 %v1074, %v1059
  %v1705 = vpack.c.b16 %v1075, %v1060
  %v1706 = vpack.c.b16 %v1076, %v1061
  %v1707 = vpack.c.b16 %v1077, %v1062
  %v1708 = vpack.c.b16 %v1078, %v1063
  %v1709 = vpack.c.b16 %v1079, %v1064
  %v1710 = vpack.c.b16 %v1095, %v1080
  %v1711 = vpack.c.b16 %v1096, %v1081
  %v1712 = vpack.c.b16 %v1097, %v1082
  %v1713 = vpack.c.b16 %v1098, %v1083
  %v1714 = vpack.c.b16 %v1099, %v1084
  %v1715 = vpack.c.b16 %v1100, %v1085
  %v1716 = vpack.c.b16 %v1101, %v1086
  %v1717 = vpack.c.b16 %v1102, %v1087
  %v1718 = vpack.c.b16 %v1103, %v1088
  %v1719 = vpack.c.b16 %v1104, %v1089
  %v1720 = vpack.c.b16 %v1105, %v1090
  %v1721 = vpack.c.b16 %v1106, %v1091
  %v1722 = vpack.c.b16 %v1107, %v1092
  %v1723 = vpack.c.b16 %v1108, %v1093
  %v1724 = vpack.c.b16 %v1109, %v1094
  %v1725 = vpack.c.b16 %v1125, %v1110
  %v1726 = vpack.c.b16 %v1126, %v1111
  %v1727 = vpack.c.b16 %v1127, %v1112
  %v1728 = vpack.c.b16 %v1128, %v1113
  %v1729 = vpack.c.b16 %v1129, %v1114
  %v1730 = vpack.c.b16 %v1130, %v1115
  %v1731 = vpack.c.b16 %v1131, %v1116
  %v1732 = vpack.c.b16 %v1132, %v1117
  %v1733 = vpack.c.b16 %v1133, %v1118
  %v1734 = vpack.c.b16 %v1134, %v1119
  %v1735 = vpack.c.b16 %v1135, %v1120
  %v1736 = vpack.c.b16 %v1136, %v1121
  %v1737 = vpack.c.b16 %v1137, %v1122
  %v1738 = vpack.c.b16 %v1138, %v1123
  %v1739 = vpack.c.b16 %v1139, %v1124
  %v1740 = vpack.c.b16 %v1155, %v1140
  %v1741 = vpack.c.b16 %v1156, %v1141
  %v1742 = vpack.c.b16 %v1157, %v1142
  %v1743 = vpack.c.b16 %v1158, %v1143
  %v1744 = vpack.c.b16 %v1159, %v1144
  %v1745 = vpack.c.b16 %v1160, %v1145
  %v1746 = vpack.c.b16 %v1161, %v1146
  %v1747 = vpack.c.b16 %v1162, %v1147
  %v1748 = vpack.c.b16 %v1163, %v1148
  %v1749 = vpack.c.b16 %v1164, %v1149
  %v1750 = vpack.c.b16 %v1165, %v1150
  %v1751 = vpack.c.b16 %v1166, %v1151
  %v1752 = vpack.c.b16 %v1167, %v1152
  %v1753 = vpack.c.b16 %v1168, %v1153
  %v1754 = vpack.c.b16 %v1169, %v1154
  %v1755 = vpack.c.b16 %v1185, %v1170
  %v1756 = vpack.c.b16 %v1186, %v1171
  %v1757 = vpack.c.b16 %v1187, %v1172
  %v1758 = vpack.c.b16 %v1188, %v1173
  %v1759 = vpack.c.b16 %v1189, %v1174
  %v1760 = vpack.c.b16 %v1190, %v1175
  %v1761 = vpack.c.b16 %v1191, %v1176
  %v1762 = vpack.c.b16 %v1192, %v1177
  %v1763 = vpack.c.b16 %v1193, %v1178
  %v1764 = vpack.c.b16 %v1194, %v1179
  %v1765 = vpack.c.b16 %v1195, %v1180
  %v1766 = vpack.c.b16 %v1196, %v1181
  %v1767 = vpack.c.b16 %v1197, %v1182
  %v1768 = vpack.c.b16 %v1198, %v1183
  %v1769 = vpack.c.b16 %v1199, %v1184
  %v1770 = vpack.c.b16 %v1215, %v1200
  %v1771 = vpack.c.b16 %v1216, %v1201
  %v1772 = vpack.c.b16 %v1217, %v1202
  %v1773 = vpack.c.b16 %v1218, %v1203
  %v1774 = vpack.c.b16 %v1219, %v1204
  %v1775 = vpack.c.b16 %v1220, %v1205
  %v1776 = vpack.c.b16 %v1221, %v1206
  %v1777 = vpack.c.b16 %v1222, %v1207
  %v1778 = vpack.c.b16 %v1223, %v1208
  %v1779 = vpack.c.b16 %v1224, %v1209
  %v1780 = vpack.c.b16 %v1225, %v1210
  %v1781 = vpack.c.b16 %v1226, %v1211
  %v1782 = vpack.c.b16 %v1227, %v1212
  %v1783 = vpack.c.b16 %v1228, %v1213
  %v1784 = vpack.c.b16 %v1229, %v1214
  %v1785 = vpack.c.b16 %v1245, %v1230
  %v1786 = vpack.c.b16 %v1246, %v1231
  %v1787 = vpack.c.b16 %v1247, %v1232
  %v1788 = vpack.c.b16 %v1248, %v1233
  %v1789 = vpack.c.b16 %v1249, %v1234
  %v1790 = vpack.c.b16 %v1250, %v1235
  %v1791 = vpack.c.b16 %v1251, %v1236
  %v1792 = vpack.c.b16 %v1252, %v1237
  %v1793 = vpack.c.b16 %v1253, %v1238
  %v1794 = vpack.c.b16 %v1254, %v1239
  %v1795 = vpack.c.b16 %v1255, %v1240
  %v1796 = vpack.c.b16 %v1256, %v1241
  %v1797 = vpack.c.b16 %v1257, %v1242
  %v1798 = vpack.c.b16 %v1258, %v1243
  %v1799 = vpack.c.b16 %v1259, %v1244
  %v1800 = vpack.c.b16 %v1275, %v1260
  %v1801 = vpack.c.b16 %v1276, %v1261
  %v1802 = vpack.c.b16 %v1277, %v1262
  %v1803 = vpack.c.b16 %v1278, %v1263
  %v1804 = vpack.c.b16 %v1279, %v1264
  %v1805 = vpack.c.b16 %v1280, %v1265
  %v1806 = vpack.c.b16 %v1281, %v1266
  %v1807 = vpack.c.b16 %v1282, %v1267
  %v1808 = vpack.c.b16 %v1283, %v1268
  %v1809 = vpack.c.b16 %v1284, %v1269
  %v1810 = vpack.c.b16 %v1285, %v1270
  %v1811 = vpack.c.b16 %v1286, %v1271
  %v1812 = vpack.c.b16 %v1287, %v1272
  %v1813 = vpack.c.b16 %v1288, %v1273
  %v1814 = vpack.c.b16 %v1289, %v1274
  %v1815 = vpack.c.b16 %v1305, %v1290
  %v1816 = vpack.c.b16 %v1306, %v1291
  %v1817 = vpack.c.b16 %v1307, %v1292
  %v1818 = vpack.c.b16 %v1308, %v1293
  %v1819 = vpack.c.b16 %v1309, %v1294
  %v1820 = vpack.c.b16 %v1310, %v1295
  %v1821 = vpack.c.b16 %v1311, %v1296
  %v1822 = vpack.c.b16 %v1312, %v1297
  %v1823 = vpack.c.b16 %v1313, %v1298
  %v1824 = vpack.c.b16 %v1314, %v1299
  %v1825 = vpack.c.b16 %v1315, %v1300
  %v1826 = vpack.c.b16 %v1316, %v1301
  %v1827 = vpack.c.b16 %v1317, %v1302
  %v1828 = vpack.c.b16 %v1318, %v1303
  %v1829 = vpack.c.b16 %v1319, %v1304
  %v1830 = vpack.c.b16 %v1335, %v1320
  %v1831 = vpack.c.b16 %v1336, %v1321
  %v1832 = vpack.c.b16 %v1337, %v1322
  %v1833 = vpack.c.b16 %v1338, %v1323
  %v1834 = vpack.c.b16 %v1339, %v1324
  %v1835 = vpack.c.b16 %v1340, %v1325
  %v1836 = vpack.c.b16 %v1341, %v1326
  %v1837 = vpack.c.b16 %v1342, %v1327
  %v1838 = vpack.c.b16 %v1343, %v1328
  %v1839 = vpack.c.b16 %v1344, %v1329
  %v1840 = vpack.c.b16 %v1345, %v1330
  %v1841 = vpack.c.b16 %v1346, %v1331
  %v1842 = vpack.c.b16 %v1347, %v1332
  %v1843 = vpack.c.b16 %v1348, %v1333
  %v1844 = vpack.c.b16 %v1349, %v1334
  %v1845 = vpack.c.b16 %v1365, %v1350
  %v1846 = vpack.c.b16 %v1366, %v1351
  %v1847 = vpack.c.b16 %v1367, %v1352
  %v1848 = vpack.c.b16 %v1368, %v1353
  %v1849 = vpack.c.b16 %v1369, %v1354
  %v1850 = vpack.c.b16 %v1370, %v1355
  %v1851 = vpack.c.b16 %v1371, %v1356
  %v1852 = vpack.c.b16 %v1372, %v1357
  %v1853 = vpack.c.b16 %v1373, %v1358
  %v1854 = vpack.c.b16 %v1374, %v1359
  %v1855 = vpack.c.b16 %v1375, %v1360
  %v1856 = vpack.c.b16 %v1376, %v1361
  %v1857 = vpack.c.b16 %v1377, %v1362
  %v1858 = vpack.c.b16 %v1378, %v1363
  %v1859 = vpack.c.b16 %v1379, %v1364
  %v1860 = vpack.c.b16 %v1395, %v1380
  %v1861 = vpack.c.b16 %v1396, %v1381
  %v1862 = vpack.c.b16 %v1397, %v1382
  %v1863 = vpack.c.b16 %v1398, %v1383
  %v1864 = vpack.c.b16 %v1399, %v1384
  %v1865 = vpack.c.b16 %v1400, %v1385
  %v1866 = vpack.c.b16 %v1401, %v1386
  %v1867 = vpack.c.b16 %v1402, %v1387
  %v1868 = vpack.c.b16 %v1403, %v1388
  %v1869 = vpack.c.b16 %v1404, %v1389
  %v1870 = vpack.c.b16 %v1405, %v1390
  %v1871 = vpack.c.b16 %v1406, %v1391
  %v1872 = vpack.c.b16 %v1407, %v1392
  %v1873 = vpack.c.b16 %v1408, %v1393
  %v1874 = vpack.c.b16 %v1409, %v1394
  %v1875 = vpack.c.b16 %v1425, %v1410
  %v1876 = vpack.c.b16 %v1426, %v1411
  %v1877 = vpack.c.b16 %v1427, %v1412
  %v1878 = vpack.c.b16 %v1428, %v1413
  %v1879 = vpack.c.b16 %v1429, %v1414
  %v1880 = vpack.c.b16 %v1430, %v1415
  %v1881 = vpack.c.b16 %v1431, %v1416
  %v1882 = vpack.c.b16 %v1432, %v1417
  %v1883 = vpack.c.b16 %v1433, %v1418
  %v1884 = vpack.c.b16 %v1434, %v1419
  %v1885 = vpack.c.b16 %v1435, %v1420
  %v1886 = vpack.c.b16 %v1436, %v1421
  %v1887 = vpack.c.b16 %v1437, %v1422
  %v1888 = vpack.c.b16 %v1438, %v1423
  %v1889 = vpack.c.b16 %v1439, %v1424
  %v1890 = vpack.c.b16 %v1455, %v1440
  %v1891 = vpack.c.b16 %v1456, %v1441
  %v1892 = vpack.c.b16 %v1457, %v1442
  %v1893 = vpack.c.b16 %v1458, %v1443
  %v1894 = vpack.c.b16 %v1459, %v1444
  %v1895 = vpack.c.b16 %v1460, %v1445
  %v1896 = vpack.c.b16 %v1461, %v1446
  %v1897 = vpack.c.b16 %v1462, %v1447
  %v1898 = vpack.c.b16 %v1463, %v1448
  %v1899 = vpack.c.b16 %v1464, %v1449
  %v1900 = vpack.c.b16 %v1465, %v1450
  %v1901 = vpack.c.b16 %v1466, %v1451
  %v1902 = vpack.c.b16 %v1467, %v1452
  %v1903 = vpack.c.b16 %v1468, %v1453
  %v1904 = vpack.c.b16 %v1469, %v1454
  %v1905 = vpack.c.b16 %v1485, %v1470
  %v1906 = vpack.c.b16 %v1486, %v1471
  %v1907 = vpack.c.b16 %v1487, %v1472
  %v1908 = vpack.c.b16 %v1488, %v1473
  %v1909 = vpack.c.b16 %v1489, %v1474
  %v1910 = vpack.c.b16 %v1490, %v1475
  %v1911 = vpack.c.b16 %v1491, %v1476
  %v1912 = vpack.c.b16 %v1492, %v1477
  %v1913 = vpack.c.b16 %v1493, %v1478
  %v1914 = vpack.c.b16 %v1494, %v1479
  %v1915 = vpack.c.b16 %v1495, %v1480
  %v1916 = vpack.c.b16 %v1496, %v1481
  %v1917 = vpack.c.b16 %v1497, %v1482
  %v1918 = vpack.c.b16 %v1498, %v1483
  %v1919 = vpack.c.b16 %v1499, %v1484
  %v1920 = vpack.c.b16 %v1515, %v1500
  %v1921 = vpack.c.b16 %v1516, %v1501
  %v1922 = vpack.c.b16 %v1517, %v1502
  %v1923 = vpack.c.b16 %v1518, %v1503
  %v1924 = vpack.c.b16 %v1519, %v1504
  %v1925 = vpack.c.b16 %v1520, %v1505
  %v1926 = vpack.c.b16 %v1521, %v1506
  %v1927 = vpack.c.b16 %v1522, %v1507
  %v1928 = vpack.c.b16 %v1523, %v1508
  %v1929 = vpack.c.b16 %v1524, %v1509
  %v1930 = vpack.c.b16 %v1525, %v1510
  %v1931 = vpack.c.b16 %v1526, %v1511
  %v1932 = vpack.c.b16 %v1527, %v1512
  %v1933 = vpack.c.b16 %v1528, %v1513
  %v1934 = vpack.c.b16 %v1529, %v1514
  %v1935 = vpack.c.b16 %v1545, %v1530
  %v1936 = vpack.c.b16 %v1546, %v1531
  %v1937 = vpack.c.b16 %v1547, %v1532
  %v1938 = vpack.c.b16 %v1548, %v1533
  %v1939 = vpack.c.b16 %v1549, %v1534
  %v1940 = vpack.c.b16 %v1550, %v1535
  %v1941 = vpack.c.b16 %v1551, %v1536
  %v1942 = vpack.c.b16 %v1552, %v1537
  %v1943 = vpack.c.b16 %v1553, %v1538
  %v1944 = vpack.c.b16 %v1554, %v1539
  %v1945 = vpack.c.b16 %v1555, %v1540
  %v1946 = vpack.c.b16 %v1556, %v1541
  %v1947 = vpack.c.b16 %v1557, %v1542
  %v1948 = vpack.c.b16 %v1558, %v1543
  %v1949 = vpack.c.b16 %v1559, %v1544
  %v1950 = vpack.c.b16 %v1575, %v1560
  %v1951 = vpack.c.b16 %v1576, %v1561
  %v1952 = vpack.c.b16 %v1577, %v1562
  %v1953 = vpack.c.b16 %v1578, %v1563
  %v1954 = vpack.c.b16 %v1579, %v1564
  %v1955 = vpack.c.b16 %v1580, %v1565
  %v1956 = vpack.c.b16 %v1581, %v1566
  %v1957 = vpack.c.b16 %v1582, %v1567
  %v1958 = vpack.c.b16 %v1583, %v1568
  %v1959 = vpack.c.b16 %v1584, %v1569
  %v1960 = vpack.c.b16 %v1585, %v1570
  %v1961 = vpack.c.b16 %v1586, %v1571
  %v1962 = vpack.c.b16 %v1587, %v1572
  %v1963 = vpack.c.b16 %v1588, %v1573
  %v1964 = vpack.c.b16 %v1589, %v1574
  %v1965 = vpack.c.b16 %v1605, %v1590
  %v1966 = vpack.c.b16 %v1606, %v1591
  %v1967 = vpack.c.b16 %v1607, %v1592
  %v1968 = vpack.c.b16 %v1608, %v1593
  %v1969 = vpack.c.b16 %v1609, %v1594
  %v1970 = vpack.c.b16 %v1610, %v1595
  %v1971 = vpack.c.b16 %v1611, %v1596
  %v1972 = vpack.c.b16 %v1612, %v1597
  %v1973 = vpack.c.b16 %v1613, %v1598
  %v1974 = vpack.c.b16 %v1614, %v1599
  %v1975 = vpack.c.b16 %v1615, %v1600
  %v1976 = vpack.c.b16 %v1616, %v1601
  %v1977 = vpack.c.b16 %v1617, %v1602
  %v1978 = vpack.c.b16 %v1618, %v1603
  %v1979 = vpack.c.b16 %v1619, %v1604
  %2340 = vmatprep.subr.bf16.mxu0 %v1726
  %2341 = vmatpush1.bf16.msra.mxu0 %v1725
  %2342 = vmatprep.subr.bf16.mxu0 %v1711
  %2343 = vmatpush1.bf16.msra.mxu0 %v1710
  %2344 = vmatprep.subr.bf16.mxu0 %v1696
  %2345 = vmatpush1.bf16.msra.mxu0 %v1695
  %2346 = vmatprep.subr.bf16.mxu0 %v1681
  %2347 = vmatpush1.bf16.msra.mxu0 %v1680
  %2348 = vmatprep.subr.bf16.mxu0 %v1666
  %2349 = vmatpush1.bf16.msra.mxu0 %v1665
  %2350 = vmatprep.subr.bf16.mxu0 %v1651
  %2351 = vmatpush1.bf16.msra.mxu0 %v1650
  %2352 = vmatprep.subr.bf16.mxu0 %v1636
  %2353 = vmatpush1.bf16.msra.mxu0 %v1635
  %2354 = vmatprep.subr.bf16.mxu0 %v1621
  %2355 = vmatpush1.bf16.msra.mxu0 %v1620
  %2356 = vmatprep.subr.bf16.mxu0 %v1846
  %2357 = vmatpush2.bf16.msra.mxu0 %v1845
  %2358 = vmatprep.subr.bf16.mxu0 %v1831
  %2359 = vmatpush2.bf16.msra.mxu0 %v1830
  %2360 = vmatprep.subr.bf16.mxu0 %v1816
  %2361 = vmatpush2.bf16.msra.mxu0 %v1815
  %2362 = vmatprep.subr.bf16.mxu0 %v1801
  %2363 = vmatpush2.bf16.msra.mxu0 %v1800
  %2364 = vmatprep.subr.bf16.mxu0 %v1786
  %2365 = vmatpush2.bf16.msra.mxu0 %v1785
  %2366 = vmatprep.subr.bf16.mxu0 %v1771
  %2367 = vmatpush2.bf16.msra.mxu0 %v1770
  %2368 = vmatprep.subr.bf16.mxu0 %v1756
  %2369 = vmatpush2.bf16.msra.mxu0 %v1755
  %2370 = vmatprep.subr.bf16.mxu0 %v1741
  %2371 = vmatpush2.bf16.msra.mxu0 %v1740
  %2372 = vmatprep.mubr.bf16.mxu0 %v74
  %2373 = vmatmul.mubr.bf16.gmra.mxu0 %v124
  %v2374 = vpop.f32.mrf.mxu0
  %v2375 = vadd.f32 0.0, %v2374
  %v2376 = vpop.f32.mrf.mxu0
  %v2377 = vadd.f32 0.0, %v2376
  %v2378 = vpop.f32.mrf.mxu0
  %v2379 = vadd.f32 0.0, %v2378
  %v2380 = vpop.f32.mrf.mxu0
  %v2381 = vadd.f32 0.0, %v2380
  %2382 = vmatprep.mubr.bf16.mxu0 %v75
  %2383 = vmatmul.mubr.bf16.gmra.mxu0 %v125
  %v2384 = vpop.f32.mrf.mxu0
  %v2385 = vadd.f32 0.0, %v2384
  %v2386 = vpop.f32.mrf.mxu0
  %v2387 = vadd.f32 0.0, %v2386
  %v2388 = vpop.f32.mrf.mxu0
  %v2389 = vadd.f32 0.0, %v2388
  %v2390 = vpop.f32.mrf.mxu0
  %v2391 = vadd.f32 0.0, %v2390
  %2392 = vmatprep.mubr.bf16.mxu0 %v76
  %2393 = vmatmul.mubr.bf16.gmra.mxu0 %v126
  %v2394 = vpop.f32.mrf.mxu0
  %v2395 = vadd.f32 0.0, %v2394
  %v2396 = vpop.f32.mrf.mxu0
  %v2397 = vadd.f32 0.0, %v2396
  %v2398 = vpop.f32.mrf.mxu0
  %v2399 = vadd.f32 0.0, %v2398
  %v2400 = vpop.f32.mrf.mxu0
  %v2401 = vadd.f32 0.0, %v2400
  %2402 = vmatprep.mubr.bf16.mxu0 %v77
  %2403 = vmatmul.mubr.bf16.gmra.mxu0 %v127
  %v2404 = vpop.f32.mrf.mxu0
  %v2405 = vadd.f32 0.0, %v2404
  %v2406 = vpop.f32.mrf.mxu0
  %v2407 = vadd.f32 0.0, %v2406
  %v2408 = vpop.f32.mrf.mxu0
  %v2409 = vadd.f32 0.0, %v2408
  %v2410 = vpop.f32.mrf.mxu0
  %v2411 = vadd.f32 0.0, %v2410
  %2412 = vdwg.mxu0
  %2413 = vmatprep.subr.bf16.mxu0 %v1966
  %2414 = vmatpush1.bf16.msra.mxu0 %v1965
  %2415 = vmatprep.subr.bf16.mxu0 %v1951
  %2416 = vmatpush1.bf16.msra.mxu0 %v1950
  %2417 = vmatprep.subr.bf16.mxu0 %v1936
  %2418 = vmatpush1.bf16.msra.mxu0 %v1935
  %2419 = vmatprep.subr.bf16.mxu0 %v1921
  %2420 = vmatpush1.bf16.msra.mxu0 %v1920
  %2421 = vmatprep.subr.bf16.mxu0 %v1906
  %2422 = vmatpush1.bf16.msra.mxu0 %v1905
  %2423 = vmatprep.subr.bf16.mxu0 %v1891
  %2424 = vmatpush1.bf16.msra.mxu0 %v1890
  %2425 = vmatprep.subr.bf16.mxu0 %v1876
  %2426 = vmatpush1.bf16.msra.mxu0 %v1875
  %2427 = vmatprep.subr.bf16.mxu0 %v1861
  %2428 = vmatpush1.bf16.msra.mxu0 %v1860
  %2429 = vmatprep.subr.bf16.mxu0 0
  %2430 = vmatpush2.bf16.msra.mxu0 0
  %2431 = vmatprep.subr.bf16.mxu0 0
  %2432 = vmatpush2.bf16.msra.mxu0 0
  %2433 = vmatprep.subr.bf16.mxu0 0
  %2434 = vmatpush2.bf16.msra.mxu0 0
  %2435 = vmatprep.subr.bf16.mxu0 0
  %2436 = vmatpush2.bf16.msra.mxu0 0
  %2437 = vmatprep.subr.bf16.mxu0 0
  %2438 = vmatpush2.bf16.msra.mxu0 0
  %2439 = vmatprep.subr.bf16.mxu0 0
  %2440 = vmatpush2.bf16.msra.mxu0 0
  %2441 = vmatprep.subr.bf16.mxu0 0
  %2442 = vmatpush2.bf16.msra.mxu0 0
  %2443 = vmatprep.subr.bf16.mxu0 0
  %2444 = vmatpush2.bf16.msra.mxu0 0
  %2445 = vmatprep.mubr.bf16.mxu0 0
  %2446 = vmatmul.mubr.bf16.gmra.mxu0 %v104
  %v2447 = vpop.f32.mrf.mxu0
  %v2448 = vadd.f32 %v2375, %v2447
  %v2449 = vpop.f32.mrf.mxu0
  %v2450 = vadd.f32 %v2377, %v2449
  %v2451 = vpop.f32.mrf.mxu0
  %v2452 = vadd.f32 %v2379, %v2451
  %v2453 = vpop.f32.mrf.mxu0
  %v2454 = vadd.f32 %v2381, %v2453
  %2455 = vmatprep.mubr.bf16.mxu0 0
  %2456 = vmatmul.mubr.bf16.gmra.mxu0 %v105
  %v2457 = vpop.f32.mrf.mxu0
  %v2458 = vadd.f32 %v2385, %v2457
  %v2459 = vpop.f32.mrf.mxu0
  %v2460 = vadd.f32 %v2387, %v2459
  %v2461 = vpop.f32.mrf.mxu0
  %v2462 = vadd.f32 %v2389, %v2461
  %v2463 = vpop.f32.mrf.mxu0
  %v2464 = vadd.f32 %v2391, %v2463
  %2465 = vmatprep.mubr.bf16.mxu0 0
  %2466 = vmatmul.mubr.bf16.gmra.mxu0 %v106
  %v2467 = vpop.f32.mrf.mxu0
  %v2468 = vadd.f32 %v2395, %v2467
  %v2469 = vpop.f32.mrf.mxu0
  %v2470 = vadd.f32 %v2397, %v2469
  %v2471 = vpop.f32.mrf.mxu0
  %v2472 = vadd.f32 %v2399, %v2471
  %v2473 = vpop.f32.mrf.mxu0
  %v2474 = vadd.f32 %v2401, %v2473
  %2475 = vmatprep.mubr.bf16.mxu0 0
  %2476 = vmatmul.mubr.bf16.gmra.mxu0 %v107
  %v2477 = vpop.f32.mrf.mxu0
  %v2478 = vadd.f32 %v2405, %v2477
  %v2479 = vpop.f32.mrf.mxu0
  %v2480 = vadd.f32 %v2407, %v2479
  %v2481 = vpop.f32.mrf.mxu0
  %v2482 = vadd.f32 %v2409, %v2481
  %v2483 = vpop.f32.mrf.mxu0
  %v2484 = vadd.f32 %v2411, %v2483
  %2485 = vdwg.mxu0
  %2486 = vmatprep.subr.bf16.mxu0 %v1728
  %2487 = vmatpush1.bf16.msra.mxu0 %v1727
  %2488 = vmatprep.subr.bf16.mxu0 %v1713
  %2489 = vmatpush1.bf16.msra.mxu0 %v1712
  %2490 = vmatprep.subr.bf16.mxu0 %v1698
  %2491 = vmatpush1.bf16.msra.mxu0 %v1697
  %2492 = vmatprep.subr.bf16.mxu0 %v1683
  %2493 = vmatpush1.bf16.msra.mxu0 %v1682
  %2494 = vmatprep.subr.bf16.mxu0 %v1668
  %2495 = vmatpush1.bf16.msra.mxu0 %v1667
  %2496 = vmatprep.subr.bf16.mxu0 %v1653
  %2497 = vmatpush1.bf16.msra.mxu0 %v1652
  %2498 = vmatprep.subr.bf16.mxu0 %v1638
  %2499 = vmatpush1.bf16.msra.mxu0 %v1637
  %2500 = vmatprep.subr.bf16.mxu0 %v1623
  %2501 = vmatpush1.bf16.msra.mxu0 %v1622
  %2502 = vmatprep.subr.bf16.mxu0 %v1848
  %2503 = vmatpush2.bf16.msra.mxu0 %v1847
  %2504 = vmatprep.subr.bf16.mxu0 %v1833
  %2505 = vmatpush2.bf16.msra.mxu0 %v1832
  %2506 = vmatprep.subr.bf16.mxu0 %v1818
  %2507 = vmatpush2.bf16.msra.mxu0 %v1817
  %2508 = vmatprep.subr.bf16.mxu0 %v1803
  %2509 = vmatpush2.bf16.msra.mxu0 %v1802
  %2510 = vmatprep.subr.bf16.mxu0 %v1788
  %2511 = vmatpush2.bf16.msra.mxu0 %v1787
  %2512 = vmatprep.subr.bf16.mxu0 %v1773
  %2513 = vmatpush2.bf16.msra.mxu0 %v1772
  %2514 = vmatprep.subr.bf16.mxu0 %v1758
  %2515 = vmatpush2.bf16.msra.mxu0 %v1757
  %2516 = vmatprep.subr.bf16.mxu0 %v1743
  %2517 = vmatpush2.bf16.msra.mxu0 %v1742
  %2518 = vmatprep.mubr.bf16.mxu0 %v74
  %2519 = vmatmul.mubr.bf16.gmra.mxu0 %v124
  %v2520 = vpop.f32.mrf.mxu0
  %v2521 = vadd.f32 0.0, %v2520
  %v2522 = vpop.f32.mrf.mxu0
  %v2523 = vadd.f32 0.0, %v2522
  %v2524 = vpop.f32.mrf.mxu0
  %v2525 = vadd.f32 0.0, %v2524
  %v2526 = vpop.f32.mrf.mxu0
  %v2527 = vadd.f32 0.0, %v2526
  %2528 = vmatprep.mubr.bf16.mxu0 %v75
  %2529 = vmatmul.mubr.bf16.gmra.mxu0 %v125
  %v2530 = vpop.f32.mrf.mxu0
  %v2531 = vadd.f32 0.0, %v2530
  %v2532 = vpop.f32.mrf.mxu0
  %v2533 = vadd.f32 0.0, %v2532
  %v2534 = vpop.f32.mrf.mxu0
  %v2535 = vadd.f32 0.0, %v2534
  %v2536 = vpop.f32.mrf.mxu0
  %v2537 = vadd.f32 0.0, %v2536
  %2538 = vmatprep.mubr.bf16.mxu0 %v76
  %2539 = vmatmul.mubr.bf16.gmra.mxu0 %v126
  %v2540 = vpop.f32.mrf.mxu0
  %v2541 = vadd.f32 0.0, %v2540
  %v2542 = vpop.f32.mrf.mxu0
  %v2543 = vadd.f32 0.0, %v2542
  %v2544 = vpop.f32.mrf.mxu0
  %v2545 = vadd.f32 0.0, %v2544
  %v2546 = vpop.f32.mrf.mxu0
  %v2547 = vadd.f32 0.0, %v2546
  %2548 = vmatprep.mubr.bf16.mxu0 %v77
  %2549 = vmatmul.mubr.bf16.gmra.mxu0 %v127
  %v2550 = vpop.f32.mrf.mxu0
  %v2551 = vadd.f32 0.0, %v2550
  %v2552 = vpop.f32.mrf.mxu0
  %v2553 = vadd.f32 0.0, %v2552
  %v2554 = vpop.f32.mrf.mxu0
  %v2555 = vadd.f32 0.0, %v2554
  %v2556 = vpop.f32.mrf.mxu0
  %v2557 = vadd.f32 0.0, %v2556
  %2558 = vdwg.mxu0
  %2559 = vmatprep.subr.bf16.mxu0 %v1968
  %2560 = vmatpush1.bf16.msra.mxu0 %v1967
  %2561 = vmatprep.subr.bf16.mxu0 %v1953
  %2562 = vmatpush1.bf16.msra.mxu0 %v1952
  %2563 = vmatprep.subr.bf16.mxu0 %v1938
  %2564 = vmatpush1.bf16.msra.mxu0 %v1937
  %2565 = vmatprep.subr.bf16.mxu0 %v1923
  %2566 = vmatpush1.bf16.msra.mxu0 %v1922
  %2567 = vmatprep.subr.bf16.mxu0 %v1908
  %2568 = vmatpush1.bf16.msra.mxu0 %v1907
  %2569 = vmatprep.subr.bf16.mxu0 %v1893
  %2570 = vmatpush1.bf16.msra.mxu0 %v1892
  %2571 = vmatprep.subr.bf16.mxu0 %v1878
  %2572 = vmatpush1.bf16.msra.mxu0 %v1877
  %2573 = vmatprep.subr.bf16.mxu0 %v1863
  %2574 = vmatpush1.bf16.msra.mxu0 %v1862
  %2575 = vmatprep.subr.bf16.mxu0 0
  %2576 = vmatpush2.bf16.msra.mxu0 0
  %2577 = vmatprep.subr.bf16.mxu0 0
  %2578 = vmatpush2.bf16.msra.mxu0 0
  %2579 = vmatprep.subr.bf16.mxu0 0
  %2580 = vmatpush2.bf16.msra.mxu0 0
  %2581 = vmatprep.subr.bf16.mxu0 0
  %2582 = vmatpush2.bf16.msra.mxu0 0
  %2583 = vmatprep.subr.bf16.mxu0 0
  %2584 = vmatpush2.bf16.msra.mxu0 0
  %2585 = vmatprep.subr.bf16.mxu0 0
  %2586 = vmatpush2.bf16.msra.mxu0 0
  %2587 = vmatprep.subr.bf16.mxu0 0
  %2588 = vmatpush2.bf16.msra.mxu0 0
  %2589 = vmatprep.subr.bf16.mxu0 0
  %2590 = vmatpush2.bf16.msra.mxu0 0
  %2591 = vmatprep.mubr.bf16.mxu0 0
  %2592 = vmatmul.mubr.bf16.gmra.mxu0 %v104
  %v2593 = vpop.f32.mrf.mxu0
  %v2594 = vadd.f32 %v2521, %v2593
  %v2595 = vpop.f32.mrf.mxu0
  %v2596 = vadd.f32 %v2523, %v2595
  %v2597 = vpop.f32.mrf.mxu0
  %v2598 = vadd.f32 %v2525, %v2597
  %v2599 = vpop.f32.mrf.mxu0
  %v2600 = vadd.f32 %v2527, %v2599
  %2601 = vmatprep.mubr.bf16.mxu0 0
  %2602 = vmatmul.mubr.bf16.gmra.mxu0 %v105
  %v2603 = vpop.f32.mrf.mxu0
  %v2604 = vadd.f32 %v2531, %v2603
  %v2605 = vpop.f32.mrf.mxu0
  %v2606 = vadd.f32 %v2533, %v2605
  %v2607 = vpop.f32.mrf.mxu0
  %v2608 = vadd.f32 %v2535, %v2607
  %v2609 = vpop.f32.mrf.mxu0
  %v2610 = vadd.f32 %v2537, %v2609
  %2611 = vmatprep.mubr.bf16.mxu0 0
  %2612 = vmatmul.mubr.bf16.gmra.mxu0 %v106
  %v2613 = vpop.f32.mrf.mxu0
  %v2614 = vadd.f32 %v2541, %v2613
  %v2615 = vpop.f32.mrf.mxu0
  %v2616 = vadd.f32 %v2543, %v2615
  %v2617 = vpop.f32.mrf.mxu0
  %v2618 = vadd.f32 %v2545, %v2617
  %v2619 = vpop.f32.mrf.mxu0
  %v2620 = vadd.f32 %v2547, %v2619
  %2621 = vmatprep.mubr.bf16.mxu0 0
  %2622 = vmatmul.mubr.bf16.gmra.mxu0 %v107
  %v2623 = vpop.f32.mrf.mxu0
  %v2624 = vadd.f32 %v2551, %v2623
  %v2625 = vpop.f32.mrf.mxu0
  %v2626 = vadd.f32 %v2553, %v2625
  %v2627 = vpop.f32.mrf.mxu0
  %v2628 = vadd.f32 %v2555, %v2627
  %v2629 = vpop.f32.mrf.mxu0
  %v2630 = vadd.f32 %v2557, %v2629
  %2631 = vdwg.mxu0
  %2632 = vmatprep.subr.bf16.mxu0 %v1730
  %2633 = vmatpush1.bf16.msra.mxu0 %v1729
  %2634 = vmatprep.subr.bf16.mxu0 %v1715
  %2635 = vmatpush1.bf16.msra.mxu0 %v1714
  %2636 = vmatprep.subr.bf16.mxu0 %v1700
  %2637 = vmatpush1.bf16.msra.mxu0 %v1699
  %2638 = vmatprep.subr.bf16.mxu0 %v1685
  %2639 = vmatpush1.bf16.msra.mxu0 %v1684
  %2640 = vmatprep.subr.bf16.mxu0 %v1670
  %2641 = vmatpush1.bf16.msra.mxu0 %v1669
  %2642 = vmatprep.subr.bf16.mxu0 %v1655
  %2643 = vmatpush1.bf16.msra.mxu0 %v1654
  %2644 = vmatprep.subr.bf16.mxu0 %v1640
  %2645 = vmatpush1.bf16.msra.mxu0 %v1639
  %2646 = vmatprep.subr.bf16.mxu0 %v1625
  %2647 = vmatpush1.bf16.msra.mxu0 %v1624
  %2648 = vmatprep.subr.bf16.mxu0 %v1850
  %2649 = vmatpush2.bf16.msra.mxu0 %v1849
  %2650 = vmatprep.subr.bf16.mxu0 %v1835
  %2651 = vmatpush2.bf16.msra.mxu0 %v1834
  %2652 = vmatprep.subr.bf16.mxu0 %v1820
  %2653 = vmatpush2.bf16.msra.mxu0 %v1819
  %2654 = vmatprep.subr.bf16.mxu0 %v1805
  %2655 = vmatpush2.bf16.msra.mxu0 %v1804
  %2656 = vmatprep.subr.bf16.mxu0 %v1790
  %2657 = vmatpush2.bf16.msra.mxu0 %v1789
  %2658 = vmatprep.subr.bf16.mxu0 %v1775
  %2659 = vmatpush2.bf16.msra.mxu0 %v1774
  %2660 = vmatprep.subr.bf16.mxu0 %v1760
  %2661 = vmatpush2.bf16.msra.mxu0 %v1759
  %2662 = vmatprep.subr.bf16.mxu0 %v1745
  %2663 = vmatpush2.bf16.msra.mxu0 %v1744
  %2664 = vmatprep.mubr.bf16.mxu0 %v74
  %2665 = vmatmul.mubr.bf16.gmra.mxu0 %v124
  %v2666 = vpop.f32.mrf.mxu0
  %v2667 = vadd.f32 0.0, %v2666
  %v2668 = vpop.f32.mrf.mxu0
  %v2669 = vadd.f32 0.0, %v2668
  %v2670 = vpop.f32.mrf.mxu0
  %v2671 = vadd.f32 0.0, %v2670
  %v2672 = vpop.f32.mrf.mxu0
  %v2673 = vadd.f32 0.0, %v2672
  %2674 = vmatprep.mubr.bf16.mxu0 %v75
  %2675 = vmatmul.mubr.bf16.gmra.mxu0 %v125
  %v2676 = vpop.f32.mrf.mxu0
  %v2677 = vadd.f32 0.0, %v2676
  %v2678 = vpop.f32.mrf.mxu0
  %v2679 = vadd.f32 0.0, %v2678
  %v2680 = vpop.f32.mrf.mxu0
  %v2681 = vadd.f32 0.0, %v2680
  %v2682 = vpop.f32.mrf.mxu0
  %v2683 = vadd.f32 0.0, %v2682
  %2684 = vmatprep.mubr.bf16.mxu0 %v76
  %2685 = vmatmul.mubr.bf16.gmra.mxu0 %v126
  %v2686 = vpop.f32.mrf.mxu0
  %v2687 = vadd.f32 0.0, %v2686
  %v2688 = vpop.f32.mrf.mxu0
  %v2689 = vadd.f32 0.0, %v2688
  %v2690 = vpop.f32.mrf.mxu0
  %v2691 = vadd.f32 0.0, %v2690
  %v2692 = vpop.f32.mrf.mxu0
  %v2693 = vadd.f32 0.0, %v2692
  %2694 = vmatprep.mubr.bf16.mxu0 %v77
  %2695 = vmatmul.mubr.bf16.gmra.mxu0 %v127
  %v2696 = vpop.f32.mrf.mxu0
  %v2697 = vadd.f32 0.0, %v2696
  %v2698 = vpop.f32.mrf.mxu0
  %v2699 = vadd.f32 0.0, %v2698
  %v2700 = vpop.f32.mrf.mxu0
  %v2701 = vadd.f32 0.0, %v2700
  %v2702 = vpop.f32.mrf.mxu0
  %v2703 = vadd.f32 0.0, %v2702
  %2704 = vdwg.mxu0
  %2705 = vmatprep.subr.bf16.mxu0 %v1970
  %2706 = vmatpush1.bf16.msra.mxu0 %v1969
  %2707 = vmatprep.subr.bf16.mxu0 %v1955
  %2708 = vmatpush1.bf16.msra.mxu0 %v1954
  %2709 = vmatprep.subr.bf16.mxu0 %v1940
  %2710 = vmatpush1.bf16.msra.mxu0 %v1939
  %2711 = vmatprep.subr.bf16.mxu0 %v1925
  %2712 = vmatpush1.bf16.msra.mxu0 %v1924
  %2713 = vmatprep.subr.bf16.mxu0 %v1910
  %2714 = vmatpush1.bf16.msra.mxu0 %v1909
  %2715 = vmatprep.subr.bf16.mxu0 %v1895
  %2716 = vmatpush1.bf16.msra.mxu0 %v1894
  %2717 = vmatprep.subr.bf16.mxu0 %v1880
  %2718 = vmatpush1.bf16.msra.mxu0 %v1879
  %2719 = vmatprep.subr.bf16.mxu0 %v1865
  %2720 = vmatpush1.bf16.msra.mxu0 %v1864
  %2721 = vmatprep.subr.bf16.mxu0 0
  %2722 = vmatpush2.bf16.msra.mxu0 0
  %2723 = vmatprep.subr.bf16.mxu0 0
  %2724 = vmatpush2.bf16.msra.mxu0 0
  %2725 = vmatprep.subr.bf16.mxu0 0
  %2726 = vmatpush2.bf16.msra.mxu0 0
  %2727 = vmatprep.subr.bf16.mxu0 0
  %2728 = vmatpush2.bf16.msra.mxu0 0
  %2729 = vmatprep.subr.bf16.mxu0 0
  %2730 = vmatpush2.bf16.msra.mxu0 0
  %2731 = vmatprep.subr.bf16.mxu0 0
  %2732 = vmatpush2.bf16.msra.mxu0 0
  %2733 = vmatprep.subr.bf16.mxu0 0
  %2734 = vmatpush2.bf16.msra.mxu0 0
  %2735 = vmatprep.subr.bf16.mxu0 0
  %2736 = vmatpush2.bf16.msra.mxu0 0
  %2737 = vmatprep.mubr.bf16.mxu0 0
  %2738 = vmatmul.mubr.bf16.gmra.mxu0 %v104
  %v2739 = vpop.f32.mrf.mxu0
  %v2740 = vadd.f32 %v2667, %v2739
  %v2741 = vpop.f32.mrf.mxu0
  %v2742 = vadd.f32 %v2669, %v2741
  %v2743 = vpop.f32.mrf.mxu0
  %v2744 = vadd.f32 %v2671, %v2743
  %v2745 = vpop.f32.mrf.mxu0
  %v2746 = vadd.f32 %v2673, %v2745
  %2747 = vmatprep.mubr.bf16.mxu0 0
  %2748 = vmatmul.mubr.bf16.gmra.mxu0 %v105
  %v2749 = vpop.f32.mrf.mxu0
  %v2750 = vadd.f32 %v2677, %v2749
  %v2751 = vpop.f32.mrf.mxu0
  %v2752 = vadd.f32 %v2679, %v2751
  %v2753 = vpop.f32.mrf.mxu0
  %v2754 = vadd.f32 %v2681, %v2753
  %v2755 = vpop.f32.mrf.mxu0
  %v2756 = vadd.f32 %v2683, %v2755
  %2757 = vmatprep.mubr.bf16.mxu0 0
  %2758 = vmatmul.mubr.bf16.gmra.mxu0 %v106
  %v2759 = vpop.f32.mrf.mxu0
  %v2760 = vadd.f32 %v2687, %v2759
  %v2761 = vpop.f32.mrf.mxu0
  %v2762 = vadd.f32 %v2689, %v2761
  %v2763 = vpop.f32.mrf.mxu0
  %v2764 = vadd.f32 %v2691, %v2763
  %v2765 = vpop.f32.mrf.mxu0
  %v2766 = vadd.f32 %v2693, %v2765
  %2767 = vmatprep.mubr.bf16.mxu0 0
  %2768 = vmatmul.mubr.bf16.gmra.mxu0 %v107
  %v2769 = vpop.f32.mrf.mxu0
  %v2770 = vadd.f32 %v2697, %v2769
  %v2771 = vpop.f32.mrf.mxu0
  %v2772 = vadd.f32 %v2699, %v2771
  %v2773 = vpop.f32.mrf.mxu0
  %v2774 = vadd.f32 %v2701, %v2773
  %v2775 = vpop.f32.mrf.mxu0
  %v2776 = vadd.f32 %v2703, %v2775
  %2777 = vdwg.mxu0
  %2778 = vmatprep.subr.bf16.mxu0 %v1732
  %2779 = vmatpush1.bf16.msra.mxu0 %v1731
  %2780 = vmatprep.subr.bf16.mxu0 %v1717
  %2781 = vmatpush1.bf16.msra.mxu0 %v1716
  %2782 = vmatprep.subr.bf16.mxu0 %v1702
  %2783 = vmatpush1.bf16.msra.mxu0 %v1701
  %2784 = vmatprep.subr.bf16.mxu0 %v1687
  %2785 = vmatpush1.bf16.msra.mxu0 %v1686
  %2786 = vmatprep.subr.bf16.mxu0 %v1672
  %2787 = vmatpush1.bf16.msra.mxu0 %v1671
  %2788 = vmatprep.subr.bf16.mxu0 %v1657
  %2789 = vmatpush1.bf16.msra.mxu0 %v1656
  %2790 = vmatprep.subr.bf16.mxu0 %v1642
  %2791 = vmatpush1.bf16.msra.mxu0 %v1641
  %2792 = vmatprep.subr.bf16.mxu0 %v1627
  %2793 = vmatpush1.bf16.msra.mxu0 %v1626
  %2794 = vmatprep.subr.bf16.mxu0 %v1852
  %2795 = vmatpush2.bf16.msra.mxu0 %v1851
  %2796 = vmatprep.subr.bf16.mxu0 %v1837
  %2797 = vmatpush2.bf16.msra.mxu0 %v1836
  %2798 = vmatprep.subr.bf16.mxu0 %v1822
  %2799 = vmatpush2.bf16.msra.mxu0 %v1821
  %2800 = vmatprep.subr.bf16.mxu0 %v1807
  %2801 = vmatpush2.bf16.msra.mxu0 %v1806
  %2802 = vmatprep.subr.bf16.mxu0 %v1792
  %2803 = vmatpush2.bf16.msra.mxu0 %v1791
  %2804 = vmatprep.subr.bf16.mxu0 %v1777
  %2805 = vmatpush2.bf16.msra.mxu0 %v1776
  %2806 = vmatprep.subr.bf16.mxu0 %v1762
  %2807 = vmatpush2.bf16.msra.mxu0 %v1761
  %2808 = vmatprep.subr.bf16.mxu0 %v1747
  %2809 = vmatpush2.bf16.msra.mxu0 %v1746
  %2810 = vmatprep.mubr.bf16.mxu0 %v74
  %2811 = vmatmul.mubr.bf16.gmra.mxu0 %v124
  %v2812 = vpop.f32.mrf.mxu0
  %v2813 = vadd.f32 0.0, %v2812
  %v2814 = vpop.f32.mrf.mxu0
  %v2815 = vadd.f32 0.0, %v2814
  %v2816 = vpop.f32.mrf.mxu0
  %v2817 = vadd.f32 0.0, %v2816
  %v2818 = vpop.f32.mrf.mxu0
  %v2819 = vadd.f32 0.0, %v2818
  %2820 = vmatprep.mubr.bf16.mxu0 %v75
  %2821 = vmatmul.mubr.bf16.gmra.mxu0 %v125
  %v2822 = vpop.f32.mrf.mxu0
  %v2823 = vadd.f32 0.0, %v2822
  %v2824 = vpop.f32.mrf.mxu0
  %v2825 = vadd.f32 0.0, %v2824
  %v2826 = vpop.f32.mrf.mxu0
  %v2827 = vadd.f32 0.0, %v2826
  %v2828 = vpop.f32.mrf.mxu0
  %v2829 = vadd.f32 0.0, %v2828
  %2830 = vmatprep.mubr.bf16.mxu0 %v76
  %2831 = vmatmul.mubr.bf16.gmra.mxu0 %v126
  %v2832 = vpop.f32.mrf.mxu0
  %v2833 = vadd.f32 0.0, %v2832
  %v2834 = vpop.f32.mrf.mxu0
  %v2835 = vadd.f32 0.0, %v2834
  %v2836 = vpop.f32.mrf.mxu0
  %v2837 = vadd.f32 0.0, %v2836
  %v2838 = vpop.f32.mrf.mxu0
  %v2839 = vadd.f32 0.0, %v2838
  %2840 = vmatprep.mubr.bf16.mxu0 %v77
  %2841 = vmatmul.mubr.bf16.gmra.mxu0 %v127
  %v2842 = vpop.f32.mrf.mxu0
  %v2843 = vadd.f32 0.0, %v2842
  %v2844 = vpop.f32.mrf.mxu0
  %v2845 = vadd.f32 0.0, %v2844
  %v2846 = vpop.f32.mrf.mxu0
  %v2847 = vadd.f32 0.0, %v2846
  %v2848 = vpop.f32.mrf.mxu0
  %v2849 = vadd.f32 0.0, %v2848
  %2850 = vdwg.mxu0
  %2851 = vmatprep.subr.bf16.mxu0 %v1972
  %2852 = vmatpush1.bf16.msra.mxu0 %v1971
  %2853 = vmatprep.subr.bf16.mxu0 %v1957
  %2854 = vmatpush1.bf16.msra.mxu0 %v1956
  %2855 = vmatprep.subr.bf16.mxu0 %v1942
  %2856 = vmatpush1.bf16.msra.mxu0 %v1941
  %2857 = vmatprep.subr.bf16.mxu0 %v1927
  %2858 = vmatpush1.bf16.msra.mxu0 %v1926
  %2859 = vmatprep.subr.bf16.mxu0 %v1912
  %2860 = vmatpush1.bf16.msra.mxu0 %v1911
  %2861 = vmatprep.subr.bf16.mxu0 %v1897
  %2862 = vmatpush1.bf16.msra.mxu0 %v1896
  %2863 = vmatprep.subr.bf16.mxu0 %v1882
  %2864 = vmatpush1.bf16.msra.mxu0 %v1881
  %2865 = vmatprep.subr.bf16.mxu0 %v1867
  %2866 = vmatpush1.bf16.msra.mxu0 %v1866
  %2867 = vmatprep.subr.bf16.mxu0 0
  %2868 = vmatpush2.bf16.msra.mxu0 0
  %2869 = vmatprep.subr.bf16.mxu0 0
  %2870 = vmatpush2.bf16.msra.mxu0 0
  %2871 = vmatprep.subr.bf16.mxu0 0
  %2872 = vmatpush2.bf16.msra.mxu0 0
  %2873 = vmatprep.subr.bf16.mxu0 0
  %2874 = vmatpush2.bf16.msra.mxu0 0
  %2875 = vmatprep.subr.bf16.mxu0 0
  %2876 = vmatpush2.bf16.msra.mxu0 0
  %2877 = vmatprep.subr.bf16.mxu0 0
  %2878 = vmatpush2.bf16.msra.mxu0 0
  %2879 = vmatprep.subr.bf16.mxu0 0
  %2880 = vmatpush2.bf16.msra.mxu0 0
  %2881 = vmatprep.subr.bf16.mxu0 0
  %2882 = vmatpush2.bf16.msra.mxu0 0
  %2883 = vmatprep.mubr.bf16.mxu0 0
  %2884 = vmatmul.mubr.bf16.gmra.mxu0 %v104
  %v2885 = vpop.f32.mrf.mxu0
  %v2886 = vadd.f32 %v2813, %v2885
  %v2887 = vpop.f32.mrf.mxu0
  %v2888 = vadd.f32 %v2815, %v2887
  %v2889 = vpop.f32.mrf.mxu0
  %v2890 = vadd.f32 %v2817, %v2889
  %v2891 = vpop.f32.mrf.mxu0
  %v2892 = vadd.f32 %v2819, %v2891
  %2893 = vmatprep.mubr.bf16.mxu0 0
  %2894 = vmatmul.mubr.bf16.gmra.mxu0 %v105
  %v2895 = vpop.f32.mrf.mxu0
  %v2896 = vadd.f32 %v2823, %v2895
  %v2897 = vpop.f32.mrf.mxu0
  %v2898 = vadd.f32 %v2825, %v2897
  %v2899 = vpop.f32.mrf.mxu0
  %v2900 = vadd.f32 %v2827, %v2899
  %v2901 = vpop.f32.mrf.mxu0
  %v2902 = vadd.f32 %v2829, %v2901
  %2903 = vmatprep.mubr.bf16.mxu0 0
  %2904 = vmatmul.mubr.bf16.gmra.mxu0 %v106
  %v2905 = vpop.f32.mrf.mxu0
  %v2906 = vadd.f32 %v2833, %v2905
  %v2907 = vpop.f32.mrf.mxu0
  %v2908 = vadd.f32 %v2835, %v2907
  %v2909 = vpop.f32.mrf.mxu0
  %v2910 = vadd.f32 %v2837, %v2909
  %v2911 = vpop.f32.mrf.mxu0
  %v2912 = vadd.f32 %v2839, %v2911
  %2913 = vmatprep.mubr.bf16.mxu0 0
  %2914 = vmatmul.mubr.bf16.gmra.mxu0 %v107
  %v2915 = vpop.f32.mrf.mxu0
  %v2916 = vadd.f32 %v2843, %v2915
  %v2917 = vpop.f32.mrf.mxu0
  %v2918 = vadd.f32 %v2845, %v2917
  %v2919 = vpop.f32.mrf.mxu0
  %v2920 = vadd.f32 %v2847, %v2919
  %v2921 = vpop.f32.mrf.mxu0
  %v2922 = vadd.f32 %v2849, %v2921
  %2923 = vdwg.mxu0
  %2924 = vmatprep.subr.bf16.mxu0 %v1734
  %2925 = vmatpush1.bf16.msra.mxu0 %v1733
  %2926 = vmatprep.subr.bf16.mxu0 %v1719
  %2927 = vmatpush1.bf16.msra.mxu0 %v1718
  %2928 = vmatprep.subr.bf16.mxu0 %v1704
  %2929 = vmatpush1.bf16.msra.mxu0 %v1703
  %2930 = vmatprep.subr.bf16.mxu0 %v1689
  %2931 = vmatpush1.bf16.msra.mxu0 %v1688
  %2932 = vmatprep.subr.bf16.mxu0 %v1674
  %2933 = vmatpush1.bf16.msra.mxu0 %v1673
  %2934 = vmatprep.subr.bf16.mxu0 %v1659
  %2935 = vmatpush1.bf16.msra.mxu0 %v1658
  %2936 = vmatprep.subr.bf16.mxu0 %v1644
  %2937 = vmatpush1.bf16.msra.mxu0 %v1643
  %2938 = vmatprep.subr.bf16.mxu0 %v1629
  %2939 = vmatpush1.bf16.msra.mxu0 %v1628
  %2940 = vmatprep.subr.bf16.mxu0 %v1854
  %2941 = vmatpush2.bf16.msra.mxu0 %v1853
  %2942 = vmatprep.subr.bf16.mxu0 %v1839
  %2943 = vmatpush2.bf16.msra.mxu0 %v1838
  %2944 = vmatprep.subr.bf16.mxu0 %v1824
  %2945 = vmatpush2.bf16.msra.mxu0 %v1823
  %2946 = vmatprep.subr.bf16.mxu0 %v1809
  %2947 = vmatpush2.bf16.msra.mxu0 %v1808
  %2948 = vmatprep.subr.bf16.mxu0 %v1794
  %2949 = vmatpush2.bf16.msra.mxu0 %v1793
  %2950 = vmatprep.subr.bf16.mxu0 %v1779
  %2951 = vmatpush2.bf16.msra.mxu0 %v1778
  %2952 = vmatprep.subr.bf16.mxu0 %v1764
  %2953 = vmatpush2.bf16.msra.mxu0 %v1763
  %2954 = vmatprep.subr.bf16.mxu0 %v1749
  %2955 = vmatpush2.bf16.msra.mxu0 %v1748
  %2956 = vmatprep.mubr.bf16.mxu0 %v74
  %2957 = vmatmul.mubr.bf16.gmra.mxu0 %v124
  %v2958 = vpop.f32.mrf.mxu0
  %v2959 = vadd.f32 0.0, %v2958
  %v2960 = vpop.f32.mrf.mxu0
  %v2961 = vadd.f32 0.0, %v2960
  %v2962 = vpop.f32.mrf.mxu0
  %v2963 = vadd.f32 0.0, %v2962
  %v2964 = vpop.f32.mrf.mxu0
  %v2965 = vadd.f32 0.0, %v2964
  %2966 = vmatprep.mubr.bf16.mxu0 %v75
  %2967 = vmatmul.mubr.bf16.gmra.mxu0 %v125
  %v2968 = vpop.f32.mrf.mxu0
  %v2969 = vadd.f32 0.0, %v2968
  %v2970 = vpop.f32.mrf.mxu0
  %v2971 = vadd.f32 0.0, %v2970
  %v2972 = vpop.f32.mrf.mxu0
  %v2973 = vadd.f32 0.0, %v2972
  %v2974 = vpop.f32.mrf.mxu0
  %v2975 = vadd.f32 0.0, %v2974
  %2976 = vmatprep.mubr.bf16.mxu0 %v76
  %2977 = vmatmul.mubr.bf16.gmra.mxu0 %v126
  %v2978 = vpop.f32.mrf.mxu0
  %v2979 = vadd.f32 0.0, %v2978
  %v2980 = vpop.f32.mrf.mxu0
  %v2981 = vadd.f32 0.0, %v2980
  %v2982 = vpop.f32.mrf.mxu0
  %v2983 = vadd.f32 0.0, %v2982
  %v2984 = vpop.f32.mrf.mxu0
  %v2985 = vadd.f32 0.0, %v2984
  %2986 = vmatprep.mubr.bf16.mxu0 %v77
  %2987 = vmatmul.mubr.bf16.gmra.mxu0 %v127
  %v2988 = vpop.f32.mrf.mxu0
  %v2989 = vadd.f32 0.0, %v2988
  %v2990 = vpop.f32.mrf.mxu0
  %v2991 = vadd.f32 0.0, %v2990
  %v2992 = vpop.f32.mrf.mxu0
  %v2993 = vadd.f32 0.0, %v2992
  %v2994 = vpop.f32.mrf.mxu0
  %v2995 = vadd.f32 0.0, %v2994
  %2996 = vdwg.mxu0
  %2997 = vmatprep.subr.bf16.mxu0 %v1974
  %2998 = vmatpush1.bf16.msra.mxu0 %v1973
  %2999 = vmatprep.subr.bf16.mxu0 %v1959
  %3000 = vmatpush1.bf16.msra.mxu0 %v1958
  %3001 = vmatprep.subr.bf16.mxu0 %v1944
  %3002 = vmatpush1.bf16.msra.mxu0 %v1943
  %3003 = vmatprep.subr.bf16.mxu0 %v1929
  %3004 = vmatpush1.bf16.msra.mxu0 %v1928
  %3005 = vmatprep.subr.bf16.mxu0 %v1914
  %3006 = vmatpush1.bf16.msra.mxu0 %v1913
  %3007 = vmatprep.subr.bf16.mxu0 %v1899
  %3008 = vmatpush1.bf16.msra.mxu0 %v1898
  %3009 = vmatprep.subr.bf16.mxu0 %v1884
  %3010 = vmatpush1.bf16.msra.mxu0 %v1883
  %3011 = vmatprep.subr.bf16.mxu0 %v1869
  %3012 = vmatpush1.bf16.msra.mxu0 %v1868
  %3013 = vmatprep.subr.bf16.mxu0 0
  %3014 = vmatpush2.bf16.msra.mxu0 0
  %3015 = vmatprep.subr.bf16.mxu0 0
  %3016 = vmatpush2.bf16.msra.mxu0 0
  %3017 = vmatprep.subr.bf16.mxu0 0
  %3018 = vmatpush2.bf16.msra.mxu0 0
  %3019 = vmatprep.subr.bf16.mxu0 0
  %3020 = vmatpush2.bf16.msra.mxu0 0
  %3021 = vmatprep.subr.bf16.mxu0 0
  %3022 = vmatpush2.bf16.msra.mxu0 0
  %3023 = vmatprep.subr.bf16.mxu0 0
  %3024 = vmatpush2.bf16.msra.mxu0 0
  %3025 = vmatprep.subr.bf16.mxu0 0
  %3026 = vmatpush2.bf16.msra.mxu0 0
  %3027 = vmatprep.subr.bf16.mxu0 0
  %3028 = vmatpush2.bf16.msra.mxu0 0
  %3029 = vmatprep.mubr.bf16.mxu0 0
  %3030 = vmatmul.mubr.bf16.gmra.mxu0 %v104
  %v3031 = vpop.f32.mrf.mxu0
  %v3032 = vadd.f32 %v2959, %v3031
  %v3033 = vpop.f32.mrf.mxu0
  %v3034 = vadd.f32 %v2961, %v3033
  %v3035 = vpop.f32.mrf.mxu0
  %v3036 = vadd.f32 %v2963, %v3035
  %v3037 = vpop.f32.mrf.mxu0
  %v3038 = vadd.f32 %v2965, %v3037
  %3039 = vmatprep.mubr.bf16.mxu0 0
  %3040 = vmatmul.mubr.bf16.gmra.mxu0 %v105
  %v3041 = vpop.f32.mrf.mxu0
  %v3042 = vadd.f32 %v2969, %v3041
  %v3043 = vpop.f32.mrf.mxu0
  %v3044 = vadd.f32 %v2971, %v3043
  %v3045 = vpop.f32.mrf.mxu0
  %v3046 = vadd.f32 %v2973, %v3045
  %v3047 = vpop.f32.mrf.mxu0
  %v3048 = vadd.f32 %v2975, %v3047
  %3049 = vmatprep.mubr.bf16.mxu0 0
  %3050 = vmatmul.mubr.bf16.gmra.mxu0 %v106
  %v3051 = vpop.f32.mrf.mxu0
  %v3052 = vadd.f32 %v2979, %v3051
  %v3053 = vpop.f32.mrf.mxu0
  %v3054 = vadd.f32 %v2981, %v3053
  %v3055 = vpop.f32.mrf.mxu0
  %v3056 = vadd.f32 %v2983, %v3055
  %v3057 = vpop.f32.mrf.mxu0
  %v3058 = vadd.f32 %v2985, %v3057
  %3059 = vmatprep.mubr.bf16.mxu0 0
  %3060 = vmatmul.mubr.bf16.gmra.mxu0 %v107
  %v3061 = vpop.f32.mrf.mxu0
  %v3062 = vadd.f32 %v2989, %v3061
  %v3063 = vpop.f32.mrf.mxu0
  %v3064 = vadd.f32 %v2991, %v3063
  %v3065 = vpop.f32.mrf.mxu0
  %v3066 = vadd.f32 %v2993, %v3065
  %v3067 = vpop.f32.mrf.mxu0
  %v3068 = vadd.f32 %v2995, %v3067
  %3069 = vdwg.mxu0
  %3070 = vmatprep.subr.bf16.mxu0 %v1736
  %3071 = vmatpush1.bf16.msra.mxu0 %v1735
  %3072 = vmatprep.subr.bf16.mxu0 %v1721
  %3073 = vmatpush1.bf16.msra.mxu0 %v1720
  %3074 = vmatprep.subr.bf16.mxu0 %v1706
  %3075 = vmatpush1.bf16.msra.mxu0 %v1705
  %3076 = vmatprep.subr.bf16.mxu0 %v1691
  %3077 = vmatpush1.bf16.msra.mxu0 %v1690
  %3078 = vmatprep.subr.bf16.mxu0 %v1676
  %3079 = vmatpush1.bf16.msra.mxu0 %v1675
  %3080 = vmatprep.subr.bf16.mxu0 %v1661
  %3081 = vmatpush1.bf16.msra.mxu0 %v1660
  %3082 = vmatprep.subr.bf16.mxu0 %v1646
  %3083 = vmatpush1.bf16.msra.mxu0 %v1645
  %3084 = vmatprep.subr.bf16.mxu0 %v1631
  %3085 = vmatpush1.bf16.msra.mxu0 %v1630
  %3086 = vmatprep.subr.bf16.mxu0 %v1856
  %3087 = vmatpush2.bf16.msra.mxu0 %v1855
  %3088 = vmatprep.subr.bf16.mxu0 %v1841
  %3089 = vmatpush2.bf16.msra.mxu0 %v1840
  %3090 = vmatprep.subr.bf16.mxu0 %v1826
  %3091 = vmatpush2.bf16.msra.mxu0 %v1825
  %3092 = vmatprep.subr.bf16.mxu0 %v1811
  %3093 = vmatpush2.bf16.msra.mxu0 %v1810
  %3094 = vmatprep.subr.bf16.mxu0 %v1796
  %3095 = vmatpush2.bf16.msra.mxu0 %v1795
  %3096 = vmatprep.subr.bf16.mxu0 %v1781
  %3097 = vmatpush2.bf16.msra.mxu0 %v1780
  %3098 = vmatprep.subr.bf16.mxu0 %v1766
  %3099 = vmatpush2.bf16.msra.mxu0 %v1765
  %3100 = vmatprep.subr.bf16.mxu0 %v1751
  %3101 = vmatpush2.bf16.msra.mxu0 %v1750
  %3102 = vmatprep.mubr.bf16.mxu0 %v74
  %3103 = vmatmul.mubr.bf16.gmra.mxu0 %v124
  %v3104 = vpop.f32.mrf.mxu0
  %v3105 = vadd.f32 0.0, %v3104
  %v3106 = vpop.f32.mrf.mxu0
  %v3107 = vadd.f32 0.0, %v3106
  %v3108 = vpop.f32.mrf.mxu0
  %v3109 = vadd.f32 0.0, %v3108
  %v3110 = vpop.f32.mrf.mxu0
  %v3111 = vadd.f32 0.0, %v3110
  %3112 = vmatprep.mubr.bf16.mxu0 %v75
  %3113 = vmatmul.mubr.bf16.gmra.mxu0 %v125
  %v3114 = vpop.f32.mrf.mxu0
  %v3115 = vadd.f32 0.0, %v3114
  %v3116 = vpop.f32.mrf.mxu0
  %v3117 = vadd.f32 0.0, %v3116
  %v3118 = vpop.f32.mrf.mxu0
  %v3119 = vadd.f32 0.0, %v3118
  %v3120 = vpop.f32.mrf.mxu0
  %v3121 = vadd.f32 0.0, %v3120
  %3122 = vmatprep.mubr.bf16.mxu0 %v76
  %3123 = vmatmul.mubr.bf16.gmra.mxu0 %v126
  %v3124 = vpop.f32.mrf.mxu0
  %v3125 = vadd.f32 0.0, %v3124
  %v3126 = vpop.f32.mrf.mxu0
  %v3127 = vadd.f32 0.0, %v3126
  %v3128 = vpop.f32.mrf.mxu0
  %v3129 = vadd.f32 0.0, %v3128
  %v3130 = vpop.f32.mrf.mxu0
  %v3131 = vadd.f32 0.0, %v3130
  %3132 = vmatprep.mubr.bf16.mxu0 %v77
  %3133 = vmatmul.mubr.bf16.gmra.mxu0 %v127
  %v3134 = vpop.f32.mrf.mxu0
  %v3135 = vadd.f32 0.0, %v3134
  %v3136 = vpop.f32.mrf.mxu0
  %v3137 = vadd.f32 0.0, %v3136
  %v3138 = vpop.f32.mrf.mxu0
  %v3139 = vadd.f32 0.0, %v3138
  %v3140 = vpop.f32.mrf.mxu0
  %v3141 = vadd.f32 0.0, %v3140
  %3142 = vdwg.mxu0
  %3143 = vmatprep.subr.bf16.mxu0 %v1976
  %3144 = vmatpush1.bf16.msra.mxu0 %v1975
  %3145 = vmatprep.subr.bf16.mxu0 %v1961
  %3146 = vmatpush1.bf16.msra.mxu0 %v1960
  %3147 = vmatprep.subr.bf16.mxu0 %v1946
  %3148 = vmatpush1.bf16.msra.mxu0 %v1945
  %3149 = vmatprep.subr.bf16.mxu0 %v1931
  %3150 = vmatpush1.bf16.msra.mxu0 %v1930
  %3151 = vmatprep.subr.bf16.mxu0 %v1916
  %3152 = vmatpush1.bf16.msra.mxu0 %v1915
  %3153 = vmatprep.subr.bf16.mxu0 %v1901
  %3154 = vmatpush1.bf16.msra.mxu0 %v1900
  %3155 = vmatprep.subr.bf16.mxu0 %v1886
  %3156 = vmatpush1.bf16.msra.mxu0 %v1885
  %3157 = vmatprep.subr.bf16.mxu0 %v1871
  %3158 = vmatpush1.bf16.msra.mxu0 %v1870
  %3159 = vmatprep.subr.bf16.mxu0 0
  %3160 = vmatpush2.bf16.msra.mxu0 0
  %3161 = vmatprep.subr.bf16.mxu0 0
  %3162 = vmatpush2.bf16.msra.mxu0 0
  %3163 = vmatprep.subr.bf16.mxu0 0
  %3164 = vmatpush2.bf16.msra.mxu0 0
  %3165 = vmatprep.subr.bf16.mxu0 0
  %3166 = vmatpush2.bf16.msra.mxu0 0
  %3167 = vmatprep.subr.bf16.mxu0 0
  %3168 = vmatpush2.bf16.msra.mxu0 0
  %3169 = vmatprep.subr.bf16.mxu0 0
  %3170 = vmatpush2.bf16.msra.mxu0 0
  %3171 = vmatprep.subr.bf16.mxu0 0
  %3172 = vmatpush2.bf16.msra.mxu0 0
  %3173 = vmatprep.subr.bf16.mxu0 0
  %3174 = vmatpush2.bf16.msra.mxu0 0
  %3175 = vmatprep.mubr.bf16.mxu0 0
  %3176 = vmatmul.mubr.bf16.gmra.mxu0 %v104
  %v3177 = vpop.f32.mrf.mxu0
  %v3178 = vadd.f32 %v3105, %v3177
  %v3179 = vpop.f32.mrf.mxu0
  %v3180 = vadd.f32 %v3107, %v3179
  %v3181 = vpop.f32.mrf.mxu0
  %v3182 = vadd.f32 %v3109, %v3181
  %v3183 = vpop.f32.mrf.mxu0
  %v3184 = vadd.f32 %v3111, %v3183
  %3185 = vmatprep.mubr.bf16.mxu0 0
  %3186 = vmatmul.mubr.bf16.gmra.mxu0 %v105
  %v3187 = vpop.f32.mrf.mxu0
  %v3188 = vadd.f32 %v3115, %v3187
  %v3189 = vpop.f32.mrf.mxu0
  %v3190 = vadd.f32 %v3117, %v3189
  %v3191 = vpop.f32.mrf.mxu0
  %v3192 = vadd.f32 %v3119, %v3191
  %v3193 = vpop.f32.mrf.mxu0
  %v3194 = vadd.f32 %v3121, %v3193
  %3195 = vmatprep.mubr.bf16.mxu0 0
  %3196 = vmatmul.mubr.bf16.gmra.mxu0 %v106
  %v3197 = vpop.f32.mrf.mxu0
  %v3198 = vadd.f32 %v3125, %v3197
  %v3199 = vpop.f32.mrf.mxu0
  %v3200 = vadd.f32 %v3127, %v3199
  %v3201 = vpop.f32.mrf.mxu0
  %v3202 = vadd.f32 %v3129, %v3201
  %v3203 = vpop.f32.mrf.mxu0
  %v3204 = vadd.f32 %v3131, %v3203
  %3205 = vmatprep.mubr.bf16.mxu0 0
  %3206 = vmatmul.mubr.bf16.gmra.mxu0 %v107
  %v3207 = vpop.f32.mrf.mxu0
  %v3208 = vadd.f32 %v3135, %v3207
  %v3209 = vpop.f32.mrf.mxu0
  %v3210 = vadd.f32 %v3137, %v3209
  %v3211 = vpop.f32.mrf.mxu0
  %v3212 = vadd.f32 %v3139, %v3211
  %v3213 = vpop.f32.mrf.mxu0
  %v3214 = vadd.f32 %v3141, %v3213
  %3215 = vdwg.mxu0
  %3216 = vmatprep.subr.bf16.mxu0 %v1738
  %3217 = vmatpush1.bf16.msra.mxu0 %v1737
  %3218 = vmatprep.subr.bf16.mxu0 %v1723
  %3219 = vmatpush1.bf16.msra.mxu0 %v1722
  %3220 = vmatprep.subr.bf16.mxu0 %v1708
  %3221 = vmatpush1.bf16.msra.mxu0 %v1707
  %3222 = vmatprep.subr.bf16.mxu0 %v1693
  %3223 = vmatpush1.bf16.msra.mxu0 %v1692
  %3224 = vmatprep.subr.bf16.mxu0 %v1678
  %3225 = vmatpush1.bf16.msra.mxu0 %v1677
  %3226 = vmatprep.subr.bf16.mxu0 %v1663
  %3227 = vmatpush1.bf16.msra.mxu0 %v1662
  %3228 = vmatprep.subr.bf16.mxu0 %v1648
  %3229 = vmatpush1.bf16.msra.mxu0 %v1647
  %3230 = vmatprep.subr.bf16.mxu0 %v1633
  %3231 = vmatpush1.bf16.msra.mxu0 %v1632
  %3232 = vmatprep.subr.bf16.mxu0 %v1858
  %3233 = vmatpush2.bf16.msra.mxu0 %v1857
  %3234 = vmatprep.subr.bf16.mxu0 %v1843
  %3235 = vmatpush2.bf16.msra.mxu0 %v1842
  %3236 = vmatprep.subr.bf16.mxu0 %v1828
  %3237 = vmatpush2.bf16.msra.mxu0 %v1827
  %3238 = vmatprep.subr.bf16.mxu0 %v1813
  %3239 = vmatpush2.bf16.msra.mxu0 %v1812
  %3240 = vmatprep.subr.bf16.mxu0 %v1798
  %3241 = vmatpush2.bf16.msra.mxu0 %v1797
  %3242 = vmatprep.subr.bf16.mxu0 %v1783
  %3243 = vmatpush2.bf16.msra.mxu0 %v1782
  %3244 = vmatprep.subr.bf16.mxu0 %v1768
  %3245 = vmatpush2.bf16.msra.mxu0 %v1767
  %3246 = vmatprep.subr.bf16.mxu0 %v1753
  %3247 = vmatpush2.bf16.msra.mxu0 %v1752
  %3248 = vmatprep.mubr.bf16.mxu0 %v74
  %3249 = vmatmul.mubr.bf16.gmra.mxu0 %v124
  %v3250 = vpop.f32.mrf.mxu0
  %v3251 = vadd.f32 0.0, %v3250
  %v3252 = vpop.f32.mrf.mxu0
  %v3253 = vadd.f32 0.0, %v3252
  %v3254 = vpop.f32.mrf.mxu0
  %v3255 = vadd.f32 0.0, %v3254
  %v3256 = vpop.f32.mrf.mxu0
  %v3257 = vadd.f32 0.0, %v3256
  %3258 = vmatprep.mubr.bf16.mxu0 %v75
  %3259 = vmatmul.mubr.bf16.gmra.mxu0 %v125
  %v3260 = vpop.f32.mrf.mxu0
  %v3261 = vadd.f32 0.0, %v3260
  %v3262 = vpop.f32.mrf.mxu0
  %v3263 = vadd.f32 0.0, %v3262
  %v3264 = vpop.f32.mrf.mxu0
  %v3265 = vadd.f32 0.0, %v3264
  %v3266 = vpop.f32.mrf.mxu0
  %v3267 = vadd.f32 0.0, %v3266
  %3268 = vmatprep.mubr.bf16.mxu0 %v76
  %3269 = vmatmul.mubr.bf16.gmra.mxu0 %v126
  %v3270 = vpop.f32.mrf.mxu0
  %v3271 = vadd.f32 0.0, %v3270
  %v3272 = vpop.f32.mrf.mxu0
  %v3273 = vadd.f32 0.0, %v3272
  %v3274 = vpop.f32.mrf.mxu0
  %v3275 = vadd.f32 0.0, %v3274
  %v3276 = vpop.f32.mrf.mxu0
  %v3277 = vadd.f32 0.0, %v3276
  %3278 = vmatprep.mubr.bf16.mxu0 %v77
  %3279 = vmatmul.mubr.bf16.gmra.mxu0 %v127
  %v3280 = vpop.f32.mrf.mxu0
  %v3281 = vadd.f32 0.0, %v3280
  %v3282 = vpop.f32.mrf.mxu0
  %v3283 = vadd.f32 0.0, %v3282
  %v3284 = vpop.f32.mrf.mxu0
  %v3285 = vadd.f32 0.0, %v3284
  %v3286 = vpop.f32.mrf.mxu0
  %v3287 = vadd.f32 0.0, %v3286
  %3288 = vdwg.mxu0
  %3289 = vmatprep.subr.bf16.mxu0 %v1978
  %3290 = vmatpush1.bf16.msra.mxu0 %v1977
  %3291 = vmatprep.subr.bf16.mxu0 %v1963
  %3292 = vmatpush1.bf16.msra.mxu0 %v1962
  %3293 = vmatprep.subr.bf16.mxu0 %v1948
  %3294 = vmatpush1.bf16.msra.mxu0 %v1947
  %3295 = vmatprep.subr.bf16.mxu0 %v1933
  %3296 = vmatpush1.bf16.msra.mxu0 %v1932
  %3297 = vmatprep.subr.bf16.mxu0 %v1918
  %3298 = vmatpush1.bf16.msra.mxu0 %v1917
  %3299 = vmatprep.subr.bf16.mxu0 %v1903
  %3300 = vmatpush1.bf16.msra.mxu0 %v1902
  %3301 = vmatprep.subr.bf16.mxu0 %v1888
  %3302 = vmatpush1.bf16.msra.mxu0 %v1887
  %3303 = vmatprep.subr.bf16.mxu0 %v1873
  %3304 = vmatpush1.bf16.msra.mxu0 %v1872
  %3305 = vmatprep.subr.bf16.mxu0 0
  %3306 = vmatpush2.bf16.msra.mxu0 0
  %3307 = vmatprep.subr.bf16.mxu0 0
  %3308 = vmatpush2.bf16.msra.mxu0 0
  %3309 = vmatprep.subr.bf16.mxu0 0
  %3310 = vmatpush2.bf16.msra.mxu0 0
  %3311 = vmatprep.subr.bf16.mxu0 0
  %3312 = vmatpush2.bf16.msra.mxu0 0
  %3313 = vmatprep.subr.bf16.mxu0 0
  %3314 = vmatpush2.bf16.msra.mxu0 0
  %3315 = vmatprep.subr.bf16.mxu0 0
  %3316 = vmatpush2.bf16.msra.mxu0 0
  %3317 = vmatprep.subr.bf16.mxu0 0
  %3318 = vmatpush2.bf16.msra.mxu0 0
  %3319 = vmatprep.subr.bf16.mxu0 0
  %3320 = vmatpush2.bf16.msra.mxu0 0
  %3321 = vmatprep.mubr.bf16.mxu0 0
  %3322 = vmatmul.mubr.bf16.gmra.mxu0 %v104
  %v3323 = vpop.f32.mrf.mxu0
  %v3324 = vadd.f32 %v3251, %v3323
  %v3325 = vpop.f32.mrf.mxu0
  %v3326 = vadd.f32 %v3253, %v3325
  %v3327 = vpop.f32.mrf.mxu0
  %v3328 = vadd.f32 %v3255, %v3327
  %v3329 = vpop.f32.mrf.mxu0
  %v3330 = vadd.f32 %v3257, %v3329
  %3331 = vmatprep.mubr.bf16.mxu0 0
  %3332 = vmatmul.mubr.bf16.gmra.mxu0 %v105
  %v3333 = vpop.f32.mrf.mxu0
  %v3334 = vadd.f32 %v3261, %v3333
  %v3335 = vpop.f32.mrf.mxu0
  %v3336 = vadd.f32 %v3263, %v3335
  %v3337 = vpop.f32.mrf.mxu0
  %v3338 = vadd.f32 %v3265, %v3337
  %v3339 = vpop.f32.mrf.mxu0
  %v3340 = vadd.f32 %v3267, %v3339
  %3341 = vmatprep.mubr.bf16.mxu0 0
  %3342 = vmatmul.mubr.bf16.gmra.mxu0 %v106
  %v3343 = vpop.f32.mrf.mxu0
  %v3344 = vadd.f32 %v3271, %v3343
  %v3345 = vpop.f32.mrf.mxu0
  %v3346 = vadd.f32 %v3273, %v3345
  %v3347 = vpop.f32.mrf.mxu0
  %v3348 = vadd.f32 %v3275, %v3347
  %v3349 = vpop.f32.mrf.mxu0
  %v3350 = vadd.f32 %v3277, %v3349
  %3351 = vmatprep.mubr.bf16.mxu0 0
  %3352 = vmatmul.mubr.bf16.gmra.mxu0 %v107
  %v3353 = vpop.f32.mrf.mxu0
  %v3354 = vadd.f32 %v3281, %v3353
  %v3355 = vpop.f32.mrf.mxu0
  %v3356 = vadd.f32 %v3283, %v3355
  %v3357 = vpop.f32.mrf.mxu0
  %v3358 = vadd.f32 %v3285, %v3357
  %v3359 = vpop.f32.mrf.mxu0
  %v3360 = vadd.f32 %v3287, %v3359
  %3361 = vdwg.mxu0
  %3362 = vmatprep.subr.bf16.mxu0 0
  %3363 = vmatpush1.bf16.msra.mxu0 %v1739
  %3364 = vmatprep.subr.bf16.mxu0 0
  %3365 = vmatpush1.bf16.msra.mxu0 %v1724
  %3366 = vmatprep.subr.bf16.mxu0 0
  %3367 = vmatpush1.bf16.msra.mxu0 %v1709
  %3368 = vmatprep.subr.bf16.mxu0 0
  %3369 = vmatpush1.bf16.msra.mxu0 %v1694
  %3370 = vmatprep.subr.bf16.mxu0 0
  %3371 = vmatpush1.bf16.msra.mxu0 %v1679
  %3372 = vmatprep.subr.bf16.mxu0 0
  %3373 = vmatpush1.bf16.msra.mxu0 %v1664
  %3374 = vmatprep.subr.bf16.mxu0 0
  %3375 = vmatpush1.bf16.msra.mxu0 %v1649
  %3376 = vmatprep.subr.bf16.mxu0 0
  %3377 = vmatpush1.bf16.msra.mxu0 %v1634
  %3378 = vmatprep.subr.bf16.mxu0 0
  %3379 = vmatpush2.bf16.msra.mxu0 %v1859
  %3380 = vmatprep.subr.bf16.mxu0 0
  %3381 = vmatpush2.bf16.msra.mxu0 %v1844
  %3382 = vmatprep.subr.bf16.mxu0 0
  %3383 = vmatpush2.bf16.msra.mxu0 %v1829
  %3384 = vmatprep.subr.bf16.mxu0 0
  %3385 = vmatpush2.bf16.msra.mxu0 %v1814
  %3386 = vmatprep.subr.bf16.mxu0 0
  %3387 = vmatpush2.bf16.msra.mxu0 %v1799
  %3388 = vmatprep.subr.bf16.mxu0 0
  %3389 = vmatpush2.bf16.msra.mxu0 %v1784
  %3390 = vmatprep.subr.bf16.mxu0 0
  %3391 = vmatpush2.bf16.msra.mxu0 %v1769
  %3392 = vmatprep.subr.bf16.mxu0 0
  %3393 = vmatpush2.bf16.msra.mxu0 %v1754
  %3394 = vmatprep.mubr.bf16.mxu0 %v74
  %3395 = vmatmul.mubr.bf16.gmra.mxu0 %v124
  %v3396 = vpop.f32.mrf.mxu0
  %v3397 = vadd.f32 0.0, %v3396
  %v3398 = vpop.f32.mrf.mxu0
  %v3399 = vpop.f32.mrf.mxu0
  %v3400 = vadd.f32 0.0, %v3399
  %v3401 = vpop.f32.mrf.mxu0
  %3402 = vmatprep.mubr.bf16.mxu0 %v75
  %3403 = vmatmul.mubr.bf16.gmra.mxu0 %v125
  %v3404 = vpop.f32.mrf.mxu0
  %v3405 = vadd.f32 0.0, %v3404
  %v3406 = vpop.f32.mrf.mxu0
  %v3407 = vpop.f32.mrf.mxu0
  %v3408 = vadd.f32 0.0, %v3407
  %v3409 = vpop.f32.mrf.mxu0
  %3410 = vmatprep.mubr.bf16.mxu0 %v76
  %3411 = vmatmul.mubr.bf16.gmra.mxu0 %v126
  %v3412 = vpop.f32.mrf.mxu0
  %v3413 = vadd.f32 0.0, %v3412
  %v3414 = vpop.f32.mrf.mxu0
  %v3415 = vpop.f32.mrf.mxu0
  %v3416 = vadd.f32 0.0, %v3415
  %v3417 = vpop.f32.mrf.mxu0
  %3418 = vmatprep.mubr.bf16.mxu0 %v77
  %3419 = vmatmul.mubr.bf16.gmra.mxu0 %v127
  %v3420 = vpop.f32.mrf.mxu0
  %v3421 = vadd.f32 0.0, %v3420
  %v3422 = vpop.f32.mrf.mxu0
  %v3423 = vpop.f32.mrf.mxu0
  %v3424 = vadd.f32 0.0, %v3423
  %v3425 = vpop.f32.mrf.mxu0
  %3426 = vdwg.mxu0
  %3427 = vmatprep.subr.bf16.mxu0 0
  %3428 = vmatpush1.bf16.msra.mxu0 %v1979
  %3429 = vmatprep.subr.bf16.mxu0 0
  %3430 = vmatpush1.bf16.msra.mxu0 %v1964
  %3431 = vmatprep.subr.bf16.mxu0 0
  %3432 = vmatpush1.bf16.msra.mxu0 %v1949
  %3433 = vmatprep.subr.bf16.mxu0 0
  %3434 = vmatpush1.bf16.msra.mxu0 %v1934
  %3435 = vmatprep.subr.bf16.mxu0 0
  %3436 = vmatpush1.bf16.msra.mxu0 %v1919
  %3437 = vmatprep.subr.bf16.mxu0 0
  %3438 = vmatpush1.bf16.msra.mxu0 %v1904
  %3439 = vmatprep.subr.bf16.mxu0 0
  %3440 = vmatpush1.bf16.msra.mxu0 %v1889
  %3441 = vmatprep.subr.bf16.mxu0 0
  %3442 = vmatpush1.bf16.msra.mxu0 %v1874
  %3443 = vmatprep.subr.bf16.mxu0 0
  %3444 = vmatpush2.bf16.msra.mxu0 0
  %3445 = vmatprep.subr.bf16.mxu0 0
  %3446 = vmatpush2.bf16.msra.mxu0 0
  %3447 = vmatprep.subr.bf16.mxu0 0
  %3448 = vmatpush2.bf16.msra.mxu0 0
  %3449 = vmatprep.subr.bf16.mxu0 0
  %3450 = vmatpush2.bf16.msra.mxu0 0
  %3451 = vmatprep.subr.bf16.mxu0 0
  %3452 = vmatpush2.bf16.msra.mxu0 0
  %3453 = vmatprep.subr.bf16.mxu0 0
  %3454 = vmatpush2.bf16.msra.mxu0 0
  %3455 = vmatprep.subr.bf16.mxu0 0
  %3456 = vmatpush2.bf16.msra.mxu0 0
  %3457 = vmatprep.subr.bf16.mxu0 0
  %3458 = vmatpush2.bf16.msra.mxu0 0
  %3459 = vmatprep.mubr.bf16.mxu0 0
  %3460 = vmatmul.mubr.bf16.gmra.mxu0 %v104
  %v3461 = vpop.f32.mrf.mxu0
  %v3462 = vadd.f32 %v3397, %v3461
  %v3463 = vpop.f32.mrf.mxu0
  %v3464 = vpop.f32.mrf.mxu0
  %v3465 = vadd.f32 %v3400, %v3464
  %v3466 = vpop.f32.mrf.mxu0
  %3467 = vmatprep.mubr.bf16.mxu0 0
  %3468 = vmatmul.mubr.bf16.gmra.mxu0 %v105
  %v3469 = vpop.f32.mrf.mxu0
  %v3470 = vadd.f32 %v3405, %v3469
  %v3471 = vpop.f32.mrf.mxu0
  %v3472 = vpop.f32.mrf.mxu0
  %v3473 = vadd.f32 %v3408, %v3472
  %v3474 = vpop.f32.mrf.mxu0
  %3475 = vmatprep.mubr.bf16.mxu0 0
  %3476 = vmatmul.mubr.bf16.gmra.mxu0 %v106
  %v3477 = vpop.f32.mrf.mxu0
  %v3478 = vadd.f32 %v3413, %v3477
  %v3479 = vpop.f32.mrf.mxu0
  %v3480 = vpop.f32.mrf.mxu0
  %v3481 = vadd.f32 %v3416, %v3480
  %v3482 = vpop.f32.mrf.mxu0
  %3483 = vmatprep.mubr.bf16.mxu0 0
  %3484 = vmatmul.mubr.bf16.gmra.mxu0 %v107
  %v3485 = vpop.f32.mrf.mxu0
  %v3486 = vadd.f32 %v3421, %v3485
  %v3487 = vpop.f32.mrf.mxu0
  %v3488 = vpop.f32.mrf.mxu0
  %v3489 = vadd.f32 %v3424, %v3488
  %v3490 = vpop.f32.mrf.mxu0
  %3491 = vdwg.mxu0
  %v3492 = vld [vmem:[%s2] sm:$0xff]
  %v3493 = vld [vmem:[%s2 + $0x8] sm:$0xff]
  %v3496 = vlaneseq
  %v3497 = vshrl.u32 %v3496, 7
  %v3498 = vsub.s32 0, %v3497
  %v3499 = vrot.slane %v3492, %v3498
  %v3500 = vlaneseq
  %v3501 = vshrl.u32 %v3500, 7
  %v3502 = vsub.s32 1, %v3501
  %v3503 = vrot.slane %v3492, %v3502
  %v3504 = vlaneseq
  %v3505 = vshrl.u32 %v3504, 7
  %v3506 = vsub.s32 2, %v3505
  %v3507 = vrot.slane %v3492, %v3506
  %v3508 = vlaneseq
  %v3509 = vshrl.u32 %v3508, 7
  %v3510 = vsub.s32 3, %v3509
  %v3511 = vrot.slane %v3492, %v3510
  %v3512 = vlaneseq
  %v3513 = vshrl.u32 %v3512, 7
  %v3514 = vsub.s32 4, %v3513
  %v3515 = vrot.slane %v3492, %v3514
  %v3516 = vlaneseq
  %v3517 = vshrl.u32 %v3516, 7
  %v3518 = vsub.s32 5, %v3517
  %v3519 = vrot.slane %v3492, %v3518
  %v3520 = vlaneseq
  %v3521 = vshrl.u32 %v3520, 7
  %v3522 = vsub.s32 6, %v3521
  %v3523 = vrot.slane %v3492, %v3522
  %v3524 = vlaneseq
  %v3525 = vshrl.u32 %v3524, 7
  %v3526 = vsub.s32 7, %v3525
  %v3527 = vrot.slane %v3492, %v3526
  %v3528 = vlaneseq
  %v3529 = vshrl.u32 %v3528, 7
  %v3530 = vsub.s32 0, %v3529
  %v3531 = vrot.slane %v3493, %v3530
  %v3532 = vlaneseq
  %v3533 = vshrl.u32 %v3532, 7
  %v3534 = vsub.s32 1, %v3533
  %v3535 = vrot.slane %v3493, %v3534
  %v3536 = vlaneseq
  %v3537 = vshrl.u32 %v3536, 7
  %v3538 = vsub.s32 2, %v3537
  %v3539 = vrot.slane %v3493, %v3538
  %v3540 = vlaneseq
  %v3541 = vshrl.u32 %v3540, 7
  %v3542 = vsub.s32 3, %v3541
  %v3543 = vrot.slane %v3493, %v3542
  %v3544 = vlaneseq
  %v3545 = vshrl.u32 %v3544, 7
  %v3546 = vsub.s32 4, %v3545
  %v3547 = vrot.slane %v3493, %v3546
  %v3548 = vlaneseq
  %v3549 = vshrl.u32 %v3548, 7
  %v3550 = vsub.s32 5, %v3549
  %v3551 = vrot.slane %v3493, %v3550
  %v3552 = vlaneseq
  %v3553 = vshrl.u32 %v3552, 7
  %v3554 = vsub.s32 6, %v3553
  %v3555 = vrot.slane %v3493, %v3554
  %v3571 = vadd.f32 %v2448, %v3499
  %v3572 = vadd.f32 %v2450, %v3503
  %v3573 = vadd.f32 %v2594, %v3507
  %v3574 = vadd.f32 %v2596, %v3511
  %v3575 = vadd.f32 %v2740, %v3515
  %v3576 = vadd.f32 %v2742, %v3519
  %v3577 = vadd.f32 %v2886, %v3523
  %v3578 = vadd.f32 %v2888, %v3527
  %v3579 = vadd.f32 %v3032, %v3531
  %v3580 = vadd.f32 %v3034, %v3535
  %v3581 = vadd.f32 %v3178, %v3539
  %v3582 = vadd.f32 %v3180, %v3543
  %v3583 = vadd.f32 %v3324, %v3547
  %v3584 = vadd.f32 %v3326, %v3551
  %v3585 = vadd.f32 %v3462, %v3555
  %v3586 = vadd.f32 %v2452, %v3499
  %v3587 = vadd.f32 %v2454, %v3503
  %v3588 = vadd.f32 %v2598, %v3507
  %v3589 = vadd.f32 %v2600, %v3511
  %v3590 = vadd.f32 %v2744, %v3515
  %v3591 = vadd.f32 %v2746, %v3519
  %v3592 = vadd.f32 %v2890, %v3523
  %v3593 = vadd.f32 %v2892, %v3527
  %v3594 = vadd.f32 %v3036, %v3531
  %v3595 = vadd.f32 %v3038, %v3535
  %v3596 = vadd.f32 %v3182, %v3539
  %v3597 = vadd.f32 %v3184, %v3543
  %v3598 = vadd.f32 %v3328, %v3547
  %v3599 = vadd.f32 %v3330, %v3551
  %v3600 = vadd.f32 %v3465, %v3555
  %v3601 = vadd.f32 %v2458, %v3499
  %v3602 = vadd.f32 %v2460, %v3503
  %v3603 = vadd.f32 %v2604, %v3507
  %v3604 = vadd.f32 %v2606, %v3511
  %v3605 = vadd.f32 %v2750, %v3515
  %v3606 = vadd.f32 %v2752, %v3519
  %v3607 = vadd.f32 %v2896, %v3523
  %v3608 = vadd.f32 %v2898, %v3527
  %v3609 = vadd.f32 %v3042, %v3531
  %v3610 = vadd.f32 %v3044, %v3535
  %v3611 = vadd.f32 %v3188, %v3539
  %v3612 = vadd.f32 %v3190, %v3543
  %v3613 = vadd.f32 %v3334, %v3547
  %v3614 = vadd.f32 %v3336, %v3551
  %v3615 = vadd.f32 %v3470, %v3555
  %v3616 = vadd.f32 %v2462, %v3499
  %v3617 = vadd.f32 %v2464, %v3503
  %v3618 = vadd.f32 %v2608, %v3507
  %v3619 = vadd.f32 %v2610, %v3511
  %v3620 = vadd.f32 %v2754, %v3515
  %v3621 = vadd.f32 %v2756, %v3519
  %v3622 = vadd.f32 %v2900, %v3523
  %v3623 = vadd.f32 %v2902, %v3527
  %v3624 = vadd.f32 %v3046, %v3531
  %v3625 = vadd.f32 %v3048, %v3535
  %v3626 = vadd.f32 %v3192, %v3539
  %v3627 = vadd.f32 %v3194, %v3543
  %v3628 = vadd.f32 %v3338, %v3547
  %v3629 = vadd.f32 %v3340, %v3551
  %v3630 = vadd.f32 %v3473, %v3555
  %v3631 = vadd.f32 %v2468, %v3499
  %v3632 = vadd.f32 %v2470, %v3503
  %v3633 = vadd.f32 %v2614, %v3507
  %v3634 = vadd.f32 %v2616, %v3511
  %v3635 = vadd.f32 %v2760, %v3515
  %v3636 = vadd.f32 %v2762, %v3519
  %v3637 = vadd.f32 %v2906, %v3523
  %v3638 = vadd.f32 %v2908, %v3527
  %v3639 = vadd.f32 %v3052, %v3531
  %v3640 = vadd.f32 %v3054, %v3535
  %v3641 = vadd.f32 %v3198, %v3539
  %v3642 = vadd.f32 %v3200, %v3543
  %v3643 = vadd.f32 %v3344, %v3547
  %v3644 = vadd.f32 %v3346, %v3551
  %v3645 = vadd.f32 %v3478, %v3555
  %v3646 = vadd.f32 %v2472, %v3499
  %v3647 = vadd.f32 %v2474, %v3503
  %v3648 = vadd.f32 %v2618, %v3507
  %v3649 = vadd.f32 %v2620, %v3511
  %v3650 = vadd.f32 %v2764, %v3515
  %v3651 = vadd.f32 %v2766, %v3519
  %v3652 = vadd.f32 %v2910, %v3523
  %v3653 = vadd.f32 %v2912, %v3527
  %v3654 = vadd.f32 %v3056, %v3531
  %v3655 = vadd.f32 %v3058, %v3535
  %v3656 = vadd.f32 %v3202, %v3539
  %v3657 = vadd.f32 %v3204, %v3543
  %v3658 = vadd.f32 %v3348, %v3547
  %v3659 = vadd.f32 %v3350, %v3551
  %v3660 = vadd.f32 %v3481, %v3555
  %v3661 = vadd.f32 %v2478, %v3499
  %v3662 = vadd.f32 %v2480, %v3503
  %v3663 = vadd.f32 %v2624, %v3507
  %v3664 = vadd.f32 %v2626, %v3511
  %v3665 = vadd.f32 %v2770, %v3515
  %v3666 = vadd.f32 %v2772, %v3519
  %v3667 = vadd.f32 %v2916, %v3523
  %v3668 = vadd.f32 %v2918, %v3527
  %v3669 = vadd.f32 %v3062, %v3531
  %v3670 = vadd.f32 %v3064, %v3535
  %v3671 = vadd.f32 %v3208, %v3539
  %v3672 = vadd.f32 %v3210, %v3543
  %v3673 = vadd.f32 %v3354, %v3547
  %v3674 = vadd.f32 %v3356, %v3551
  %v3675 = vadd.f32 %v3486, %v3555
  %v3676 = vadd.f32 %v2482, %v3499
  %v3677 = vadd.f32 %v2484, %v3503
  %v3678 = vadd.f32 %v2628, %v3507
  %v3679 = vadd.f32 %v2630, %v3511
  %v3680 = vadd.f32 %v2774, %v3515
  %v3681 = vadd.f32 %v2776, %v3519
  %v3682 = vadd.f32 %v2920, %v3523
  %v3683 = vadd.f32 %v2922, %v3527
  %v3684 = vadd.f32 %v3066, %v3531
  %v3685 = vadd.f32 %v3068, %v3535
  %v3686 = vadd.f32 %v3212, %v3539
  %v3687 = vadd.f32 %v3214, %v3543
  %v3688 = vadd.f32 %v3358, %v3547
  %v3689 = vadd.f32 %v3360, %v3551
  %v3690 = vadd.f32 %v3489, %v3555
  %v3691 = vmax.f32 %v3571, 0.0
  %v3692 = vmax.f32 %v3572, 0.0
  %v3693 = vmax.f32 %v3573, 0.0
  %v3694 = vmax.f32 %v3574, 0.0
  %v3695 = vmax.f32 %v3575, 0.0
  %v3696 = vmax.f32 %v3576, 0.0
  %v3697 = vmax.f32 %v3577, 0.0
  %v3698 = vmax.f32 %v3578, 0.0
  %v3699 = vmax.f32 %v3579, 0.0
  %v3700 = vmax.f32 %v3580, 0.0
  %v3701 = vmax.f32 %v3581, 0.0
  %v3702 = vmax.f32 %v3582, 0.0
  %v3703 = vmax.f32 %v3583, 0.0
  %v3704 = vmax.f32 %v3584, 0.0
  %v3705 = vmax.f32 %v3585, 0.0
  %v3706 = vmax.f32 %v3586, 0.0
  %v3707 = vmax.f32 %v3587, 0.0
  %v3708 = vmax.f32 %v3588, 0.0
  %v3709 = vmax.f32 %v3589, 0.0
  %v3710 = vmax.f32 %v3590, 0.0
  %v3711 = vmax.f32 %v3591, 0.0
  %v3712 = vmax.f32 %v3592, 0.0
  %v3713 = vmax.f32 %v3593, 0.0
  %v3714 = vmax.f32 %v3594, 0.0
  %v3715 = vmax.f32 %v3595, 0.0
  %v3716 = vmax.f32 %v3596, 0.0
  %v3717 = vmax.f32 %v3597, 0.0
  %v3718 = vmax.f32 %v3598, 0.0
  %v3719 = vmax.f32 %v3599, 0.0
  %v3720 = vmax.f32 %v3600, 0.0
  %v3721 = vmax.f32 %v3601, 0.0
  %v3722 = vmax.f32 %v3602, 0.0
  %v3723 = vmax.f32 %v3603, 0.0
  %v3724 = vmax.f32 %v3604, 0.0
  %v3725 = vmax.f32 %v3605, 0.0
  %v3726 = vmax.f32 %v3606, 0.0
  %v3727 = vmax.f32 %v3607, 0.0
  %v3728 = vmax.f32 %v3608, 0.0
  %v3729 = vmax.f32 %v3609, 0.0
  %v3730 = vmax.f32 %v3610, 0.0
  %v3731 = vmax.f32 %v3611, 0.0
  %v3732 = vmax.f32 %v3612, 0.0
  %v3733 = vmax.f32 %v3613, 0.0
  %v3734 = vmax.f32 %v3614, 0.0
  %v3735 = vmax.f32 %v3615, 0.0
  %v3736 = vmax.f32 %v3616, 0.0
  %v3737 = vmax.f32 %v3617, 0.0
  %v3738 = vmax.f32 %v3618, 0.0
  %v3739 = vmax.f32 %v3619, 0.0
  %v3740 = vmax.f32 %v3620, 0.0
  %v3741 = vmax.f32 %v3621, 0.0
  %v3742 = vmax.f32 %v3622, 0.0
  %v3743 = vmax.f32 %v3623, 0.0
  %v3744 = vmax.f32 %v3624, 0.0
  %v3745 = vmax.f32 %v3625, 0.0
  %v3746 = vmax.f32 %v3626, 0.0
  %v3747 = vmax.f32 %v3627, 0.0
  %v3748 = vmax.f32 %v3628, 0.0
  %v3749 = vmax.f32 %v3629, 0.0
  %v3750 = vmax.f32 %v3630, 0.0
  %v3751 = vmax.f32 %v3631, 0.0
  %v3752 = vmax.f32 %v3632, 0.0
  %v3753 = vmax.f32 %v3633, 0.0
  %v3754 = vmax.f32 %v3634, 0.0
  %v3755 = vmax.f32 %v3635, 0.0
  %v3756 = vmax.f32 %v3636, 0.0
  %v3757 = vmax.f32 %v3637, 0.0
  %v3758 = vmax.f32 %v3638, 0.0
  %v3759 = vmax.f32 %v3639, 0.0
  %v3760 = vmax.f32 %v3640, 0.0
  %v3761 = vmax.f32 %v3641, 0.0
  %v3762 = vmax.f32 %v3642, 0.0
  %v3763 = vmax.f32 %v3643, 0.0
  %v3764 = vmax.f32 %v3644, 0.0
  %v3765 = vmax.f32 %v3645, 0.0
  %v3766 = vmax.f32 %v3646, 0.0
  %v3767 = vmax.f32 %v3647, 0.0
  %v3768 = vmax.f32 %v3648, 0.0
  %v3769 = vmax.f32 %v3649, 0.0
  %v3770 = vmax.f32 %v3650, 0.0
  %v3771 = vmax.f32 %v3651, 0.0
  %v3772 = vmax.f32 %v3652, 0.0
  %v3773 = vmax.f32 %v3653, 0.0
  %v3774 = vmax.f32 %v3654, 0.0
  %v3775 = vmax.f32 %v3655, 0.0
  %v3776 = vmax.f32 %v3656, 0.0
  %v3777 = vmax.f32 %v3657, 0.0
  %v3778 = vmax.f32 %v3658, 0.0
  %v3779 = vmax.f32 %v3659, 0.0
  %v3780 = vmax.f32 %v3660, 0.0
  %v3781 = vmax.f32 %v3661, 0.0
  %v3782 = vmax.f32 %v3662, 0.0
  %v3783 = vmax.f32 %v3663, 0.0
  %v3784 = vmax.f32 %v3664, 0.0
  %v3785 = vmax.f32 %v3665, 0.0
  %v3786 = vmax.f32 %v3666, 0.0
  %v3787 = vmax.f32 %v3667, 0.0
  %v3788 = vmax.f32 %v3668, 0.0
  %v3789 = vmax.f32 %v3669, 0.0
  %v3790 = vmax.f32 %v3670, 0.0
  %v3791 = vmax.f32 %v3671, 0.0
  %v3792 = vmax.f32 %v3672, 0.0
  %v3793 = vmax.f32 %v3673, 0.0
  %v3794 = vmax.f32 %v3674, 0.0
  %v3795 = vmax.f32 %v3675, 0.0
  %v3796 = vmax.f32 %v3676, 0.0
  %v3797 = vmax.f32 %v3677, 0.0
  %v3798 = vmax.f32 %v3678, 0.0
  %v3799 = vmax.f32 %v3679, 0.0
  %v3800 = vmax.f32 %v3680, 0.0
  %v3801 = vmax.f32 %v3681, 0.0
  %v3802 = vmax.f32 %v3682, 0.0
  %v3803 = vmax.f32 %v3683, 0.0
  %v3804 = vmax.f32 %v3684, 0.0
  %v3805 = vmax.f32 %v3685, 0.0
  %v3806 = vmax.f32 %v3686, 0.0
  %v3807 = vmax.f32 %v3687, 0.0
  %v3808 = vmax.f32 %v3688, 0.0
  %v3809 = vmax.f32 %v3689, 0.0
  %v3810 = vmax.f32 %v3690, 0.0
  %v3811 = vld [vmem:[%s3] sm:$0xff]
  %v3812 = vld [vmem:[%s3 + $0x8] sm:$0xff]
  %v3813 = vld [vmem:[%s3 + $0x10] sm:$0xff]
  %v3814 = vld [vmem:[%s3 + $0x18] sm:$0xff]
  %v3815 = vld [vmem:[%s3 + $0x20] sm:$0xff]
  %v3816 = vld [vmem:[%s3 + $0x28] sm:$0xff]
  %v3817 = vld [vmem:[%s3 + $0x30] sm:$0xff]
  %v3818 = vld [vmem:[%s3 + $0x38] sm:$0xff]
  %v3819 = vld [vmem:[%s3 + $0x40] sm:$0xff]
  %v3820 = vld [vmem:[%s3 + $0x48] sm:$0xff]
  %v3821 = vld [vmem:[%s3 + $0x50] sm:$0xff]
  %v3822 = vld [vmem:[%s3 + $0x58] sm:$0xff]
  %v3823 = vld [vmem:[%s3 + $0x60] sm:$0xff]
  %v3824 = vld [vmem:[%s3 + $0x68] sm:$0xff]
  %v3825 = vld [vmem:[%s3 + $0x70] sm:$0xff]
  %v3826 = vmul.f32 %v3691, %v3811
  %v3827 = vmul.f32 %v3692, %v3812
  %v3828 = vmul.f32 %v3693, %v3813
  %v3829 = vmul.f32 %v3694, %v3814
  %v3830 = vmul.f32 %v3695, %v3815
  %v3831 = vmul.f32 %v3696, %v3816
  %v3832 = vmul.f32 %v3697, %v3817
  %v3833 = vmul.f32 %v3698, %v3818
  %v3834 = vmul.f32 %v3699, %v3819
  %v3835 = vmul.f32 %v3700, %v3820
  %v3836 = vmul.f32 %v3701, %v3821
  %v3837 = vmul.f32 %v3702, %v3822
  %v3838 = vmul.f32 %v3703, %v3823
  %v3839 = vmul.f32 %v3704, %v3824
  %v3840 = vmul.f32 %v3705, %v3825
  %v3841 = vmul.f32 %v3706, %v3811
  %v3842 = vmul.f32 %v3707, %v3812
  %v3843 = vmul.f32 %v3708, %v3813
  %v3844 = vmul.f32 %v3709, %v3814
  %v3845 = vmul.f32 %v3710, %v3815
  %v3846 = vmul.f32 %v3711, %v3816
  %v3847 = vmul.f32 %v3712, %v3817
  %v3848 = vmul.f32 %v3713, %v3818
  %v3849 = vmul.f32 %v3714, %v3819
  %v3850 = vmul.f32 %v3715, %v3820
  %v3851 = vmul.f32 %v3716, %v3821
  %v3852 = vmul.f32 %v3717, %v3822
  %v3853 = vmul.f32 %v3718, %v3823
  %v3854 = vmul.f32 %v3719, %v3824
  %v3855 = vmul.f32 %v3720, %v3825
  %v3856 = vmul.f32 %v3721, %v3811
  %v3857 = vmul.f32 %v3722, %v3812
  %v3858 = vmul.f32 %v3723, %v3813
  %v3859 = vmul.f32 %v3724, %v3814
  %v3860 = vmul.f32 %v3725, %v3815
  %v3861 = vmul.f32 %v3726, %v3816
  %v3862 = vmul.f32 %v3727, %v3817
  %v3863 = vmul.f32 %v3728, %v3818
  %v3864 = vmul.f32 %v3729, %v3819
  %v3865 = vmul.f32 %v3730, %v3820
  %v3866 = vmul.f32 %v3731, %v3821
  %v3867 = vmul.f32 %v3732, %v3822
  %v3868 = vmul.f32 %v3733, %v3823
  %v3869 = vmul.f32 %v3734, %v3824
  %v3870 = vmul.f32 %v3735, %v3825
  %v3871 = vmul.f32 %v3736, %v3811
  %v3872 = vmul.f32 %v3737, %v3812
  %v3873 = vmul.f32 %v3738, %v3813
  %v3874 = vmul.f32 %v3739, %v3814
  %v3875 = vmul.f32 %v3740, %v3815
  %v3876 = vmul.f32 %v3741, %v3816
  %v3877 = vmul.f32 %v3742, %v3817
  %v3878 = vmul.f32 %v3743, %v3818
  %v3879 = vmul.f32 %v3744, %v3819
  %v3880 = vmul.f32 %v3745, %v3820
  %v3881 = vmul.f32 %v3746, %v3821
  %v3882 = vmul.f32 %v3747, %v3822
  %v3883 = vmul.f32 %v3748, %v3823
  %v3884 = vmul.f32 %v3749, %v3824
  %v3885 = vmul.f32 %v3750, %v3825
  %v3886 = vmul.f32 %v3751, %v3811
  %v3887 = vmul.f32 %v3752, %v3812
  %v3888 = vmul.f32 %v3753, %v3813
  %v3889 = vmul.f32 %v3754, %v3814
  %v3890 = vmul.f32 %v3755, %v3815
  %v3891 = vmul.f32 %v3756, %v3816
  %v3892 = vmul.f32 %v3757, %v3817
  %v3893 = vmul.f32 %v3758, %v3818
  %v3894 = vmul.f32 %v3759, %v3819
  %v3895 = vmul.f32 %v3760, %v3820
  %v3896 = vmul.f32 %v3761, %v3821
  %v3897 = vmul.f32 %v3762, %v3822
  %v3898 = vmul.f32 %v3763, %v3823
  %v3899 = vmul.f32 %v3764, %v3824
  %v3900 = vmul.f32 %v3765, %v3825
  %v3901 = vmul.f32 %v3766, %v3811
  %v3902 = vmul.f32 %v3767, %v3812
  %v3903 = vmul.f32 %v3768, %v3813
  %v3904 = vmul.f32 %v3769, %v3814
  %v3905 = vmul.f32 %v3770, %v3815
  %v3906 = vmul.f32 %v3771, %v3816
  %v3907 = vmul.f32 %v3772, %v3817
  %v3908 = vmul.f32 %v3773, %v3818
  %v3909 = vmul.f32 %v3774, %v3819
  %v3910 = vmul.f32 %v3775, %v3820
  %v3911 = vmul.f32 %v3776, %v3821
  %v3912 = vmul.f32 %v3777, %v3822
  %v3913 = vmul.f32 %v3778, %v3823
  %v3914 = vmul.f32 %v3779, %v3824
  %v3915 = vmul.f32 %v3780, %v3825
  %v3916 = vmul.f32 %v3781, %v3811
  %v3917 = vmul.f32 %v3782, %v3812
  %v3918 = vmul.f32 %v3783, %v3813
  %v3919 = vmul.f32 %v3784, %v3814
  %v3920 = vmul.f32 %v3785, %v3815
  %v3921 = vmul.f32 %v3786, %v3816
  %v3922 = vmul.f32 %v3787, %v3817
  %v3923 = vmul.f32 %v3788, %v3818
  %v3924 = vmul.f32 %v3789, %v3819
  %v3925 = vmul.f32 %v3790, %v3820
  %v3926 = vmul.f32 %v3791, %v3821
  %v3927 = vmul.f32 %v3792, %v3822
  %v3928 = vmul.f32 %v3793, %v3823
  %v3929 = vmul.f32 %v3794, %v3824
  %v3930 = vmul.f32 %v3795, %v3825
  %v3931 = vmul.f32 %v3796, %v3811
  %v3932 = vmul.f32 %v3797, %v3812
  %v3933 = vmul.f32 %v3798, %v3813
  %v3934 = vmul.f32 %v3799, %v3814
  %v3935 = vmul.f32 %v3800, %v3815
  %v3936 = vmul.f32 %v3801, %v3816
  %v3937 = vmul.f32 %v3802, %v3817
  %v3938 = vmul.f32 %v3803, %v3818
  %v3939 = vmul.f32 %v3804, %v3819
  %v3940 = vmul.f32 %v3805, %v3820
  %v3941 = vmul.f32 %v3806, %v3821
  %v3942 = vmul.f32 %v3807, %v3822
  %v3943 = vmul.f32 %v3808, %v3823
  %v3944 = vmul.f32 %v3809, %v3824
  %v3945 = vmul.f32 %v3810, %v3825
  %v3946 = vrot.slane %v3826, 4
  %v3947 = vmax.f32 %v3826, %v3946
  %v3948 = vrot.slane %v3947, 2
  %v3949 = vmax.f32 %v3947, %v3948
  %v3950 = vrot.slane %v3949, 1
  %v3951 = vmax.f32 %v3949, %v3950
  %v3952 = vrot.slane %v3827, 4
  %v3953 = vmax.f32 %v3827, %v3952
  %v3954 = vrot.slane %v3953, 2
  %v3955 = vmax.f32 %v3953, %v3954
  %v3956 = vrot.slane %v3955, 1
  %v3957 = vmax.f32 %v3955, %v3956
  %v3958 = vrot.slane %v3828, 4
  %v3959 = vmax.f32 %v3828, %v3958
  %v3960 = vrot.slane %v3959, 2
  %v3961 = vmax.f32 %v3959, %v3960
  %v3962 = vrot.slane %v3961, 1
  %v3963 = vmax.f32 %v3961, %v3962
  %v3964 = vrot.slane %v3829, 4
  %v3965 = vmax.f32 %v3829, %v3964
  %v3966 = vrot.slane %v3965, 2
  %v3967 = vmax.f32 %v3965, %v3966
  %v3968 = vrot.slane %v3967, 1
  %v3969 = vmax.f32 %v3967, %v3968
  %v3970 = vrot.slane %v3830, 4
  %v3971 = vmax.f32 %v3830, %v3970
  %v3972 = vrot.slane %v3971, 2
  %v3973 = vmax.f32 %v3971, %v3972
  %v3974 = vrot.slane %v3973, 1
  %v3975 = vmax.f32 %v3973, %v3974
  %v3976 = vrot.slane %v3831, 4
  %v3977 = vmax.f32 %v3831, %v3976
  %v3978 = vrot.slane %v3977, 2
  %v3979 = vmax.f32 %v3977, %v3978
  %v3980 = vrot.slane %v3979, 1
  %v3981 = vmax.f32 %v3979, %v3980
  %v3982 = vrot.slane %v3832, 4
  %v3983 = vmax.f32 %v3832, %v3982
  %v3984 = vrot.slane %v3983, 2
  %v3985 = vmax.f32 %v3983, %v3984
  %v3986 = vrot.slane %v3985, 1
  %v3987 = vmax.f32 %v3985, %v3986
  %v3988 = vrot.slane %v3833, 4
  %v3989 = vmax.f32 %v3833, %v3988
  %v3990 = vrot.slane %v3989, 2
  %v3991 = vmax.f32 %v3989, %v3990
  %v3992 = vrot.slane %v3991, 1
  %v3993 = vmax.f32 %v3991, %v3992
  %v3994 = vrot.slane %v3834, 4
  %v3995 = vmax.f32 %v3834, %v3994
  %v3996 = vrot.slane %v3995, 2
  %v3997 = vmax.f32 %v3995, %v3996
  %v3998 = vrot.slane %v3997, 1
  %v3999 = vmax.f32 %v3997, %v3998
  %v4000 = vrot.slane %v3835, 4
  %v4001 = vmax.f32 %v3835, %v4000
  %v4002 = vrot.slane %v4001, 2
  %v4003 = vmax.f32 %v4001, %v4002
  %v4004 = vrot.slane %v4003, 1
  %v4005 = vmax.f32 %v4003, %v4004
  %v4006 = vrot.slane %v3836, 4
  %v4007 = vmax.f32 %v3836, %v4006
  %v4008 = vrot.slane %v4007, 2
  %v4009 = vmax.f32 %v4007, %v4008
  %v4010 = vrot.slane %v4009, 1
  %v4011 = vmax.f32 %v4009, %v4010
  %v4012 = vrot.slane %v3837, 4
  %v4013 = vmax.f32 %v3837, %v4012
  %v4014 = vrot.slane %v4013, 2
  %v4015 = vmax.f32 %v4013, %v4014
  %v4016 = vrot.slane %v4015, 1
  %v4017 = vmax.f32 %v4015, %v4016
  %v4018 = vrot.slane %v3838, 4
  %v4019 = vmax.f32 %v3838, %v4018
  %v4020 = vrot.slane %v4019, 2
  %v4021 = vmax.f32 %v4019, %v4020
  %v4022 = vrot.slane %v4021, 1
  %v4023 = vmax.f32 %v4021, %v4022
  %v4024 = vrot.slane %v3839, 4
  %v4025 = vmax.f32 %v3839, %v4024
  %v4026 = vrot.slane %v4025, 2
  %v4027 = vmax.f32 %v4025, %v4026
  %v4028 = vrot.slane %v4027, 1
  %v4029 = vmax.f32 %v4027, %v4028
  %v4030 = vrot.slane %v3840, 4
  %v4031 = vmax.f32 %v3840, %v4030
  %v4032 = vrot.slane %v4031, 2
  %v4033 = vmax.f32 %v4031, %v4032
  %v4034 = vrot.slane %v4033, 1
  %v4035 = vmax.f32 %v4033, %v4034
  %v4036 = vrot.slane %v3841, 4
  %v4037 = vmax.f32 %v3841, %v4036
  %v4038 = vrot.slane %v4037, 2
  %v4039 = vmax.f32 %v4037, %v4038
  %v4040 = vrot.slane %v4039, 1
  %v4041 = vmax.f32 %v4039, %v4040
  %v4042 = vrot.slane %v3842, 4
  %v4043 = vmax.f32 %v3842, %v4042
  %v4044 = vrot.slane %v4043, 2
  %v4045 = vmax.f32 %v4043, %v4044
  %v4046 = vrot.slane %v4045, 1
  %v4047 = vmax.f32 %v4045, %v4046
  %v4048 = vrot.slane %v3843, 4
  %v4049 = vmax.f32 %v3843, %v4048
  %v4050 = vrot.slane %v4049, 2
  %v4051 = vmax.f32 %v4049, %v4050
  %v4052 = vrot.slane %v4051, 1
  %v4053 = vmax.f32 %v4051, %v4052
  %v4054 = vrot.slane %v3844, 4
  %v4055 = vmax.f32 %v3844, %v4054
  %v4056 = vrot.slane %v4055, 2
  %v4057 = vmax.f32 %v4055, %v4056
  %v4058 = vrot.slane %v4057, 1
  %v4059 = vmax.f32 %v4057, %v4058
  %v4060 = vrot.slane %v3845, 4
  %v4061 = vmax.f32 %v3845, %v4060
  %v4062 = vrot.slane %v4061, 2
  %v4063 = vmax.f32 %v4061, %v4062
  %v4064 = vrot.slane %v4063, 1
  %v4065 = vmax.f32 %v4063, %v4064
  %v4066 = vrot.slane %v3846, 4
  %v4067 = vmax.f32 %v3846, %v4066
  %v4068 = vrot.slane %v4067, 2
  %v4069 = vmax.f32 %v4067, %v4068
  %v4070 = vrot.slane %v4069, 1
  %v4071 = vmax.f32 %v4069, %v4070
  %v4072 = vrot.slane %v3847, 4
  %v4073 = vmax.f32 %v3847, %v4072
  %v4074 = vrot.slane %v4073, 2
  %v4075 = vmax.f32 %v4073, %v4074
  %v4076 = vrot.slane %v4075, 1
  %v4077 = vmax.f32 %v4075, %v4076
  %v4078 = vrot.slane %v3848, 4
  %v4079 = vmax.f32 %v3848, %v4078
  %v4080 = vrot.slane %v4079, 2
  %v4081 = vmax.f32 %v4079, %v4080
  %v4082 = vrot.slane %v4081, 1
  %v4083 = vmax.f32 %v4081, %v4082
  %v4084 = vrot.slane %v3849, 4
  %v4085 = vmax.f32 %v3849, %v4084
  %v4086 = vrot.slane %v4085, 2
  %v4087 = vmax.f32 %v4085, %v4086
  %v4088 = vrot.slane %v4087, 1
  %v4089 = vmax.f32 %v4087, %v4088
  %v4090 = vrot.slane %v3850, 4
  %v4091 = vmax.f32 %v3850, %v4090
  %v4092 = vrot.slane %v4091, 2
  %v4093 = vmax.f32 %v4091, %v4092
  %v4094 = vrot.slane %v4093, 1
  %v4095 = vmax.f32 %v4093, %v4094
  %v4096 = vrot.slane %v3851, 4
  %v4097 = vmax.f32 %v3851, %v4096
  %v4098 = vrot.slane %v4097, 2
  %v4099 = vmax.f32 %v4097, %v4098
  %v4100 = vrot.slane %v4099, 1
  %v4101 = vmax.f32 %v4099, %v4100
  %v4102 = vrot.slane %v3852, 4
  %v4103 = vmax.f32 %v3852, %v4102
  %v4104 = vrot.slane %v4103, 2
  %v4105 = vmax.f32 %v4103, %v4104
  %v4106 = vrot.slane %v4105, 1
  %v4107 = vmax.f32 %v4105, %v4106
  %v4108 = vrot.slane %v3853, 4
  %v4109 = vmax.f32 %v3853, %v4108
  %v4110 = vrot.slane %v4109, 2
  %v4111 = vmax.f32 %v4109, %v4110
  %v4112 = vrot.slane %v4111, 1
  %v4113 = vmax.f32 %v4111, %v4112
  %v4114 = vrot.slane %v3854, 4
  %v4115 = vmax.f32 %v3854, %v4114
  %v4116 = vrot.slane %v4115, 2
  %v4117 = vmax.f32 %v4115, %v4116
  %v4118 = vrot.slane %v4117, 1
  %v4119 = vmax.f32 %v4117, %v4118
  %v4120 = vrot.slane %v3855, 4
  %v4121 = vmax.f32 %v3855, %v4120
  %v4122 = vrot.slane %v4121, 2
  %v4123 = vmax.f32 %v4121, %v4122
  %v4124 = vrot.slane %v4123, 1
  %v4125 = vmax.f32 %v4123, %v4124
  %v4126 = vrot.slane %v3856, 4
  %v4127 = vmax.f32 %v3856, %v4126
  %v4128 = vrot.slane %v4127, 2
  %v4129 = vmax.f32 %v4127, %v4128
  %v4130 = vrot.slane %v4129, 1
  %v4131 = vmax.f32 %v4129, %v4130
  %v4132 = vrot.slane %v3857, 4
  %v4133 = vmax.f32 %v3857, %v4132
  %v4134 = vrot.slane %v4133, 2
  %v4135 = vmax.f32 %v4133, %v4134
  %v4136 = vrot.slane %v4135, 1
  %v4137 = vmax.f32 %v4135, %v4136
  %v4138 = vrot.slane %v3858, 4
  %v4139 = vmax.f32 %v3858, %v4138
  %v4140 = vrot.slane %v4139, 2
  %v4141 = vmax.f32 %v4139, %v4140
  %v4142 = vrot.slane %v4141, 1
  %v4143 = vmax.f32 %v4141, %v4142
  %v4144 = vrot.slane %v3859, 4
  %v4145 = vmax.f32 %v3859, %v4144
  %v4146 = vrot.slane %v4145, 2
  %v4147 = vmax.f32 %v4145, %v4146
  %v4148 = vrot.slane %v4147, 1
  %v4149 = vmax.f32 %v4147, %v4148
  %v4150 = vrot.slane %v3860, 4
  %v4151 = vmax.f32 %v3860, %v4150
  %v4152 = vrot.slane %v4151, 2
  %v4153 = vmax.f32 %v4151, %v4152
  %v4154 = vrot.slane %v4153, 1
  %v4155 = vmax.f32 %v4153, %v4154
  %v4156 = vrot.slane %v3861, 4
  %v4157 = vmax.f32 %v3861, %v4156
  %v4158 = vrot.slane %v4157, 2
  %v4159 = vmax.f32 %v4157, %v4158
  %v4160 = vrot.slane %v4159, 1
  %v4161 = vmax.f32 %v4159, %v4160
  %v4162 = vrot.slane %v3862, 4
  %v4163 = vmax.f32 %v3862, %v4162
  %v4164 = vrot.slane %v4163, 2
  %v4165 = vmax.f32 %v4163, %v4164
  %v4166 = vrot.slane %v4165, 1
  %v4167 = vmax.f32 %v4165, %v4166
  %v4168 = vrot.slane %v3863, 4
  %v4169 = vmax.f32 %v3863, %v4168
  %v4170 = vrot.slane %v4169, 2
  %v4171 = vmax.f32 %v4169, %v4170
  %v4172 = vrot.slane %v4171, 1
  %v4173 = vmax.f32 %v4171, %v4172
  %v4174 = vrot.slane %v3864, 4
  %v4175 = vmax.f32 %v3864, %v4174
  %v4176 = vrot.slane %v4175, 2
  %v4177 = vmax.f32 %v4175, %v4176
  %v4178 = vrot.slane %v4177, 1
  %v4179 = vmax.f32 %v4177, %v4178
  %v4180 = vrot.slane %v3865, 4
  %v4181 = vmax.f32 %v3865, %v4180
  %v4182 = vrot.slane %v4181, 2
  %v4183 = vmax.f32 %v4181, %v4182
  %v4184 = vrot.slane %v4183, 1
  %v4185 = vmax.f32 %v4183, %v4184
  %v4186 = vrot.slane %v3866, 4
  %v4187 = vmax.f32 %v3866, %v4186
  %v4188 = vrot.slane %v4187, 2
  %v4189 = vmax.f32 %v4187, %v4188
  %v4190 = vrot.slane %v4189, 1
  %v4191 = vmax.f32 %v4189, %v4190
  %v4192 = vrot.slane %v3867, 4
  %v4193 = vmax.f32 %v3867, %v4192
  %v4194 = vrot.slane %v4193, 2
  %v4195 = vmax.f32 %v4193, %v4194
  %v4196 = vrot.slane %v4195, 1
  %v4197 = vmax.f32 %v4195, %v4196
  %v4198 = vrot.slane %v3868, 4
  %v4199 = vmax.f32 %v3868, %v4198
  %v4200 = vrot.slane %v4199, 2
  %v4201 = vmax.f32 %v4199, %v4200
  %v4202 = vrot.slane %v4201, 1
  %v4203 = vmax.f32 %v4201, %v4202
  %v4204 = vrot.slane %v3869, 4
  %v4205 = vmax.f32 %v3869, %v4204
  %v4206 = vrot.slane %v4205, 2
  %v4207 = vmax.f32 %v4205, %v4206
  %v4208 = vrot.slane %v4207, 1
  %v4209 = vmax.f32 %v4207, %v4208
  %v4210 = vrot.slane %v3870, 4
  %v4211 = vmax.f32 %v3870, %v4210
  %v4212 = vrot.slane %v4211, 2
  %v4213 = vmax.f32 %v4211, %v4212
  %v4214 = vrot.slane %v4213, 1
  %v4215 = vmax.f32 %v4213, %v4214
  %v4216 = vrot.slane %v3871, 4
  %v4217 = vmax.f32 %v3871, %v4216
  %v4218 = vrot.slane %v4217, 2
  %v4219 = vmax.f32 %v4217, %v4218
  %v4220 = vrot.slane %v4219, 1
  %v4221 = vmax.f32 %v4219, %v4220
  %v4222 = vrot.slane %v3872, 4
  %v4223 = vmax.f32 %v3872, %v4222
  %v4224 = vrot.slane %v4223, 2
  %v4225 = vmax.f32 %v4223, %v4224
  %v4226 = vrot.slane %v4225, 1
  %v4227 = vmax.f32 %v4225, %v4226
  %v4228 = vrot.slane %v3873, 4
  %v4229 = vmax.f32 %v3873, %v4228
  %v4230 = vrot.slane %v4229, 2
  %v4231 = vmax.f32 %v4229, %v4230
  %v4232 = vrot.slane %v4231, 1
  %v4233 = vmax.f32 %v4231, %v4232
  %v4234 = vrot.slane %v3874, 4
  %v4235 = vmax.f32 %v3874, %v4234
  %v4236 = vrot.slane %v4235, 2
  %v4237 = vmax.f32 %v4235, %v4236
  %v4238 = vrot.slane %v4237, 1
  %v4239 = vmax.f32 %v4237, %v4238
  %v4240 = vrot.slane %v3875, 4
  %v4241 = vmax.f32 %v3875, %v4240
  %v4242 = vrot.slane %v4241, 2
  %v4243 = vmax.f32 %v4241, %v4242
  %v4244 = vrot.slane %v4243, 1
  %v4245 = vmax.f32 %v4243, %v4244
  %v4246 = vrot.slane %v3876, 4
  %v4247 = vmax.f32 %v3876, %v4246
  %v4248 = vrot.slane %v4247, 2
  %v4249 = vmax.f32 %v4247, %v4248
  %v4250 = vrot.slane %v4249, 1
  %v4251 = vmax.f32 %v4249, %v4250
  %v4252 = vrot.slane %v3877, 4
  %v4253 = vmax.f32 %v3877, %v4252
  %v4254 = vrot.slane %v4253, 2
  %v4255 = vmax.f32 %v4253, %v4254
  %v4256 = vrot.slane %v4255, 1
  %v4257 = vmax.f32 %v4255, %v4256
  %v4258 = vrot.slane %v3878, 4
  %v4259 = vmax.f32 %v3878, %v4258
  %v4260 = vrot.slane %v4259, 2
  %v4261 = vmax.f32 %v4259, %v4260
  %v4262 = vrot.slane %v4261, 1
  %v4263 = vmax.f32 %v4261, %v4262
  %v4264 = vrot.slane %v3879, 4
  %v4265 = vmax.f32 %v3879, %v4264
  %v4266 = vrot.slane %v4265, 2
  %v4267 = vmax.f32 %v4265, %v4266
  %v4268 = vrot.slane %v4267, 1
  %v4269 = vmax.f32 %v4267, %v4268
  %v4270 = vrot.slane %v3880, 4
  %v4271 = vmax.f32 %v3880, %v4270
  %v4272 = vrot.slane %v4271, 2
  %v4273 = vmax.f32 %v4271, %v4272
  %v4274 = vrot.slane %v4273, 1
  %v4275 = vmax.f32 %v4273, %v4274
  %v4276 = vrot.slane %v3881, 4
  %v4277 = vmax.f32 %v3881, %v4276
  %v4278 = vrot.slane %v4277, 2
  %v4279 = vmax.f32 %v4277, %v4278
  %v4280 = vrot.slane %v4279, 1
  %v4281 = vmax.f32 %v4279, %v4280
  %v4282 = vrot.slane %v3882, 4
  %v4283 = vmax.f32 %v3882, %v4282
  %v4284 = vrot.slane %v4283, 2
  %v4285 = vmax.f32 %v4283, %v4284
  %v4286 = vrot.slane %v4285, 1
  %v4287 = vmax.f32 %v4285, %v4286
  %v4288 = vrot.slane %v3883, 4
  %v4289 = vmax.f32 %v3883, %v4288
  %v4290 = vrot.slane %v4289, 2
  %v4291 = vmax.f32 %v4289, %v4290
  %v4292 = vrot.slane %v4291, 1
  %v4293 = vmax.f32 %v4291, %v4292
  %v4294 = vrot.slane %v3884, 4
  %v4295 = vmax.f32 %v3884, %v4294
  %v4296 = vrot.slane %v4295, 2
  %v4297 = vmax.f32 %v4295, %v4296
  %v4298 = vrot.slane %v4297, 1
  %v4299 = vmax.f32 %v4297, %v4298
  %v4300 = vrot.slane %v3885, 4
  %v4301 = vmax.f32 %v3885, %v4300
  %v4302 = vrot.slane %v4301, 2
  %v4303 = vmax.f32 %v4301, %v4302
  %v4304 = vrot.slane %v4303, 1
  %v4305 = vmax.f32 %v4303, %v4304
  %v4306 = vrot.slane %v3886, 4
  %v4307 = vmax.f32 %v3886, %v4306
  %v4308 = vrot.slane %v4307, 2
  %v4309 = vmax.f32 %v4307, %v4308
  %v4310 = vrot.slane %v4309, 1
  %v4311 = vmax.f32 %v4309, %v4310
  %v4312 = vrot.slane %v3887, 4
  %v4313 = vmax.f32 %v3887, %v4312
  %v4314 = vrot.slane %v4313, 2
  %v4315 = vmax.f32 %v4313, %v4314
  %v4316 = vrot.slane %v4315, 1
  %v4317 = vmax.f32 %v4315, %v4316
  %v4318 = vrot.slane %v3888, 4
  %v4319 = vmax.f32 %v3888, %v4318
  %v4320 = vrot.slane %v4319, 2
  %v4321 = vmax.f32 %v4319, %v4320
  %v4322 = vrot.slane %v4321, 1
  %v4323 = vmax.f32 %v4321, %v4322
  %v4324 = vrot.slane %v3889, 4
  %v4325 = vmax.f32 %v3889, %v4324
  %v4326 = vrot.slane %v4325, 2
  %v4327 = vmax.f32 %v4325, %v4326
  %v4328 = vrot.slane %v4327, 1
  %v4329 = vmax.f32 %v4327, %v4328
  %v4330 = vrot.slane %v3890, 4
  %v4331 = vmax.f32 %v3890, %v4330
  %v4332 = vrot.slane %v4331, 2
  %v4333 = vmax.f32 %v4331, %v4332
  %v4334 = vrot.slane %v4333, 1
  %v4335 = vmax.f32 %v4333, %v4334
  %v4336 = vrot.slane %v3891, 4
  %v4337 = vmax.f32 %v3891, %v4336
  %v4338 = vrot.slane %v4337, 2
  %v4339 = vmax.f32 %v4337, %v4338
  %v4340 = vrot.slane %v4339, 1
  %v4341 = vmax.f32 %v4339, %v4340
  %v4342 = vrot.slane %v3892, 4
  %v4343 = vmax.f32 %v3892, %v4342
  %v4344 = vrot.slane %v4343, 2
  %v4345 = vmax.f32 %v4343, %v4344
  %v4346 = vrot.slane %v4345, 1
  %v4347 = vmax.f32 %v4345, %v4346
  %v4348 = vrot.slane %v3893, 4
  %v4349 = vmax.f32 %v3893, %v4348
  %v4350 = vrot.slane %v4349, 2
  %v4351 = vmax.f32 %v4349, %v4350
  %v4352 = vrot.slane %v4351, 1
  %v4353 = vmax.f32 %v4351, %v4352
  %v4354 = vrot.slane %v3894, 4
  %v4355 = vmax.f32 %v3894, %v4354
  %v4356 = vrot.slane %v4355, 2
  %v4357 = vmax.f32 %v4355, %v4356
  %v4358 = vrot.slane %v4357, 1
  %v4359 = vmax.f32 %v4357, %v4358
  %v4360 = vrot.slane %v3895, 4
  %v4361 = vmax.f32 %v3895, %v4360
  %v4362 = vrot.slane %v4361, 2
  %v4363 = vmax.f32 %v4361, %v4362
  %v4364 = vrot.slane %v4363, 1
  %v4365 = vmax.f32 %v4363, %v4364
  %v4366 = vrot.slane %v3896, 4
  %v4367 = vmax.f32 %v3896, %v4366
  %v4368 = vrot.slane %v4367, 2
  %v4369 = vmax.f32 %v4367, %v4368
  %v4370 = vrot.slane %v4369, 1
  %v4371 = vmax.f32 %v4369, %v4370
  %v4372 = vrot.slane %v3897, 4
  %v4373 = vmax.f32 %v3897, %v4372
  %v4374 = vrot.slane %v4373, 2
  %v4375 = vmax.f32 %v4373, %v4374
  %v4376 = vrot.slane %v4375, 1
  %v4377 = vmax.f32 %v4375, %v4376
  %v4378 = vrot.slane %v3898, 4
  %v4379 = vmax.f32 %v3898, %v4378
  %v4380 = vrot.slane %v4379, 2
  %v4381 = vmax.f32 %v4379, %v4380
  %v4382 = vrot.slane %v4381, 1
  %v4383 = vmax.f32 %v4381, %v4382
  %v4384 = vrot.slane %v3899, 4
  %v4385 = vmax.f32 %v3899, %v4384
  %v4386 = vrot.slane %v4385, 2
  %v4387 = vmax.f32 %v4385, %v4386
  %v4388 = vrot.slane %v4387, 1
  %v4389 = vmax.f32 %v4387, %v4388
  %v4390 = vrot.slane %v3900, 4
  %v4391 = vmax.f32 %v3900, %v4390
  %v4392 = vrot.slane %v4391, 2
  %v4393 = vmax.f32 %v4391, %v4392
  %v4394 = vrot.slane %v4393, 1
  %v4395 = vmax.f32 %v4393, %v4394
  %v4396 = vrot.slane %v3901, 4
  %v4397 = vmax.f32 %v3901, %v4396
  %v4398 = vrot.slane %v4397, 2
  %v4399 = vmax.f32 %v4397, %v4398
  %v4400 = vrot.slane %v4399, 1
  %v4401 = vmax.f32 %v4399, %v4400
  %v4402 = vrot.slane %v3902, 4
  %v4403 = vmax.f32 %v3902, %v4402
  %v4404 = vrot.slane %v4403, 2
  %v4405 = vmax.f32 %v4403, %v4404
  %v4406 = vrot.slane %v4405, 1
  %v4407 = vmax.f32 %v4405, %v4406
  %v4408 = vrot.slane %v3903, 4
  %v4409 = vmax.f32 %v3903, %v4408
  %v4410 = vrot.slane %v4409, 2
  %v4411 = vmax.f32 %v4409, %v4410
  %v4412 = vrot.slane %v4411, 1
  %v4413 = vmax.f32 %v4411, %v4412
  %v4414 = vrot.slane %v3904, 4
  %v4415 = vmax.f32 %v3904, %v4414
  %v4416 = vrot.slane %v4415, 2
  %v4417 = vmax.f32 %v4415, %v4416
  %v4418 = vrot.slane %v4417, 1
  %v4419 = vmax.f32 %v4417, %v4418
  %v4420 = vrot.slane %v3905, 4
  %v4421 = vmax.f32 %v3905, %v4420
  %v4422 = vrot.slane %v4421, 2
  %v4423 = vmax.f32 %v4421, %v4422
  %v4424 = vrot.slane %v4423, 1
  %v4425 = vmax.f32 %v4423, %v4424
  %v4426 = vrot.slane %v3906, 4
  %v4427 = vmax.f32 %v3906, %v4426
  %v4428 = vrot.slane %v4427, 2
  %v4429 = vmax.f32 %v4427, %v4428
  %v4430 = vrot.slane %v4429, 1
  %v4431 = vmax.f32 %v4429, %v4430
  %v4432 = vrot.slane %v3907, 4
  %v4433 = vmax.f32 %v3907, %v4432
  %v4434 = vrot.slane %v4433, 2
  %v4435 = vmax.f32 %v4433, %v4434
  %v4436 = vrot.slane %v4435, 1
  %v4437 = vmax.f32 %v4435, %v4436
  %v4438 = vrot.slane %v3908, 4
  %v4439 = vmax.f32 %v3908, %v4438
  %v4440 = vrot.slane %v4439, 2
  %v4441 = vmax.f32 %v4439, %v4440
  %v4442 = vrot.slane %v4441, 1
  %v4443 = vmax.f32 %v4441, %v4442
  %v4444 = vrot.slane %v3909, 4
  %v4445 = vmax.f32 %v3909, %v4444
  %v4446 = vrot.slane %v4445, 2
  %v4447 = vmax.f32 %v4445, %v4446
  %v4448 = vrot.slane %v4447, 1
  %v4449 = vmax.f32 %v4447, %v4448
  %v4450 = vrot.slane %v3910, 4
  %v4451 = vmax.f32 %v3910, %v4450
  %v4452 = vrot.slane %v4451, 2
  %v4453 = vmax.f32 %v4451, %v4452
  %v4454 = vrot.slane %v4453, 1
  %v4455 = vmax.f32 %v4453, %v4454
  %v4456 = vrot.slane %v3911, 4
  %v4457 = vmax.f32 %v3911, %v4456
  %v4458 = vrot.slane %v4457, 2
  %v4459 = vmax.f32 %v4457, %v4458
  %v4460 = vrot.slane %v4459, 1
  %v4461 = vmax.f32 %v4459, %v4460
  %v4462 = vrot.slane %v3912, 4
  %v4463 = vmax.f32 %v3912, %v4462
  %v4464 = vrot.slane %v4463, 2
  %v4465 = vmax.f32 %v4463, %v4464
  %v4466 = vrot.slane %v4465, 1
  %v4467 = vmax.f32 %v4465, %v4466
  %v4468 = vrot.slane %v3913, 4
  %v4469 = vmax.f32 %v3913, %v4468
  %v4470 = vrot.slane %v4469, 2
  %v4471 = vmax.f32 %v4469, %v4470
  %v4472 = vrot.slane %v4471, 1
  %v4473 = vmax.f32 %v4471, %v4472
  %v4474 = vrot.slane %v3914, 4
  %v4475 = vmax.f32 %v3914, %v4474
  %v4476 = vrot.slane %v4475, 2
  %v4477 = vmax.f32 %v4475, %v4476
  %v4478 = vrot.slane %v4477, 1
  %v4479 = vmax.f32 %v4477, %v4478
  %v4480 = vrot.slane %v3915, 4
  %v4481 = vmax.f32 %v3915, %v4480
  %v4482 = vrot.slane %v4481, 2
  %v4483 = vmax.f32 %v4481, %v4482
  %v4484 = vrot.slane %v4483, 1
  %v4485 = vmax.f32 %v4483, %v4484
  %v4486 = vrot.slane %v3916, 4
  %v4487 = vmax.f32 %v3916, %v4486
  %v4488 = vrot.slane %v4487, 2
  %v4489 = vmax.f32 %v4487, %v4488
  %v4490 = vrot.slane %v4489, 1
  %v4491 = vmax.f32 %v4489, %v4490
  %v4492 = vrot.slane %v3917, 4
  %v4493 = vmax.f32 %v3917, %v4492
  %v4494 = vrot.slane %v4493, 2
  %v4495 = vmax.f32 %v4493, %v4494
  %v4496 = vrot.slane %v4495, 1
  %v4497 = vmax.f32 %v4495, %v4496
  %v4498 = vrot.slane %v3918, 4
  %v4499 = vmax.f32 %v3918, %v4498
  %v4500 = vrot.slane %v4499, 2
  %v4501 = vmax.f32 %v4499, %v4500
  %v4502 = vrot.slane %v4501, 1
  %v4503 = vmax.f32 %v4501, %v4502
  %v4504 = vrot.slane %v3919, 4
  %v4505 = vmax.f32 %v3919, %v4504
  %v4506 = vrot.slane %v4505, 2
  %v4507 = vmax.f32 %v4505, %v4506
  %v4508 = vrot.slane %v4507, 1
  %v4509 = vmax.f32 %v4507, %v4508
  %v4510 = vrot.slane %v3920, 4
  %v4511 = vmax.f32 %v3920, %v4510
  %v4512 = vrot.slane %v4511, 2
  %v4513 = vmax.f32 %v4511, %v4512
  %v4514 = vrot.slane %v4513, 1
  %v4515 = vmax.f32 %v4513, %v4514
  %v4516 = vrot.slane %v3921, 4
  %v4517 = vmax.f32 %v3921, %v4516
  %v4518 = vrot.slane %v4517, 2
  %v4519 = vmax.f32 %v4517, %v4518
  %v4520 = vrot.slane %v4519, 1
  %v4521 = vmax.f32 %v4519, %v4520
  %v4522 = vrot.slane %v3922, 4
  %v4523 = vmax.f32 %v3922, %v4522
  %v4524 = vrot.slane %v4523, 2
  %v4525 = vmax.f32 %v4523, %v4524
  %v4526 = vrot.slane %v4525, 1
  %v4527 = vmax.f32 %v4525, %v4526
  %v4528 = vrot.slane %v3923, 4
  %v4529 = vmax.f32 %v3923, %v4528
  %v4530 = vrot.slane %v4529, 2
  %v4531 = vmax.f32 %v4529, %v4530
  %v4532 = vrot.slane %v4531, 1
  %v4533 = vmax.f32 %v4531, %v4532
  %v4534 = vrot.slane %v3924, 4
  %v4535 = vmax.f32 %v3924, %v4534
  %v4536 = vrot.slane %v4535, 2
  %v4537 = vmax.f32 %v4535, %v4536
  %v4538 = vrot.slane %v4537, 1
  %v4539 = vmax.f32 %v4537, %v4538
  %v4540 = vrot.slane %v3925, 4
  %v4541 = vmax.f32 %v3925, %v4540
  %v4542 = vrot.slane %v4541, 2
  %v4543 = vmax.f32 %v4541, %v4542
  %v4544 = vrot.slane %v4543, 1
  %v4545 = vmax.f32 %v4543, %v4544
  %v4546 = vrot.slane %v3926, 4
  %v4547 = vmax.f32 %v3926, %v4546
  %v4548 = vrot.slane %v4547, 2
  %v4549 = vmax.f32 %v4547, %v4548
  %v4550 = vrot.slane %v4549, 1
  %v4551 = vmax.f32 %v4549, %v4550
  %v4552 = vrot.slane %v3927, 4
  %v4553 = vmax.f32 %v3927, %v4552
  %v4554 = vrot.slane %v4553, 2
  %v4555 = vmax.f32 %v4553, %v4554
  %v4556 = vrot.slane %v4555, 1
  %v4557 = vmax.f32 %v4555, %v4556
  %v4558 = vrot.slane %v3928, 4
  %v4559 = vmax.f32 %v3928, %v4558
  %v4560 = vrot.slane %v4559, 2
  %v4561 = vmax.f32 %v4559, %v4560
  %v4562 = vrot.slane %v4561, 1
  %v4563 = vmax.f32 %v4561, %v4562
  %v4564 = vrot.slane %v3929, 4
  %v4565 = vmax.f32 %v3929, %v4564
  %v4566 = vrot.slane %v4565, 2
  %v4567 = vmax.f32 %v4565, %v4566
  %v4568 = vrot.slane %v4567, 1
  %v4569 = vmax.f32 %v4567, %v4568
  %v4570 = vrot.slane %v3930, 4
  %v4571 = vmax.f32 %v3930, %v4570
  %v4572 = vrot.slane %v4571, 2
  %v4573 = vmax.f32 %v4571, %v4572
  %v4574 = vrot.slane %v4573, 1
  %v4575 = vmax.f32 %v4573, %v4574
  %v4576 = vrot.slane %v3931, 4
  %v4577 = vmax.f32 %v3931, %v4576
  %v4578 = vrot.slane %v4577, 2
  %v4579 = vmax.f32 %v4577, %v4578
  %v4580 = vrot.slane %v4579, 1
  %v4581 = vmax.f32 %v4579, %v4580
  %v4582 = vrot.slane %v3932, 4
  %v4583 = vmax.f32 %v3932, %v4582
  %v4584 = vrot.slane %v4583, 2
  %v4585 = vmax.f32 %v4583, %v4584
  %v4586 = vrot.slane %v4585, 1
  %v4587 = vmax.f32 %v4585, %v4586
  %v4588 = vrot.slane %v3933, 4
  %v4589 = vmax.f32 %v3933, %v4588
  %v4590 = vrot.slane %v4589, 2
  %v4591 = vmax.f32 %v4589, %v4590
  %v4592 = vrot.slane %v4591, 1
  %v4593 = vmax.f32 %v4591, %v4592
  %v4594 = vrot.slane %v3934, 4
  %v4595 = vmax.f32 %v3934, %v4594
  %v4596 = vrot.slane %v4595, 2
  %v4597 = vmax.f32 %v4595, %v4596
  %v4598 = vrot.slane %v4597, 1
  %v4599 = vmax.f32 %v4597, %v4598
  %v4600 = vrot.slane %v3935, 4
  %v4601 = vmax.f32 %v3935, %v4600
  %v4602 = vrot.slane %v4601, 2
  %v4603 = vmax.f32 %v4601, %v4602
  %v4604 = vrot.slane %v4603, 1
  %v4605 = vmax.f32 %v4603, %v4604
  %v4606 = vrot.slane %v3936, 4
  %v4607 = vmax.f32 %v3936, %v4606
  %v4608 = vrot.slane %v4607, 2
  %v4609 = vmax.f32 %v4607, %v4608
  %v4610 = vrot.slane %v4609, 1
  %v4611 = vmax.f32 %v4609, %v4610
  %v4612 = vrot.slane %v3937, 4
  %v4613 = vmax.f32 %v3937, %v4612
  %v4614 = vrot.slane %v4613, 2
  %v4615 = vmax.f32 %v4613, %v4614
  %v4616 = vrot.slane %v4615, 1
  %v4617 = vmax.f32 %v4615, %v4616
  %v4618 = vrot.slane %v3938, 4
  %v4619 = vmax.f32 %v3938, %v4618
  %v4620 = vrot.slane %v4619, 2
  %v4621 = vmax.f32 %v4619, %v4620
  %v4622 = vrot.slane %v4621, 1
  %v4623 = vmax.f32 %v4621, %v4622
  %v4624 = vrot.slane %v3939, 4
  %v4625 = vmax.f32 %v3939, %v4624
  %v4626 = vrot.slane %v4625, 2
  %v4627 = vmax.f32 %v4625, %v4626
  %v4628 = vrot.slane %v4627, 1
  %v4629 = vmax.f32 %v4627, %v4628
  %v4630 = vrot.slane %v3940, 4
  %v4631 = vmax.f32 %v3940, %v4630
  %v4632 = vrot.slane %v4631, 2
  %v4633 = vmax.f32 %v4631, %v4632
  %v4634 = vrot.slane %v4633, 1
  %v4635 = vmax.f32 %v4633, %v4634
  %v4636 = vrot.slane %v3941, 4
  %v4637 = vmax.f32 %v3941, %v4636
  %v4638 = vrot.slane %v4637, 2
  %v4639 = vmax.f32 %v4637, %v4638
  %v4640 = vrot.slane %v4639, 1
  %v4641 = vmax.f32 %v4639, %v4640
  %v4642 = vrot.slane %v3942, 4
  %v4643 = vmax.f32 %v3942, %v4642
  %v4644 = vrot.slane %v4643, 2
  %v4645 = vmax.f32 %v4643, %v4644
  %v4646 = vrot.slane %v4645, 1
  %v4647 = vmax.f32 %v4645, %v4646
  %v4648 = vrot.slane %v3943, 4
  %v4649 = vmax.f32 %v3943, %v4648
  %v4650 = vrot.slane %v4649, 2
  %v4651 = vmax.f32 %v4649, %v4650
  %v4652 = vrot.slane %v4651, 1
  %v4653 = vmax.f32 %v4651, %v4652
  %v4654 = vrot.slane %v3944, 4
  %v4655 = vmax.f32 %v3944, %v4654
  %v4656 = vrot.slane %v4655, 2
  %v4657 = vmax.f32 %v4655, %v4656
  %v4658 = vrot.slane %v4657, 1
  %v4659 = vmax.f32 %v4657, %v4658
  %v4660 = vrot.slane %v3945, 4
  %v4661 = vmax.f32 %v3945, %v4660
  %v4662 = vrot.slane %v4661, 2
  %v4663 = vmax.f32 %v4661, %v4662
  %v4664 = vrot.slane %v4663, 1
  %v4665 = vmax.f32 %v4663, %v4664
  %v4666 = vpack.c.bf16 %v3951, %v3951
  %v4667 = vpack.c.bf16 %v3957, %v3957
  %v4668 = vpack.c.bf16 %v3963, %v3963
  %v4669 = vpack.c.bf16 %v3969, %v3969
  %v4670 = vpack.c.bf16 %v3975, %v3975
  %v4671 = vpack.c.bf16 %v3981, %v3981
  %v4672 = vpack.c.bf16 %v3987, %v3987
  %v4673 = vpack.c.bf16 %v3993, %v3993
  %v4674 = vpack.c.bf16 %v3999, %v3999
  %v4675 = vpack.c.bf16 %v4005, %v4005
  %v4676 = vpack.c.bf16 %v4011, %v4011
  %v4677 = vpack.c.bf16 %v4017, %v4017
  %v4678 = vpack.c.bf16 %v4023, %v4023
  %v4679 = vpack.c.bf16 %v4029, %v4029
  %v4680 = vpack.c.bf16 %v4035, %v4035
  %v4681 = vpack.c.bf16 %v4041, %v4041
  %v4682 = vpack.c.bf16 %v4047, %v4047
  %v4683 = vpack.c.bf16 %v4053, %v4053
  %v4684 = vpack.c.bf16 %v4059, %v4059
  %v4685 = vpack.c.bf16 %v4065, %v4065
  %v4686 = vpack.c.bf16 %v4071, %v4071
  %v4687 = vpack.c.bf16 %v4077, %v4077
  %v4688 = vpack.c.bf16 %v4083, %v4083
  %v4689 = vpack.c.bf16 %v4089, %v4089
  %v4690 = vpack.c.bf16 %v4095, %v4095
  %v4691 = vpack.c.bf16 %v4101, %v4101
  %v4692 = vpack.c.bf16 %v4107, %v4107
  %v4693 = vpack.c.bf16 %v4113, %v4113
  %v4694 = vpack.c.bf16 %v4119, %v4119
  %v4695 = vpack.c.bf16 %v4125, %v4125
  %v4696 = vpack.c.bf16 %v4131, %v4131
  %v4697 = vpack.c.bf16 %v4137, %v4137
  %v4698 = vpack.c.bf16 %v4143, %v4143
  %v4699 = vpack.c.bf16 %v4149, %v4149
  %v4700 = vpack.c.bf16 %v4155, %v4155
  %v4701 = vpack.c.bf16 %v4161, %v4161
  %v4702 = vpack.c.bf16 %v4167, %v4167
  %v4703 = vpack.c.bf16 %v4173, %v4173
  %v4704 = vpack.c.bf16 %v4179, %v4179
  %v4705 = vpack.c.bf16 %v4185, %v4185
  %v4706 = vpack.c.bf16 %v4191, %v4191
  %v4707 = vpack.c.bf16 %v4197, %v4197
  %v4708 = vpack.c.bf16 %v4203, %v4203
  %v4709 = vpack.c.bf16 %v4209, %v4209
  %v4710 = vpack.c.bf16 %v4215, %v4215
  %v4711 = vpack.c.bf16 %v4221, %v4221
  %v4712 = vpack.c.bf16 %v4227, %v4227
  %v4713 = vpack.c.bf16 %v4233, %v4233
  %v4714 = vpack.c.bf16 %v4239, %v4239
  %v4715 = vpack.c.bf16 %v4245, %v4245
  %v4716 = vpack.c.bf16 %v4251, %v4251
  %v4717 = vpack.c.bf16 %v4257, %v4257
  %v4718 = vpack.c.bf16 %v4263, %v4263
  %v4719 = vpack.c.bf16 %v4269, %v4269
  %v4720 = vpack.c.bf16 %v4275, %v4275
  %v4721 = vpack.c.bf16 %v4281, %v4281
  %v4722 = vpack.c.bf16 %v4287, %v4287
  %v4723 = vpack.c.bf16 %v4293, %v4293
  %v4724 = vpack.c.bf16 %v4299, %v4299
  %v4725 = vpack.c.bf16 %v4305, %v4305
  %v4726 = vpack.c.bf16 %v4311, %v4311
  %v4727 = vpack.c.bf16 %v4317, %v4317
  %v4728 = vpack.c.bf16 %v4323, %v4323
  %v4729 = vpack.c.bf16 %v4329, %v4329
  %v4730 = vpack.c.bf16 %v4335, %v4335
  %v4731 = vpack.c.bf16 %v4341, %v4341
  %v4732 = vpack.c.bf16 %v4347, %v4347
  %v4733 = vpack.c.bf16 %v4353, %v4353
  %v4734 = vpack.c.bf16 %v4359, %v4359
  %v4735 = vpack.c.bf16 %v4365, %v4365
  %v4736 = vpack.c.bf16 %v4371, %v4371
  %v4737 = vpack.c.bf16 %v4377, %v4377
  %v4738 = vpack.c.bf16 %v4383, %v4383
  %v4739 = vpack.c.bf16 %v4389, %v4389
  %v4740 = vpack.c.bf16 %v4395, %v4395
  %v4741 = vpack.c.bf16 %v4401, %v4401
  %v4742 = vpack.c.bf16 %v4407, %v4407
  %v4743 = vpack.c.bf16 %v4413, %v4413
  %v4744 = vpack.c.bf16 %v4419, %v4419
  %v4745 = vpack.c.bf16 %v4425, %v4425
  %v4746 = vpack.c.bf16 %v4431, %v4431
  %v4747 = vpack.c.bf16 %v4437, %v4437
  %v4748 = vpack.c.bf16 %v4443, %v4443
  %v4749 = vpack.c.bf16 %v4449, %v4449
  %v4750 = vpack.c.bf16 %v4455, %v4455
  %v4751 = vpack.c.bf16 %v4461, %v4461
  %v4752 = vpack.c.bf16 %v4467, %v4467
  %v4753 = vpack.c.bf16 %v4473, %v4473
  %v4754 = vpack.c.bf16 %v4479, %v4479
  %v4755 = vpack.c.bf16 %v4485, %v4485
  %v4756 = vpack.c.bf16 %v4491, %v4491
  %v4757 = vpack.c.bf16 %v4497, %v4497
  %v4758 = vpack.c.bf16 %v4503, %v4503
  %v4759 = vpack.c.bf16 %v4509, %v4509
  %v4760 = vpack.c.bf16 %v4515, %v4515
  %v4761 = vpack.c.bf16 %v4521, %v4521
  %v4762 = vpack.c.bf16 %v4527, %v4527
  %v4763 = vpack.c.bf16 %v4533, %v4533
  %v4764 = vpack.c.bf16 %v4539, %v4539
  %v4765 = vpack.c.bf16 %v4545, %v4545
  %v4766 = vpack.c.bf16 %v4551, %v4551
  %v4767 = vpack.c.bf16 %v4557, %v4557
  %v4768 = vpack.c.bf16 %v4563, %v4563
  %v4769 = vpack.c.bf16 %v4569, %v4569
  %v4770 = vpack.c.bf16 %v4575, %v4575
  %v4771 = vpack.c.bf16 %v4581, %v4581
  %v4772 = vpack.c.bf16 %v4587, %v4587
  %v4773 = vpack.c.bf16 %v4593, %v4593
  %v4774 = vpack.c.bf16 %v4599, %v4599
  %v4775 = vpack.c.bf16 %v4605, %v4605
  %v4776 = vpack.c.bf16 %v4611, %v4611
  %v4777 = vpack.c.bf16 %v4617, %v4617
  %v4778 = vpack.c.bf16 %v4623, %v4623
  %v4779 = vpack.c.bf16 %v4629, %v4629
  %v4780 = vpack.c.bf16 %v4635, %v4635
  %v4781 = vpack.c.bf16 %v4641, %v4641
  %v4782 = vpack.c.bf16 %v4647, %v4647
  %v4783 = vpack.c.bf16 %v4653, %v4653
  %v4784 = vpack.c.bf16 %v4659, %v4659
  %v4785 = vpack.c.bf16 %v4665, %v4665
  %v4786 = vld [vmem:[%s4] sm:$0xf]
  %v4787 = vld [vmem:[%s4 + $0x4] sm:$0xf]
  %v4788 = vld [vmem:[%s4 + $0x8] sm:$0xf]
  %v4789 = vld [vmem:[%s4 + $0xc] sm:$0xf]
  %v4790 = vld [vmem:[%s4 + $0x10] sm:$0xf]
  %v4791 = vld [vmem:[%s4 + $0x14] sm:$0xf]
  %v4792 = vld [vmem:[%s4 + $0x18] sm:$0xf]
  %v4793 = vld [vmem:[%s4 + $0x1c] sm:$0xf]
  %v4794 = vld [vmem:[%s4 + $0x20] sm:$0xf]
  %v4795 = vld [vmem:[%s4 + $0x24] sm:$0xf]
  %v4796 = vld [vmem:[%s4 + $0x28] sm:$0xf]
  %v4797 = vld [vmem:[%s4 + $0x2c] sm:$0xf]
  %v4798 = vld [vmem:[%s4 + $0x30] sm:$0xf]
  %v4799 = vld [vmem:[%s4 + $0x34] sm:$0xf]
  %v4800 = vld [vmem:[%s4 + $0x38] sm:$0xf]
  %v4801 = vld [vmem:[%s4 + $0x3c] sm:$0xf]
  %v4802 = vld [vmem:[%s4 + $0x40] sm:$0xf]
  %v4803 = vld [vmem:[%s4 + $0x44] sm:$0xf]
  %v4804 = vld [vmem:[%s4 + $0x48] sm:$0xf]
  %v4805 = vld [vmem:[%s4 + $0x4c] sm:$0xf]
  %v4806 = vld [vmem:[%s4 + $0x50] sm:$0xf]
  %v4807 = vld [vmem:[%s4 + $0x54] sm:$0xf]
  %v4808 = vld [vmem:[%s4 + $0x58] sm:$0xf]
  %v4809 = vld [vmem:[%s4 + $0x5c] sm:$0xf]
  %v4810 = vld [vmem:[%s4 + $0x60] sm:$0xf]
  %v4811 = vld [vmem:[%s4 + $0x64] sm:$0xf]
  %v4812 = vld [vmem:[%s4 + $0x68] sm:$0xf]
  %v4813 = vld [vmem:[%s4 + $0x6c] sm:$0xf]
  %v4814 = vld [vmem:[%s4 + $0x70] sm:$0xf]
  %v4815 = vld [vmem:[%s4 + $0x74] sm:$0xf]
  %v4816 = vld [vmem:[%s4 + $0x78] sm:$0xf]
  %v4817 = vld [vmem:[%s4 + $0x7c] sm:$0xf]
  %v4818 = vld [vmem:[%s4 + $0x80] sm:$0xf]
  %v4819 = vld [vmem:[%s4 + $0x84] sm:$0xf]
  %v4820 = vld [vmem:[%s4 + $0x88] sm:$0xf]
  %v4821 = vld [vmem:[%s4 + $0x8c] sm:$0xf]
  %v4822 = vld [vmem:[%s4 + $0x90] sm:$0xf]
  %v4823 = vld [vmem:[%s4 + $0x94] sm:$0xf]
  %v4824 = vld [vmem:[%s4 + $0x98] sm:$0xf]
  %v4825 = vld [vmem:[%s4 + $0x9c] sm:$0xf]
  %v4826 = vld [vmem:[%s4 + $0xa0] sm:$0xf]
  %v4827 = vld [vmem:[%s4 + $0xa4] sm:$0xf]
  %v4828 = vld [vmem:[%s4 + $0xa8] sm:$0xf]
  %v4829 = vld [vmem:[%s4 + $0xac] sm:$0xf]
  %v4830 = vld [vmem:[%s4 + $0xb0] sm:$0xf]
  %v4831 = vld [vmem:[%s4 + $0xb4] sm:$0xf]
  %v4832 = vld [vmem:[%s4 + $0xb8] sm:$0xf]
  %v4833 = vld [vmem:[%s4 + $0xbc] sm:$0xf]
  %v4834 = vld [vmem:[%s4 + $0xc0] sm:$0xf]
  %v4835 = vld [vmem:[%s4 + $0xc4] sm:$0xf]
  %v4836 = vld [vmem:[%s4 + $0xc8] sm:$0xf]
  %v4837 = vld [vmem:[%s4 + $0xcc] sm:$0xf]
  %v4838 = vld [vmem:[%s4 + $0xd0] sm:$0xf]
  %v4839 = vld [vmem:[%s4 + $0xd4] sm:$0xf]
  %v4840 = vld [vmem:[%s4 + $0xd8] sm:$0xf]
  %v4841 = vld [vmem:[%s4 + $0xdc] sm:$0xf]
  %v4842 = vld [vmem:[%s4 + $0xe0] sm:$0xf]
  %v4843 = vld [vmem:[%s4 + $0xe4] sm:$0xf]
  %v4844 = vld [vmem:[%s4 + $0xe8] sm:$0xf]
  %v4845 = vld [vmem:[%s4 + $0xec] sm:$0xf]
  %v4846 = vld [vmem:[%s4 + $0xf0] sm:$0xf]
  %v4847 = vld [vmem:[%s4 + $0xf4] sm:$0xf]
  %v4848 = vld [vmem:[%s4 + $0xf8] sm:$0xf]
  %v4849 = vld [vmem:[%s4 + $0xfc] sm:$0xf]
  %v4850 = vld [vmem:[%s4 + $0x100] sm:$0xf]
  %v4851 = vld [vmem:[%s4 + $0x104] sm:$0xf]
  %v4852 = vld [vmem:[%s4 + $0x108] sm:$0xf]
  %v4853 = vld [vmem:[%s4 + $0x10c] sm:$0xf]
  %v4854 = vld [vmem:[%s4 + $0x110] sm:$0xf]
  %v4855 = vld [vmem:[%s4 + $0x114] sm:$0xf]
  %v4856 = vld [vmem:[%s4 + $0x118] sm:$0xf]
  %v4857 = vld [vmem:[%s4 + $0x11c] sm:$0xf]
  %v4858 = vld [vmem:[%s4 + $0x120] sm:$0xf]
  %v4859 = vld [vmem:[%s4 + $0x124] sm:$0xf]
  %v4860 = vld [vmem:[%s4 + $0x128] sm:$0xf]
  %v4861 = vld [vmem:[%s4 + $0x12c] sm:$0xf]
  %v4862 = vld [vmem:[%s4 + $0x130] sm:$0xf]
  %v4863 = vld [vmem:[%s4 + $0x134] sm:$0xf]
  %v4864 = vld [vmem:[%s4 + $0x138] sm:$0xf]
  %v4865 = vld [vmem:[%s4 + $0x13c] sm:$0xf]
  %v4866 = vld [vmem:[%s4 + $0x140] sm:$0xf]
  %v4867 = vld [vmem:[%s4 + $0x144] sm:$0xf]
  %v4868 = vld [vmem:[%s4 + $0x148] sm:$0xf]
  %v4869 = vld [vmem:[%s4 + $0x14c] sm:$0xf]
  %v4870 = vld [vmem:[%s4 + $0x150] sm:$0xf]
  %v4871 = vld [vmem:[%s4 + $0x154] sm:$0xf]
  %v4872 = vld [vmem:[%s4 + $0x158] sm:$0xf]
  %v4873 = vld [vmem:[%s4 + $0x15c] sm:$0xf]
  %v4874 = vld [vmem:[%s4 + $0x160] sm:$0xf]
  %v4875 = vld [vmem:[%s4 + $0x164] sm:$0xf]
  %v4876 = vld [vmem:[%s4 + $0x168] sm:$0xf]
  %v4877 = vld [vmem:[%s4 + $0x16c] sm:$0xf]
  %v4878 = vld [vmem:[%s4 + $0x170] sm:$0xf]
  %v4879 = vld [vmem:[%s4 + $0x174] sm:$0xf]
  %v4880 = vld [vmem:[%s4 + $0x178] sm:$0xf]
  %v4881 = vld [vmem:[%s4 + $0x17c] sm:$0xf]
  %v4882 = vld [vmem:[%s4 + $0x180] sm:$0xf]
  %v4883 = vld [vmem:[%s4 + $0x184] sm:$0xf]
  %v4884 = vld [vmem:[%s4 + $0x188] sm:$0xf]
  %v4885 = vld [vmem:[%s4 + $0x18c] sm:$0xf]
  %v4886 = vld [vmem:[%s4 + $0x190] sm:$0xf]
  %v4887 = vld [vmem:[%s4 + $0x194] sm:$0xf]
  %v4888 = vld [vmem:[%s4 + $0x198] sm:$0xf]
  %v4889 = vld [vmem:[%s4 + $0x19c] sm:$0xf]
  %v4890 = vld [vmem:[%s4 + $0x1a0] sm:$0xf]
  %v4891 = vld [vmem:[%s4 + $0x1a4] sm:$0xf]
  %v4892 = vld [vmem:[%s4 + $0x1a8] sm:$0xf]
  %v4893 = vld [vmem:[%s4 + $0x1ac] sm:$0xf]
  %v4894 = vld [vmem:[%s4 + $0x1b0] sm:$0xf]
  %v4895 = vld [vmem:[%s4 + $0x1b4] sm:$0xf]
  %v4896 = vld [vmem:[%s4 + $0x1b8] sm:$0xf]
  %v4897 = vld [vmem:[%s4 + $0x1bc] sm:$0xf]
  %v4898 = vld [vmem:[%s4 + $0x1c0] sm:$0xf]
  %v4899 = vld [vmem:[%s4 + $0x1c4] sm:$0xf]
  %v4900 = vld [vmem:[%s4 + $0x1c8] sm:$0xf]
  %v4901 = vld [vmem:[%s4 + $0x1cc] sm:$0xf]
  %v4902 = vld [vmem:[%s4 + $0x1d0] sm:$0xf]
  %v4903 = vld [vmem:[%s4 + $0x1d4] sm:$0xf]
  %v4904 = vld [vmem:[%s4 + $0x1d8] sm:$0xf]
  %v4905 = vld [vmem:[%s4 + $0x1dc] sm:$0xf]
  %v4906 = vld [vmem:[%s4 + $0x1e0] sm:$0xf]
  %v4907 = vld [vmem:[%s4 + $0x1e4] sm:$0xf]
  %v4908 = vld [vmem:[%s4 + $0x1e8] sm:$0xf]
  %v4909 = vld [vmem:[%s4 + $0x1ec] sm:$0xf]
  %v4910 = vld [vmem:[%s4 + $0x1f0] sm:$0xf]
  %v4911 = vld [vmem:[%s4 + $0x1f4] sm:$0xf]
  %v4912 = vld [vmem:[%s4 + $0x1f8] sm:$0xf]
  %v4913 = vld [vmem:[%s4 + $0x1fc] sm:$0xf]
  %v4914 = vld [vmem:[%s4 + $0x200] sm:$0xf]
  %v4915 = vld [vmem:[%s4 + $0x204] sm:$0xf]
  %v4916 = vld [vmem:[%s4 + $0x208] sm:$0xf]
  %v4917 = vld [vmem:[%s4 + $0x20c] sm:$0xf]
  %v4918 = vld [vmem:[%s4 + $0x210] sm:$0xf]
  %v4919 = vld [vmem:[%s4 + $0x214] sm:$0xf]
  %v4920 = vld [vmem:[%s4 + $0x218] sm:$0xf]
  %v4921 = vld [vmem:[%s4 + $0x21c] sm:$0xf]
  %v4922 = vld [vmem:[%s4 + $0x220] sm:$0xf]
  %v4923 = vld [vmem:[%s4 + $0x224] sm:$0xf]
  %v4924 = vld [vmem:[%s4 + $0x228] sm:$0xf]
  %v4925 = vld [vmem:[%s4 + $0x22c] sm:$0xf]
  %v4926 = vld [vmem:[%s4 + $0x230] sm:$0xf]
  %v4927 = vld [vmem:[%s4 + $0x234] sm:$0xf]
  %v4928 = vld [vmem:[%s4 + $0x238] sm:$0xf]
  %v4929 = vld [vmem:[%s4 + $0x23c] sm:$0xf]
  %v4930 = vld [vmem:[%s4 + $0x240] sm:$0xf]
  %v4931 = vld [vmem:[%s4 + $0x244] sm:$0xf]
  %v4932 = vld [vmem:[%s4 + $0x248] sm:$0xf]
  %v4933 = vld [vmem:[%s4 + $0x24c] sm:$0xf]
  %v4934 = vld [vmem:[%s4 + $0x250] sm:$0xf]
  %v4935 = vld [vmem:[%s4 + $0x254] sm:$0xf]
  %v4936 = vld [vmem:[%s4 + $0x258] sm:$0xf]
  %v4937 = vld [vmem:[%s4 + $0x25c] sm:$0xf]
  %v4938 = vld [vmem:[%s4 + $0x260] sm:$0xf]
  %v4939 = vld [vmem:[%s4 + $0x264] sm:$0xf]
  %v4940 = vld [vmem:[%s4 + $0x268] sm:$0xf]
  %v4941 = vld [vmem:[%s4 + $0x26c] sm:$0xf]
  %v4942 = vld [vmem:[%s4 + $0x270] sm:$0xf]
  %v4943 = vld [vmem:[%s4 + $0x274] sm:$0xf]
  %v4944 = vld [vmem:[%s4 + $0x278] sm:$0xf]
  %v4945 = vld [vmem:[%s4 + $0x27c] sm:$0xf]
  %v4946 = vld [vmem:[%s4 + $0x280] sm:$0xf]
  %v4947 = vld [vmem:[%s4 + $0x284] sm:$0xf]
  %v4948 = vld [vmem:[%s4 + $0x288] sm:$0xf]
  %v4949 = vld [vmem:[%s4 + $0x28c] sm:$0xf]
  %v4950 = vld [vmem:[%s4 + $0x290] sm:$0xf]
  %v4951 = vld [vmem:[%s4 + $0x294] sm:$0xf]
  %v4952 = vld [vmem:[%s4 + $0x298] sm:$0xf]
  %v4953 = vld [vmem:[%s4 + $0x29c] sm:$0xf]
  %v4954 = vld [vmem:[%s4 + $0x2a0] sm:$0xf]
  %v4955 = vld [vmem:[%s4 + $0x2a4] sm:$0xf]
  %v4956 = vld [vmem:[%s4 + $0x2a8] sm:$0xf]
  %v4957 = vld [vmem:[%s4 + $0x2ac] sm:$0xf]
  %v4958 = vld [vmem:[%s4 + $0x2b0] sm:$0xf]
  %v4959 = vld [vmem:[%s4 + $0x2b4] sm:$0xf]
  %v4960 = vld [vmem:[%s4 + $0x2b8] sm:$0xf]
  %v4961 = vld [vmem:[%s4 + $0x2bc] sm:$0xf]
  %v4962 = vld [vmem:[%s4 + $0x2c0] sm:$0xf]
  %v4963 = vld [vmem:[%s4 + $0x2c4] sm:$0xf]
  %v4964 = vld [vmem:[%s4 + $0x2c8] sm:$0xf]
  %v4965 = vld [vmem:[%s4 + $0x2cc] sm:$0xf]
  %v4966 = vld [vmem:[%s4 + $0x2d0] sm:$0xf]
  %v4967 = vld [vmem:[%s4 + $0x2d4] sm:$0xf]
  %v4968 = vld [vmem:[%s4 + $0x2d8] sm:$0xf]
  %v4969 = vld [vmem:[%s4 + $0x2dc] sm:$0xf]
  %v4970 = vld [vmem:[%s4 + $0x2e0] sm:$0xf]
  %v4971 = vld [vmem:[%s4 + $0x2e4] sm:$0xf]
  %v4972 = vld [vmem:[%s4 + $0x2e8] sm:$0xf]
  %v4973 = vld [vmem:[%s4 + $0x2ec] sm:$0xf]
  %v4974 = vld [vmem:[%s4 + $0x2f0] sm:$0xf]
  %v4975 = vld [vmem:[%s4 + $0x2f4] sm:$0xf]
  %v4976 = vld [vmem:[%s4 + $0x2f8] sm:$0xf]
  %v4977 = vld [vmem:[%s4 + $0x2fc] sm:$0xf]
  %v4978 = vld [vmem:[%s4 + $0x300] sm:$0xf]
  %v4979 = vld [vmem:[%s4 + $0x304] sm:$0xf]
  %v4980 = vld [vmem:[%s4 + $0x308] sm:$0xf]
  %v4981 = vld [vmem:[%s4 + $0x30c] sm:$0xf]
  %v4982 = vld [vmem:[%s4 + $0x310] sm:$0xf]
  %v4983 = vld [vmem:[%s4 + $0x314] sm:$0xf]
  %v4984 = vld [vmem:[%s4 + $0x318] sm:$0xf]
  %v4985 = vld [vmem:[%s4 + $0x31c] sm:$0xf]
  %v4986 = vld [vmem:[%s4 + $0x320] sm:$0xf]
  %v4987 = vld [vmem:[%s4 + $0x324] sm:$0xf]
  %v4988 = vld [vmem:[%s4 + $0x328] sm:$0xf]
  %v4989 = vld [vmem:[%s4 + $0x32c] sm:$0xf]
  %v4990 = vld [vmem:[%s4 + $0x330] sm:$0xf]
  %v4991 = vld [vmem:[%s4 + $0x334] sm:$0xf]
  %v4992 = vld [vmem:[%s4 + $0x338] sm:$0xf]
  %v4993 = vld [vmem:[%s4 + $0x33c] sm:$0xf]
  %v4994 = vld [vmem:[%s4 + $0x340] sm:$0xf]
  %v4995 = vld [vmem:[%s4 + $0x344] sm:$0xf]
  %v4996 = vld [vmem:[%s4 + $0x348] sm:$0xf]
  %v4997 = vld [vmem:[%s4 + $0x34c] sm:$0xf]
  %v4998 = vld [vmem:[%s4 + $0x350] sm:$0xf]
  %v4999 = vld [vmem:[%s4 + $0x354] sm:$0xf]
  %v5000 = vld [vmem:[%s4 + $0x358] sm:$0xf]
  %v5001 = vld [vmem:[%s4 + $0x35c] sm:$0xf]
  %v5002 = vld [vmem:[%s4 + $0x360] sm:$0xf]
  %v5003 = vld [vmem:[%s4 + $0x364] sm:$0xf]
  %v5004 = vld [vmem:[%s4 + $0x368] sm:$0xf]
  %v5005 = vld [vmem:[%s4 + $0x36c] sm:$0xf]
  %v5006 = vld [vmem:[%s4 + $0x370] sm:$0xf]
  %v5007 = vld [vmem:[%s4 + $0x374] sm:$0xf]
  %v5008 = vld [vmem:[%s4 + $0x378] sm:$0xf]
  %v5009 = vld [vmem:[%s4 + $0x37c] sm:$0xf]
  %v5010 = vld [vmem:[%s4 + $0x380] sm:$0xf]
  %v5011 = vld [vmem:[%s4 + $0x384] sm:$0xf]
  %v5012 = vld [vmem:[%s4 + $0x388] sm:$0xf]
  %v5013 = vld [vmem:[%s4 + $0x38c] sm:$0xf]
  %v5014 = vld [vmem:[%s4 + $0x390] sm:$0xf]
  %v5015 = vld [vmem:[%s4 + $0x394] sm:$0xf]
  %v5016 = vld [vmem:[%s4 + $0x398] sm:$0xf]
  %v5017 = vld [vmem:[%s4 + $0x39c] sm:$0xf]
  %v5018 = vld [vmem:[%s4 + $0x3a0] sm:$0xf]
  %v5019 = vld [vmem:[%s4 + $0x3a4] sm:$0xf]
  %v5020 = vld [vmem:[%s4 + $0x3a8] sm:$0xf]
  %v5021 = vld [vmem:[%s4 + $0x3ac] sm:$0xf]
  %v5022 = vld [vmem:[%s4 + $0x3b0] sm:$0xf]
  %v5023 = vld [vmem:[%s4 + $0x3b4] sm:$0xf]
  %v5024 = vld [vmem:[%s4 + $0x3b8] sm:$0xf]
  %v5025 = vld [vmem:[%s4 + $0x3bc] sm:$0xf]
  %v5026 = vld [vmem:[%s5] sm:$0x1]
  %v5028 = vlaneseq
  %v5029 = vshrl.u32 %v5028, 7
  %v5030 = vsub.s32 0, %v5029
  %v5031 = vrot.slane %v5026, %v5030
  %v5153 = vunpack.c.l.b16 %v4666
  %v5154 = vunpack.c.l.b16 %v4667
  %v5155 = vunpack.c.l.b16 %v4668
  %v5156 = vunpack.c.l.b16 %v4669
  %v5157 = vunpack.c.l.b16 %v4670
  %v5158 = vunpack.c.l.b16 %v4671
  %v5159 = vunpack.c.l.b16 %v4672
  %v5160 = vunpack.c.l.b16 %v4673
  %v5161 = vunpack.c.l.b16 %v4674
  %v5162 = vunpack.c.l.b16 %v4675
  %v5163 = vunpack.c.l.b16 %v4676
  %v5164 = vunpack.c.l.b16 %v4677
  %v5165 = vunpack.c.l.b16 %v4678
  %v5166 = vunpack.c.l.b16 %v4679
  %v5167 = vunpack.c.l.b16 %v4680
  %v5168 = vunpack.c.l.b16 %v4681
  %v5169 = vunpack.c.l.b16 %v4682
  %v5170 = vunpack.c.l.b16 %v4683
  %v5171 = vunpack.c.l.b16 %v4684
  %v5172 = vunpack.c.l.b16 %v4685
  %v5173 = vunpack.c.l.b16 %v4686
  %v5174 = vunpack.c.l.b16 %v4687
  %v5175 = vunpack.c.l.b16 %v4688
  %v5176 = vunpack.c.l.b16 %v4689
  %v5177 = vunpack.c.l.b16 %v4690
  %v5178 = vunpack.c.l.b16 %v4691
  %v5179 = vunpack.c.l.b16 %v4692
  %v5180 = vunpack.c.l.b16 %v4693
  %v5181 = vunpack.c.l.b16 %v4694
  %v5182 = vunpack.c.l.b16 %v4695
  %v5183 = vunpack.c.l.b16 %v4696
  %v5184 = vunpack.c.l.b16 %v4697
  %v5185 = vunpack.c.l.b16 %v4698
  %v5186 = vunpack.c.l.b16 %v4699
  %v5187 = vunpack.c.l.b16 %v4700
  %v5188 = vunpack.c.l.b16 %v4701
  %v5189 = vunpack.c.l.b16 %v4702
  %v5190 = vunpack.c.l.b16 %v4703
  %v5191 = vunpack.c.l.b16 %v4704
  %v5192 = vunpack.c.l.b16 %v4705
  %v5193 = vunpack.c.l.b16 %v4706
  %v5194 = vunpack.c.l.b16 %v4707
  %v5195 = vunpack.c.l.b16 %v4708
  %v5196 = vunpack.c.l.b16 %v4709
  %v5197 = vunpack.c.l.b16 %v4710
  %v5198 = vunpack.c.l.b16 %v4711
  %v5199 = vunpack.c.l.b16 %v4712
  %v5200 = vunpack.c.l.b16 %v4713
  %v5201 = vunpack.c.l.b16 %v4714
  %v5202 = vunpack.c.l.b16 %v4715
  %v5203 = vunpack.c.l.b16 %v4716
  %v5204 = vunpack.c.l.b16 %v4717
  %v5205 = vunpack.c.l.b16 %v4718
  %v5206 = vunpack.c.l.b16 %v4719
  %v5207 = vunpack.c.l.b16 %v4720
  %v5208 = vunpack.c.l.b16 %v4721
  %v5209 = vunpack.c.l.b16 %v4722
  %v5210 = vunpack.c.l.b16 %v4723
  %v5211 = vunpack.c.l.b16 %v4724
  %v5212 = vunpack.c.l.b16 %v4725
  %v5213 = vunpack.c.l.b16 %v4726
  %v5214 = vunpack.c.l.b16 %v4727
  %v5215 = vunpack.c.l.b16 %v4728
  %v5216 = vunpack.c.l.b16 %v4729
  %v5217 = vunpack.c.l.b16 %v4730
  %v5218 = vunpack.c.l.b16 %v4731
  %v5219 = vunpack.c.l.b16 %v4732
  %v5220 = vunpack.c.l.b16 %v4733
  %v5221 = vunpack.c.l.b16 %v4734
  %v5222 = vunpack.c.l.b16 %v4735
  %v5223 = vunpack.c.l.b16 %v4736
  %v5224 = vunpack.c.l.b16 %v4737
  %v5225 = vunpack.c.l.b16 %v4738
  %v5226 = vunpack.c.l.b16 %v4739
  %v5227 = vunpack.c.l.b16 %v4740
  %v5228 = vunpack.c.l.b16 %v4741
  %v5229 = vunpack.c.l.b16 %v4742
  %v5230 = vunpack.c.l.b16 %v4743
  %v5231 = vunpack.c.l.b16 %v4744
  %v5232 = vunpack.c.l.b16 %v4745
  %v5233 = vunpack.c.l.b16 %v4746
  %v5234 = vunpack.c.l.b16 %v4747
  %v5235 = vunpack.c.l.b16 %v4748
  %v5236 = vunpack.c.l.b16 %v4749
  %v5237 = vunpack.c.l.b16 %v4750
  %v5238 = vunpack.c.l.b16 %v4751
  %v5239 = vunpack.c.l.b16 %v4752
  %v5240 = vunpack.c.l.b16 %v4753
  %v5241 = vunpack.c.l.b16 %v4754
  %v5242 = vunpack.c.l.b16 %v4755
  %v5243 = vunpack.c.l.b16 %v4756
  %v5244 = vunpack.c.l.b16 %v4757
  %v5245 = vunpack.c.l.b16 %v4758
  %v5246 = vunpack.c.l.b16 %v4759
  %v5247 = vunpack.c.l.b16 %v4760
  %v5248 = vunpack.c.l.b16 %v4761
  %v5249 = vunpack.c.l.b16 %v4762
  %v5250 = vunpack.c.l.b16 %v4763
  %v5251 = vunpack.c.l.b16 %v4764
  %v5252 = vunpack.c.l.b16 %v4765
  %v5253 = vunpack.c.l.b16 %v4766
  %v5254 = vunpack.c.l.b16 %v4767
  %v5255 = vunpack.c.l.b16 %v4768
  %v5256 = vunpack.c.l.b16 %v4769
  %v5257 = vunpack.c.l.b16 %v4770
  %v5258 = vunpack.c.l.b16 %v4771
  %v5259 = vunpack.c.l.b16 %v4772
  %v5260 = vunpack.c.l.b16 %v4773
  %v5261 = vunpack.c.l.b16 %v4774
  %v5262 = vunpack.c.l.b16 %v4775
  %v5263 = vunpack.c.l.b16 %v4776
  %v5264 = vunpack.c.l.b16 %v4777
  %v5265 = vunpack.c.l.b16 %v4778
  %v5266 = vunpack.c.l.b16 %v4779
  %v5267 = vunpack.c.l.b16 %v4780
  %v5268 = vunpack.c.l.b16 %v4781
  %v5269 = vunpack.c.l.b16 %v4782
  %v5270 = vunpack.c.l.b16 %v4783
  %v5271 = vunpack.c.l.b16 %v4784
  %v5272 = vunpack.c.l.b16 %v4785
  %vm5273 = vcmask 1041409
  %v5274 = vsel %vm5273, %v5168, %v5153
  %vm5275 = vcmask 1042434
  %v5276 = vsel %vm5275, %v5183, %v5274
  %vm5277 = vcmask 1043459
  %v5278 = vsel %vm5277, %v5198, %v5276
  %vm5279 = vcmask 1044484
  %v5280 = vsel %vm5279, %v5213, %v5278
  %vm5281 = vcmask 1045509
  %v5282 = vsel %vm5281, %v5228, %v5280
  %vm5283 = vcmask 1046534
  %v5284 = vsel %vm5283, %v5243, %v5282
  %vm5285 = vcmask 1047559
  %v5286 = vsel %vm5285, %v5258, %v5284
  %v5287 = vsel %vm5273, %v5169, %v5154
  %v5288 = vsel %vm5275, %v5184, %v5287
  %v5289 = vsel %vm5277, %v5199, %v5288
  %v5290 = vsel %vm5279, %v5214, %v5289
  %v5291 = vsel %vm5281, %v5229, %v5290
  %v5292 = vsel %vm5283, %v5244, %v5291
  %v5293 = vsel %vm5285, %v5259, %v5292
  %v5294 = vsel %vm5273, %v5170, %v5155
  %v5295 = vsel %vm5275, %v5185, %v5294
  %v5296 = vsel %vm5277, %v5200, %v5295
  %v5297 = vsel %vm5279, %v5215, %v5296
  %v5298 = vsel %vm5281, %v5230, %v5297
  %v5299 = vsel %vm5283, %v5245, %v5298
  %v5300 = vsel %vm5285, %v5260, %v5299
  %v5301 = vsel %vm5273, %v5171, %v5156
  %v5302 = vsel %vm5275, %v5186, %v5301
  %v5303 = vsel %vm5277, %v5201, %v5302
  %v5304 = vsel %vm5279, %v5216, %v5303
  %v5305 = vsel %vm5281, %v5231, %v5304
  %v5306 = vsel %vm5283, %v5246, %v5305
  %v5307 = vsel %vm5285, %v5261, %v5306
  %v5308 = vsel %vm5273, %v5172, %v5157
  %v5309 = vsel %vm5275, %v5187, %v5308
  %v5310 = vsel %vm5277, %v5202, %v5309
  %v5311 = vsel %vm5279, %v5217, %v5310
  %v5312 = vsel %vm5281, %v5232, %v5311
  %v5313 = vsel %vm5283, %v5247, %v5312
  %v5314 = vsel %vm5285, %v5262, %v5313
  %v5315 = vsel %vm5273, %v5173, %v5158
  %v5316 = vsel %vm5275, %v5188, %v5315
  %v5317 = vsel %vm5277, %v5203, %v5316
  %v5318 = vsel %vm5279, %v5218, %v5317
  %v5319 = vsel %vm5281, %v5233, %v5318
  %v5320 = vsel %vm5283, %v5248, %v5319
  %v5321 = vsel %vm5285, %v5263, %v5320
  %v5322 = vsel %vm5273, %v5174, %v5159
  %v5323 = vsel %vm5275, %v5189, %v5322
  %v5324 = vsel %vm5277, %v5204, %v5323
  %v5325 = vsel %vm5279, %v5219, %v5324
  %v5326 = vsel %vm5281, %v5234, %v5325
  %v5327 = vsel %vm5283, %v5249, %v5326
  %v5328 = vsel %vm5285, %v5264, %v5327
  %v5329 = vsel %vm5273, %v5175, %v5160
  %v5330 = vsel %vm5275, %v5190, %v5329
  %v5331 = vsel %vm5277, %v5205, %v5330
  %v5332 = vsel %vm5279, %v5220, %v5331
  %v5333 = vsel %vm5281, %v5235, %v5332
  %v5334 = vsel %vm5283, %v5250, %v5333
  %v5335 = vsel %vm5285, %v5265, %v5334
  %v5336 = vsel %vm5273, %v5176, %v5161
  %v5337 = vsel %vm5275, %v5191, %v5336
  %v5338 = vsel %vm5277, %v5206, %v5337
  %v5339 = vsel %vm5279, %v5221, %v5338
  %v5340 = vsel %vm5281, %v5236, %v5339
  %v5341 = vsel %vm5283, %v5251, %v5340
  %v5342 = vsel %vm5285, %v5266, %v5341
  %v5343 = vsel %vm5273, %v5177, %v5162
  %v5344 = vsel %vm5275, %v5192, %v5343
  %v5345 = vsel %vm5277, %v5207, %v5344
  %v5346 = vsel %vm5279, %v5222, %v5345
  %v5347 = vsel %vm5281, %v5237, %v5346
  %v5348 = vsel %vm5283, %v5252, %v5347
  %v5349 = vsel %vm5285, %v5267, %v5348
  %v5350 = vsel %vm5273, %v5178, %v5163
  %v5351 = vsel %vm5275, %v5193, %v5350
  %v5352 = vsel %vm5277, %v5208, %v5351
  %v5353 = vsel %vm5279, %v5223, %v5352
  %v5354 = vsel %vm5281, %v5238, %v5353
  %v5355 = vsel %vm5283, %v5253, %v5354
  %v5356 = vsel %vm5285, %v5268, %v5355
  %v5357 = vsel %vm5273, %v5179, %v5164
  %v5358 = vsel %vm5275, %v5194, %v5357
  %v5359 = vsel %vm5277, %v5209, %v5358
  %v5360 = vsel %vm5279, %v5224, %v5359
  %v5361 = vsel %vm5281, %v5239, %v5360
  %v5362 = vsel %vm5283, %v5254, %v5361
  %v5363 = vsel %vm5285, %v5269, %v5362
  %v5364 = vsel %vm5273, %v5180, %v5165
  %v5365 = vsel %vm5275, %v5195, %v5364
  %v5366 = vsel %vm5277, %v5210, %v5365
  %v5367 = vsel %vm5279, %v5225, %v5366
  %v5368 = vsel %vm5281, %v5240, %v5367
  %v5369 = vsel %vm5283, %v5255, %v5368
  %v5370 = vsel %vm5285, %v5270, %v5369
  %v5371 = vsel %vm5273, %v5181, %v5166
  %v5372 = vsel %vm5275, %v5196, %v5371
  %v5373 = vsel %vm5277, %v5211, %v5372
  %v5374 = vsel %vm5279, %v5226, %v5373
  %v5375 = vsel %vm5281, %v5241, %v5374
  %v5376 = vsel %vm5283, %v5256, %v5375
  %v5377 = vsel %vm5285, %v5271, %v5376
  %v5378 = vsel %vm5273, %v5182, %v5167
  %v5379 = vsel %vm5275, %v5197, %v5378
  %v5380 = vsel %vm5277, %v5212, %v5379
  %v5381 = vsel %vm5279, %v5227, %v5380
  %v5382 = vsel %vm5281, %v5242, %v5381
  %v5383 = vsel %vm5283, %v5257, %v5382
  %v5384 = vsel %vm5285, %v5272, %v5383
  %v5385 = vpack.c.b16 %v5286, %v5286
  %v5386 = vpack.c.b16 %v5293, %v5293
  %v5387 = vpack.c.b16 %v5300, %v5300
  %v5388 = vpack.c.b16 %v5307, %v5307
  %v5389 = vpack.c.b16 %v5314, %v5314
  %v5390 = vpack.c.b16 %v5321, %v5321
  %v5391 = vpack.c.b16 %v5328, %v5328
  %v5392 = vpack.c.b16 %v5335, %v5335
  %v5393 = vpack.c.b16 %v5342, %v5342
  %v5394 = vpack.c.b16 %v5349, %v5349
  %v5395 = vpack.c.b16 %v5356, %v5356
  %v5396 = vpack.c.b16 %v5363, %v5363
  %v5397 = vpack.c.b16 %v5370, %v5370
  %v5398 = vpack.c.b16 %v5377, %v5377
  %v5399 = vpack.c.b16 %v5384, %v5384
  %v5655 = vunpack.c.l.b16 %v4786
  %v5656 = vunpack.c.l.b16 %v4787
  %v5657 = vunpack.c.l.b16 %v4788
  %v5658 = vunpack.c.l.b16 %v4789
  %v5659 = vunpack.c.l.b16 %v4790
  %v5660 = vunpack.c.l.b16 %v4791
  %v5661 = vunpack.c.l.b16 %v4792
  %v5662 = vunpack.c.l.b16 %v4793
  %v5663 = vunpack.c.l.b16 %v4794
  %v5664 = vunpack.c.l.b16 %v4795
  %v5665 = vunpack.c.l.b16 %v4796
  %v5666 = vunpack.c.l.b16 %v4797
  %v5667 = vunpack.c.l.b16 %v4798
  %v5668 = vunpack.c.l.b16 %v4799
  %v5669 = vunpack.c.l.b16 %v4800
  %v5670 = vunpack.c.l.b16 %v4801
  %v5671 = vunpack.c.l.b16 %v4802
  %v5672 = vunpack.c.l.b16 %v4803
  %v5673 = vunpack.c.l.b16 %v4804
  %v5674 = vunpack.c.l.b16 %v4805
  %v5675 = vunpack.c.l.b16 %v4806
  %v5676 = vunpack.c.l.b16 %v4807
  %v5677 = vunpack.c.l.b16 %v4808
  %v5678 = vunpack.c.l.b16 %v4809
  %v5679 = vunpack.c.l.b16 %v4810
  %v5680 = vunpack.c.l.b16 %v4811
  %v5681 = vunpack.c.l.b16 %v4812
  %v5682 = vunpack.c.l.b16 %v4813
  %v5683 = vunpack.c.l.b16 %v4814
  %v5684 = vunpack.c.l.b16 %v4815
  %v5685 = vunpack.c.l.b16 %v4816
  %v5686 = vunpack.c.l.b16 %v4817
  %v5687 = vunpack.c.l.b16 %v4818
  %v5688 = vunpack.c.l.b16 %v4819
  %v5689 = vunpack.c.l.b16 %v4820
  %v5690 = vunpack.c.l.b16 %v4821
  %v5691 = vunpack.c.l.b16 %v4822
  %v5692 = vunpack.c.l.b16 %v4823
  %v5693 = vunpack.c.l.b16 %v4824
  %v5694 = vunpack.c.l.b16 %v4825
  %v5695 = vunpack.c.l.b16 %v4826
  %v5696 = vunpack.c.l.b16 %v4827
  %v5697 = vunpack.c.l.b16 %v4828
  %v5698 = vunpack.c.l.b16 %v4829
  %v5699 = vunpack.c.l.b16 %v4830
  %v5700 = vunpack.c.l.b16 %v4831
  %v5701 = vunpack.c.l.b16 %v4832
  %v5702 = vunpack.c.l.b16 %v4833
  %v5703 = vunpack.c.l.b16 %v4834
  %v5704 = vunpack.c.l.b16 %v4835
  %v5705 = vunpack.c.l.b16 %v4836
  %v5706 = vunpack.c.l.b16 %v4837
  %v5707 = vunpack.c.l.b16 %v4838
  %v5708 = vunpack.c.l.b16 %v4839
  %v5709 = vunpack.c.l.b16 %v4840
  %v5710 = vunpack.c.l.b16 %v4841
  %v5711 = vunpack.c.l.b16 %v4842
  %v5712 = vunpack.c.l.b16 %v4843
  %v5713 = vunpack.c.l.b16 %v4844
  %v5714 = vunpack.c.l.b16 %v4845
  %v5715 = vunpack.c.l.b16 %v4846
  %v5716 = vunpack.c.l.b16 %v4847
  %v5717 = vunpack.c.l.b16 %v4848
  %v5718 = vunpack.c.l.b16 %v4849
  %v5719 = vunpack.c.l.b16 %v4850
  %v5720 = vunpack.c.l.b16 %v4851
  %v5721 = vunpack.c.l.b16 %v4852
  %v5722 = vunpack.c.l.b16 %v4853
  %v5723 = vunpack.c.l.b16 %v4854
  %v5724 = vunpack.c.l.b16 %v4855
  %v5725 = vunpack.c.l.b16 %v4856
  %v5726 = vunpack.c.l.b16 %v4857
  %v5727 = vunpack.c.l.b16 %v4858
  %v5728 = vunpack.c.l.b16 %v4859
  %v5729 = vunpack.c.l.b16 %v4860
  %v5730 = vunpack.c.l.b16 %v4861
  %v5731 = vunpack.c.l.b16 %v4862
  %v5732 = vunpack.c.l.b16 %v4863
  %v5733 = vunpack.c.l.b16 %v4864
  %v5734 = vunpack.c.l.b16 %v4865
  %v5735 = vunpack.c.l.b16 %v4866
  %v5736 = vunpack.c.l.b16 %v4867
  %v5737 = vunpack.c.l.b16 %v4868
  %v5738 = vunpack.c.l.b16 %v4869
  %v5739 = vunpack.c.l.b16 %v4870
  %v5740 = vunpack.c.l.b16 %v4871
  %v5741 = vunpack.c.l.b16 %v4872
  %v5742 = vunpack.c.l.b16 %v4873
  %v5743 = vunpack.c.l.b16 %v4874
  %v5744 = vunpack.c.l.b16 %v4875
  %v5745 = vunpack.c.l.b16 %v4876
  %v5746 = vunpack.c.l.b16 %v4877
  %v5747 = vunpack.c.l.b16 %v4878
  %v5748 = vunpack.c.l.b16 %v4879
  %v5749 = vunpack.c.l.b16 %v4880
  %v5750 = vunpack.c.l.b16 %v4881
  %v5751 = vunpack.c.l.b16 %v4882
  %v5752 = vunpack.c.l.b16 %v4883
  %v5753 = vunpack.c.l.b16 %v4884
  %v5754 = vunpack.c.l.b16 %v4885
  %v5755 = vunpack.c.l.b16 %v4886
  %v5756 = vunpack.c.l.b16 %v4887
  %v5757 = vunpack.c.l.b16 %v4888
  %v5758 = vunpack.c.l.b16 %v4889
  %v5759 = vunpack.c.l.b16 %v4890
  %v5760 = vunpack.c.l.b16 %v4891
  %v5761 = vunpack.c.l.b16 %v4892
  %v5762 = vunpack.c.l.b16 %v4893
  %v5763 = vunpack.c.l.b16 %v4894
  %v5764 = vunpack.c.l.b16 %v4895
  %v5765 = vunpack.c.l.b16 %v4896
  %v5766 = vunpack.c.l.b16 %v4897
  %v5767 = vunpack.c.l.b16 %v4898
  %v5768 = vunpack.c.l.b16 %v4899
  %v5769 = vunpack.c.l.b16 %v4900
  %v5770 = vunpack.c.l.b16 %v4901
  %v5771 = vunpack.c.l.b16 %v4902
  %v5772 = vunpack.c.l.b16 %v4903
  %v5773 = vunpack.c.l.b16 %v4904
  %v5774 = vunpack.c.l.b16 %v4905
  %v5775 = vunpack.c.l.b16 %v4906
  %v5776 = vunpack.c.l.b16 %v4907
  %v5777 = vunpack.c.l.b16 %v4908
  %v5778 = vunpack.c.l.b16 %v4909
  %v5779 = vunpack.c.l.b16 %v4910
  %v5780 = vunpack.c.l.b16 %v4911
  %v5781 = vunpack.c.l.b16 %v4912
  %v5782 = vunpack.c.l.b16 %v4913
  %v5783 = vunpack.c.l.b16 %v4914
  %v5784 = vunpack.c.l.b16 %v4915
  %v5785 = vunpack.c.l.b16 %v4916
  %v5786 = vunpack.c.l.b16 %v4917
  %v5787 = vunpack.c.l.b16 %v4918
  %v5788 = vunpack.c.l.b16 %v4919
  %v5789 = vunpack.c.l.b16 %v4920
  %v5790 = vunpack.c.l.b16 %v4921
  %v5791 = vunpack.c.l.b16 %v4922
  %v5792 = vunpack.c.l.b16 %v4923
  %v5793 = vunpack.c.l.b16 %v4924
  %v5794 = vunpack.c.l.b16 %v4925
  %v5795 = vunpack.c.l.b16 %v4926
  %v5796 = vunpack.c.l.b16 %v4927
  %v5797 = vunpack.c.l.b16 %v4928
  %v5798 = vunpack.c.l.b16 %v4929
  %v5799 = vunpack.c.l.b16 %v4930
  %v5800 = vunpack.c.l.b16 %v4931
  %v5801 = vunpack.c.l.b16 %v4932
  %v5802 = vunpack.c.l.b16 %v4933
  %v5803 = vunpack.c.l.b16 %v4934
  %v5804 = vunpack.c.l.b16 %v4935
  %v5805 = vunpack.c.l.b16 %v4936
  %v5806 = vunpack.c.l.b16 %v4937
  %v5807 = vunpack.c.l.b16 %v4938
  %v5808 = vunpack.c.l.b16 %v4939
  %v5809 = vunpack.c.l.b16 %v4940
  %v5810 = vunpack.c.l.b16 %v4941
  %v5811 = vunpack.c.l.b16 %v4942
  %v5812 = vunpack.c.l.b16 %v4943
  %v5813 = vunpack.c.l.b16 %v4944
  %v5814 = vunpack.c.l.b16 %v4945
  %v5815 = vunpack.c.l.b16 %v4946
  %v5816 = vunpack.c.l.b16 %v4947
  %v5817 = vunpack.c.l.b16 %v4948
  %v5818 = vunpack.c.l.b16 %v4949
  %v5819 = vunpack.c.l.b16 %v4950
  %v5820 = vunpack.c.l.b16 %v4951
  %v5821 = vunpack.c.l.b16 %v4952
  %v5822 = vunpack.c.l.b16 %v4953
  %v5823 = vunpack.c.l.b16 %v4954
  %v5824 = vunpack.c.l.b16 %v4955
  %v5825 = vunpack.c.l.b16 %v4956
  %v5826 = vunpack.c.l.b16 %v4957
  %v5827 = vunpack.c.l.b16 %v4958
  %v5828 = vunpack.c.l.b16 %v4959
  %v5829 = vunpack.c.l.b16 %v4960
  %v5830 = vunpack.c.l.b16 %v4961
  %v5831 = vunpack.c.l.b16 %v4962
  %v5832 = vunpack.c.l.b16 %v4963
  %v5833 = vunpack.c.l.b16 %v4964
  %v5834 = vunpack.c.l.b16 %v4965
  %v5835 = vunpack.c.l.b16 %v4966
  %v5836 = vunpack.c.l.b16 %v4967
  %v5837 = vunpack.c.l.b16 %v4968
  %v5838 = vunpack.c.l.b16 %v4969
  %v5839 = vunpack.c.l.b16 %v4970
  %v5840 = vunpack.c.l.b16 %v4971
  %v5841 = vunpack.c.l.b16 %v4972
  %v5842 = vunpack.c.l.b16 %v4973
  %v5843 = vunpack.c.l.b16 %v4974
  %v5844 = vunpack.c.l.b16 %v4975
  %v5845 = vunpack.c.l.b16 %v4976
  %v5846 = vunpack.c.l.b16 %v4977
  %v5847 = vunpack.c.l.b16 %v4978
  %v5848 = vunpack.c.l.b16 %v4979
  %v5849 = vunpack.c.l.b16 %v4980
  %v5850 = vunpack.c.l.b16 %v4981
  %v5851 = vunpack.c.l.b16 %v4982
  %v5852 = vunpack.c.l.b16 %v4983
  %v5853 = vunpack.c.l.b16 %v4984
  %v5854 = vunpack.c.l.b16 %v4985
  %v5855 = vunpack.c.l.b16 %v4986
  %v5856 = vunpack.c.l.b16 %v4987
  %v5857 = vunpack.c.l.b16 %v4988
  %v5858 = vunpack.c.l.b16 %v4989
  %v5859 = vunpack.c.l.b16 %v4990
  %v5860 = vunpack.c.l.b16 %v4991
  %v5861 = vunpack.c.l.b16 %v4992
  %v5862 = vunpack.c.l.b16 %v4993
  %v5863 = vunpack.c.l.b16 %v4994
  %v5864 = vunpack.c.l.b16 %v4995
  %v5865 = vunpack.c.l.b16 %v4996
  %v5866 = vunpack.c.l.b16 %v4997
  %v5867 = vunpack.c.l.b16 %v4998
  %v5868 = vunpack.c.l.b16 %v4999
  %v5869 = vunpack.c.l.b16 %v5000
  %v5870 = vunpack.c.l.b16 %v5001
  %v5871 = vunpack.c.l.b16 %v5002
  %v5872 = vunpack.c.l.b16 %v5003
  %v5873 = vunpack.c.l.b16 %v5004
  %v5874 = vunpack.c.l.b16 %v5005
  %v5875 = vunpack.c.l.b16 %v5006
  %v5876 = vunpack.c.l.b16 %v5007
  %v5877 = vunpack.c.l.b16 %v5008
  %v5878 = vunpack.c.l.b16 %v5009
  %v5879 = vunpack.c.l.b16 %v5010
  %v5880 = vunpack.c.l.b16 %v5011
  %v5881 = vunpack.c.l.b16 %v5012
  %v5882 = vunpack.c.l.b16 %v5013
  %v5883 = vunpack.c.l.b16 %v5014
  %v5884 = vunpack.c.l.b16 %v5015
  %v5885 = vunpack.c.l.b16 %v5016
  %v5886 = vunpack.c.l.b16 %v5017
  %v5887 = vunpack.c.l.b16 %v5018
  %v5888 = vunpack.c.l.b16 %v5019
  %v5889 = vunpack.c.l.b16 %v5020
  %v5890 = vunpack.c.l.b16 %v5021
  %v5891 = vunpack.c.l.b16 %v5022
  %v5892 = vunpack.c.l.b16 %v5023
  %v5893 = vunpack.c.l.b16 %v5024
  %v5894 = vunpack.c.l.b16 %v5025
  %v5895 = vpack.c.b16 %v5656, %v5655
  %v5896 = vpack.c.b16 %v5658, %v5657
  %v5897 = vpack.c.b16 %v5660, %v5659
  %v5898 = vpack.c.b16 %v5662, %v5661
  %v5899 = vpack.c.b16 %v5664, %v5663
  %v5900 = vpack.c.b16 %v5666, %v5665
  %v5901 = vpack.c.b16 %v5668, %v5667
  %v5902 = vpack.c.b16 %v5670, %v5669
  %v5903 = vpack.c.b16 %v5672, %v5671
  %v5904 = vpack.c.b16 %v5674, %v5673
  %v5905 = vpack.c.b16 %v5676, %v5675
  %v5906 = vpack.c.b16 %v5678, %v5677
  %v5907 = vpack.c.b16 %v5680, %v5679
  %v5908 = vpack.c.b16 %v5682, %v5681
  %v5909 = vpack.c.b16 %v5684, %v5683
  %v5910 = vpack.c.b16 %v5686, %v5685
  %v5911 = vpack.c.b16 %v5688, %v5687
  %v5912 = vpack.c.b16 %v5690, %v5689
  %v5913 = vpack.c.b16 %v5692, %v5691
  %v5914 = vpack.c.b16 %v5694, %v5693
  %v5915 = vpack.c.b16 %v5696, %v5695
  %v5916 = vpack.c.b16 %v5698, %v5697
  %v5917 = vpack.c.b16 %v5700, %v5699
  %v5918 = vpack.c.b16 %v5702, %v5701
  %v5919 = vpack.c.b16 %v5704, %v5703
  %v5920 = vpack.c.b16 %v5706, %v5705
  %v5921 = vpack.c.b16 %v5708, %v5707
  %v5922 = vpack.c.b16 %v5710, %v5709
  %v5923 = vpack.c.b16 %v5712, %v5711
  %v5924 = vpack.c.b16 %v5714, %v5713
  %v5925 = vpack.c.b16 %v5716, %v5715
  %v5926 = vpack.c.b16 %v5718, %v5717
  %v5927 = vpack.c.b16 %v5720, %v5719
  %v5928 = vpack.c.b16 %v5722, %v5721
  %v5929 = vpack.c.b16 %v5724, %v5723
  %v5930 = vpack.c.b16 %v5726, %v5725
  %v5931 = vpack.c.b16 %v5728, %v5727
  %v5932 = vpack.c.b16 %v5730, %v5729
  %v5933 = vpack.c.b16 %v5732, %v5731
  %v5934 = vpack.c.b16 %v5734, %v5733
  %v5935 = vpack.c.b16 %v5736, %v5735
  %v5936 = vpack.c.b16 %v5738, %v5737
  %v5937 = vpack.c.b16 %v5740, %v5739
  %v5938 = vpack.c.b16 %v5742, %v5741
  %v5939 = vpack.c.b16 %v5744, %v5743
  %v5940 = vpack.c.b16 %v5746, %v5745
  %v5941 = vpack.c.b16 %v5748, %v5747
  %v5942 = vpack.c.b16 %v5750, %v5749
  %v5943 = vpack.c.b16 %v5752, %v5751
  %v5944 = vpack.c.b16 %v5754, %v5753
  %v5945 = vpack.c.b16 %v5756, %v5755
  %v5946 = vpack.c.b16 %v5758, %v5757
  %v5947 = vpack.c.b16 %v5760, %v5759
  %v5948 = vpack.c.b16 %v5762, %v5761
  %v5949 = vpack.c.b16 %v5764, %v5763
  %v5950 = vpack.c.b16 %v5766, %v5765
  %v5951 = vpack.c.b16 %v5768, %v5767
  %v5952 = vpack.c.b16 %v5770, %v5769
  %v5953 = vpack.c.b16 %v5772, %v5771
  %v5954 = vpack.c.b16 %v5774, %v5773
  %v5955 = vpack.c.b16 %v5776, %v5775
  %v5956 = vpack.c.b16 %v5778, %v5777
  %v5957 = vpack.c.b16 %v5780, %v5779
  %v5958 = vpack.c.b16 %v5782, %v5781
  %v5959 = vpack.c.b16 %v5784, %v5783
  %v5960 = vpack.c.b16 %v5786, %v5785
  %v5961 = vpack.c.b16 %v5788, %v5787
  %v5962 = vpack.c.b16 %v5790, %v5789
  %v5963 = vpack.c.b16 %v5792, %v5791
  %v5964 = vpack.c.b16 %v5794, %v5793
  %v5965 = vpack.c.b16 %v5796, %v5795
  %v5966 = vpack.c.b16 %v5798, %v5797
  %v5967 = vpack.c.b16 %v5800, %v5799
  %v5968 = vpack.c.b16 %v5802, %v5801
  %v5969 = vpack.c.b16 %v5804, %v5803
  %v5970 = vpack.c.b16 %v5806, %v5805
  %v5971 = vpack.c.b16 %v5808, %v5807
  %v5972 = vpack.c.b16 %v5810, %v5809
  %v5973 = vpack.c.b16 %v5812, %v5811
  %v5974 = vpack.c.b16 %v5814, %v5813
  %v5975 = vpack.c.b16 %v5816, %v5815
  %v5976 = vpack.c.b16 %v5818, %v5817
  %v5977 = vpack.c.b16 %v5820, %v5819
  %v5978 = vpack.c.b16 %v5822, %v5821
  %v5979 = vpack.c.b16 %v5824, %v5823
  %v5980 = vpack.c.b16 %v5826, %v5825
  %v5981 = vpack.c.b16 %v5828, %v5827
  %v5982 = vpack.c.b16 %v5830, %v5829
  %v5983 = vpack.c.b16 %v5832, %v5831
  %v5984 = vpack.c.b16 %v5834, %v5833
  %v5985 = vpack.c.b16 %v5836, %v5835
  %v5986 = vpack.c.b16 %v5838, %v5837
  %v5987 = vpack.c.b16 %v5840, %v5839
  %v5988 = vpack.c.b16 %v5842, %v5841
  %v5989 = vpack.c.b16 %v5844, %v5843
  %v5990 = vpack.c.b16 %v5846, %v5845
  %v5991 = vpack.c.b16 %v5848, %v5847
  %v5992 = vpack.c.b16 %v5850, %v5849
  %v5993 = vpack.c.b16 %v5852, %v5851
  %v5994 = vpack.c.b16 %v5854, %v5853
  %v5995 = vpack.c.b16 %v5856, %v5855
  %v5996 = vpack.c.b16 %v5858, %v5857
  %v5997 = vpack.c.b16 %v5860, %v5859
  %v5998 = vpack.c.b16 %v5862, %v5861
  %v5999 = vpack.c.b16 %v5864, %v5863
  %v6000 = vpack.c.b16 %v5866, %v5865
  %v6001 = vpack.c.b16 %v5868, %v5867
  %v6002 = vpack.c.b16 %v5870, %v5869
  %v6003 = vpack.c.b16 %v5872, %v5871
  %v6004 = vpack.c.b16 %v5874, %v5873
  %v6005 = vpack.c.b16 %v5876, %v5875
  %v6006 = vpack.c.b16 %v5878, %v5877
  %v6007 = vpack.c.b16 %v5880, %v5879
  %v6008 = vpack.c.b16 %v5882, %v5881
  %v6009 = vpack.c.b16 %v5884, %v5883
  %v6010 = vpack.c.b16 %v5886, %v5885
  %v6011 = vpack.c.b16 %v5888, %v5887
  %v6012 = vpack.c.b16 %v5890, %v5889
  %v6013 = vpack.c.b16 %v5892, %v5891
  %v6014 = vpack.c.b16 %v5894, %v5893
  %6135 = vmatprep.subr.bf16.mxu0 0
  %6136 = vmatpush1.bf16.msra.mxu0 %v5902
  %6137 = vmatprep.subr.bf16.mxu0 0
  %6138 = vmatpush1.bf16.msra.mxu0 %v5901
  %6139 = vmatprep.subr.bf16.mxu0 0
  %6140 = vmatpush1.bf16.msra.mxu0 %v5900
  %6141 = vmatprep.subr.bf16.mxu0 0
  %6142 = vmatpush1.bf16.msra.mxu0 %v5899
  %6143 = vmatprep.subr.bf16.mxu0 0
  %6144 = vmatpush1.bf16.msra.mxu0 %v5898
  %6145 = vmatprep.subr.bf16.mxu0 0
  %6146 = vmatpush1.bf16.msra.mxu0 %v5897
  %6147 = vmatprep.subr.bf16.mxu0 0
  %6148 = vmatpush1.bf16.msra.mxu0 %v5896
  %6149 = vmatprep.subr.bf16.mxu0 0
  %6150 = vmatpush1.bf16.msra.mxu0 %v5895
  %6151 = vmatprep.subr.bf16.mxu0 0
  %6152 = vmatpush2.bf16.msra.mxu0 %v5910
  %6153 = vmatprep.subr.bf16.mxu0 0
  %6154 = vmatpush2.bf16.msra.mxu0 %v5909
  %6155 = vmatprep.subr.bf16.mxu0 0
  %6156 = vmatpush2.bf16.msra.mxu0 %v5908
  %6157 = vmatprep.subr.bf16.mxu0 0
  %6158 = vmatpush2.bf16.msra.mxu0 %v5907
  %6159 = vmatprep.subr.bf16.mxu0 0
  %6160 = vmatpush2.bf16.msra.mxu0 %v5906
  %6161 = vmatprep.subr.bf16.mxu0 0
  %6162 = vmatpush2.bf16.msra.mxu0 %v5905
  %6163 = vmatprep.subr.bf16.mxu0 0
  %6164 = vmatpush2.bf16.msra.mxu0 %v5904
  %6165 = vmatprep.subr.bf16.mxu0 0
  %6166 = vmatpush2.bf16.msra.mxu0 %v5903
  %6167 = vmatprep.mubr.bf16.mxu0 %v5386
  %6168 = vmatmul.mubr.bf16.gmra.mxu0 %v5385
  %v6169 = vpop.f32.mrf.mxu0
  %v6170 = vadd.f32 %v5031, %v6169
  %v6171 = vpop.f32.mrf.mxu0
  %v6172 = vpop.f32.mrf.mxu0
  %v6173 = vpop.f32.mrf.mxu0
  %6174 = vdwg.mxu0
  %6175 = vmatprep.subr.bf16.mxu0 0
  %6176 = vmatpush1.bf16.msra.mxu0 %v5918
  %6177 = vmatprep.subr.bf16.mxu0 0
  %6178 = vmatpush1.bf16.msra.mxu0 %v5917
  %6179 = vmatprep.subr.bf16.mxu0 0
  %6180 = vmatpush1.bf16.msra.mxu0 %v5916
  %6181 = vmatprep.subr.bf16.mxu0 0
  %6182 = vmatpush1.bf16.msra.mxu0 %v5915
  %6183 = vmatprep.subr.bf16.mxu0 0
  %6184 = vmatpush1.bf16.msra.mxu0 %v5914
  %6185 = vmatprep.subr.bf16.mxu0 0
  %6186 = vmatpush1.bf16.msra.mxu0 %v5913
  %6187 = vmatprep.subr.bf16.mxu0 0
  %6188 = vmatpush1.bf16.msra.mxu0 %v5912
  %6189 = vmatprep.subr.bf16.mxu0 0
  %6190 = vmatpush1.bf16.msra.mxu0 %v5911
  %6191 = vmatprep.subr.bf16.mxu0 0
  %6192 = vmatpush2.bf16.msra.mxu0 %v5926
  %6193 = vmatprep.subr.bf16.mxu0 0
  %6194 = vmatpush2.bf16.msra.mxu0 %v5925
  %6195 = vmatprep.subr.bf16.mxu0 0
  %6196 = vmatpush2.bf16.msra.mxu0 %v5924
  %6197 = vmatprep.subr.bf16.mxu0 0
  %6198 = vmatpush2.bf16.msra.mxu0 %v5923
  %6199 = vmatprep.subr.bf16.mxu0 0
  %6200 = vmatpush2.bf16.msra.mxu0 %v5922
  %6201 = vmatprep.subr.bf16.mxu0 0
  %6202 = vmatpush2.bf16.msra.mxu0 %v5921
  %6203 = vmatprep.subr.bf16.mxu0 0
  %6204 = vmatpush2.bf16.msra.mxu0 %v5920
  %6205 = vmatprep.subr.bf16.mxu0 0
  %6206 = vmatpush2.bf16.msra.mxu0 %v5919
  %6207 = vmatprep.mubr.bf16.mxu0 %v5388
  %6208 = vmatmul.mubr.bf16.gmra.mxu0 %v5387
  %v6209 = vpop.f32.mrf.mxu0
  %v6210 = vadd.f32 %v6170, %v6209
  %v6211 = vpop.f32.mrf.mxu0
  %v6212 = vpop.f32.mrf.mxu0
  %v6213 = vpop.f32.mrf.mxu0
  %6214 = vdwg.mxu0
  %6215 = vmatprep.subr.bf16.mxu0 0
  %6216 = vmatpush1.bf16.msra.mxu0 %v5934
  %6217 = vmatprep.subr.bf16.mxu0 0
  %6218 = vmatpush1.bf16.msra.mxu0 %v5933
  %6219 = vmatprep.subr.bf16.mxu0 0
  %6220 = vmatpush1.bf16.msra.mxu0 %v5932
  %6221 = vmatprep.subr.bf16.mxu0 0
  %6222 = vmatpush1.bf16.msra.mxu0 %v5931
  %6223 = vmatprep.subr.bf16.mxu0 0
  %6224 = vmatpush1.bf16.msra.mxu0 %v5930
  %6225 = vmatprep.subr.bf16.mxu0 0
  %6226 = vmatpush1.bf16.msra.mxu0 %v5929
  %6227 = vmatprep.subr.bf16.mxu0 0
  %6228 = vmatpush1.bf16.msra.mxu0 %v5928
  %6229 = vmatprep.subr.bf16.mxu0 0
  %6230 = vmatpush1.bf16.msra.mxu0 %v5927
  %6231 = vmatprep.subr.bf16.mxu0 0
  %6232 = vmatpush2.bf16.msra.mxu0 %v5942
  %6233 = vmatprep.subr.bf16.mxu0 0
  %6234 = vmatpush2.bf16.msra.mxu0 %v5941
  %6235 = vmatprep.subr.bf16.mxu0 0
  %6236 = vmatpush2.bf16.msra.mxu0 %v5940
  %6237 = vmatprep.subr.bf16.mxu0 0
  %6238 = vmatpush2.bf16.msra.mxu0 %v5939
  %6239 = vmatprep.subr.bf16.mxu0 0
  %6240 = vmatpush2.bf16.msra.mxu0 %v5938
  %6241 = vmatprep.subr.bf16.mxu0 0
  %6242 = vmatpush2.bf16.msra.mxu0 %v5937
  %6243 = vmatprep.subr.bf16.mxu0 0
  %6244 = vmatpush2.bf16.msra.mxu0 %v5936
  %6245 = vmatprep.subr.bf16.mxu0 0
  %6246 = vmatpush2.bf16.msra.mxu0 %v5935
  %6247 = vmatprep.mubr.bf16.mxu0 %v5390
  %6248 = vmatmul.mubr.bf16.gmra.mxu0 %v5389
  %v6249 = vpop.f32.mrf.mxu0
  %v6250 = vadd.f32 %v6210, %v6249
  %v6251 = vpop.f32.mrf.mxu0
  %v6252 = vpop.f32.mrf.mxu0
  %v6253 = vpop.f32.mrf.mxu0
  %6254 = vdwg.mxu0
  %6255 = vmatprep.subr.bf16.mxu0 0
  %6256 = vmatpush1.bf16.msra.mxu0 %v5950
  %6257 = vmatprep.subr.bf16.mxu0 0
  %6258 = vmatpush1.bf16.msra.mxu0 %v5949
  %6259 = vmatprep.subr.bf16.mxu0 0
  %6260 = vmatpush1.bf16.msra.mxu0 %v5948
  %6261 = vmatprep.subr.bf16.mxu0 0
  %6262 = vmatpush1.bf16.msra.mxu0 %v5947
  %6263 = vmatprep.subr.bf16.mxu0 0
  %6264 = vmatpush1.bf16.msra.mxu0 %v5946
  %6265 = vmatprep.subr.bf16.mxu0 0
  %6266 = vmatpush1.bf16.msra.mxu0 %v5945
  %6267 = vmatprep.subr.bf16.mxu0 0
  %6268 = vmatpush1.bf16.msra.mxu0 %v5944
  %6269 = vmatprep.subr.bf16.mxu0 0
  %6270 = vmatpush1.bf16.msra.mxu0 %v5943
  %6271 = vmatprep.subr.bf16.mxu0 0
  %6272 = vmatpush2.bf16.msra.mxu0 %v5958
  %6273 = vmatprep.subr.bf16.mxu0 0
  %6274 = vmatpush2.bf16.msra.mxu0 %v5957
  %6275 = vmatprep.subr.bf16.mxu0 0
  %6276 = vmatpush2.bf16.msra.mxu0 %v5956
  %6277 = vmatprep.subr.bf16.mxu0 0
  %6278 = vmatpush2.bf16.msra.mxu0 %v5955
  %6279 = vmatprep.subr.bf16.mxu0 0
  %6280 = vmatpush2.bf16.msra.mxu0 %v5954
  %6281 = vmatprep.subr.bf16.mxu0 0
  %6282 = vmatpush2.bf16.msra.mxu0 %v5953
  %6283 = vmatprep.subr.bf16.mxu0 0
  %6284 = vmatpush2.bf16.msra.mxu0 %v5952
  %6285 = vmatprep.subr.bf16.mxu0 0
  %6286 = vmatpush2.bf16.msra.mxu0 %v5951
  %6287 = vmatprep.mubr.bf16.mxu0 %v5392
  %6288 = vmatmul.mubr.bf16.gmra.mxu0 %v5391
  %v6289 = vpop.f32.mrf.mxu0
  %v6290 = vadd.f32 %v6250, %v6289
  %v6291 = vpop.f32.mrf.mxu0
  %v6292 = vpop.f32.mrf.mxu0
  %v6293 = vpop.f32.mrf.mxu0
  %6294 = vdwg.mxu0
  %6295 = vmatprep.subr.bf16.mxu0 0
  %6296 = vmatpush1.bf16.msra.mxu0 %v5966
  %6297 = vmatprep.subr.bf16.mxu0 0
  %6298 = vmatpush1.bf16.msra.mxu0 %v5965
  %6299 = vmatprep.subr.bf16.mxu0 0
  %6300 = vmatpush1.bf16.msra.mxu0 %v5964
  %6301 = vmatprep.subr.bf16.mxu0 0
  %6302 = vmatpush1.bf16.msra.mxu0 %v5963
  %6303 = vmatprep.subr.bf16.mxu0 0
  %6304 = vmatpush1.bf16.msra.mxu0 %v5962
  %6305 = vmatprep.subr.bf16.mxu0 0
  %6306 = vmatpush1.bf16.msra.mxu0 %v5961
  %6307 = vmatprep.subr.bf16.mxu0 0
  %6308 = vmatpush1.bf16.msra.mxu0 %v5960
  %6309 = vmatprep.subr.bf16.mxu0 0
  %6310 = vmatpush1.bf16.msra.mxu0 %v5959
  %6311 = vmatprep.subr.bf16.mxu0 0
  %6312 = vmatpush2.bf16.msra.mxu0 %v5974
  %6313 = vmatprep.subr.bf16.mxu0 0
  %6314 = vmatpush2.bf16.msra.mxu0 %v5973
  %6315 = vmatprep.subr.bf16.mxu0 0
  %6316 = vmatpush2.bf16.msra.mxu0 %v5972
  %6317 = vmatprep.subr.bf16.mxu0 0
  %6318 = vmatpush2.bf16.msra.mxu0 %v5971
  %6319 = vmatprep.subr.bf16.mxu0 0
  %6320 = vmatpush2.bf16.msra.mxu0 %v5970
  %6321 = vmatprep.subr.bf16.mxu0 0
  %6322 = vmatpush2.bf16.msra.mxu0 %v5969
  %6323 = vmatprep.subr.bf16.mxu0 0
  %6324 = vmatpush2.bf16.msra.mxu0 %v5968
  %6325 = vmatprep.subr.bf16.mxu0 0
  %6326 = vmatpush2.bf16.msra.mxu0 %v5967
  %6327 = vmatprep.mubr.bf16.mxu0 %v5394
  %6328 = vmatmul.mubr.bf16.gmra.mxu0 %v5393
  %v6329 = vpop.f32.mrf.mxu0
  %v6330 = vadd.f32 %v6290, %v6329
  %v6331 = vpop.f32.mrf.mxu0
  %v6332 = vpop.f32.mrf.mxu0
  %v6333 = vpop.f32.mrf.mxu0
  %6334 = vdwg.mxu0
  %6335 = vmatprep.subr.bf16.mxu0 0
  %6336 = vmatpush1.bf16.msra.mxu0 %v5982
  %6337 = vmatprep.subr.bf16.mxu0 0
  %6338 = vmatpush1.bf16.msra.mxu0 %v5981
  %6339 = vmatprep.subr.bf16.mxu0 0
  %6340 = vmatpush1.bf16.msra.mxu0 %v5980
  %6341 = vmatprep.subr.bf16.mxu0 0
  %6342 = vmatpush1.bf16.msra.mxu0 %v5979
  %6343 = vmatprep.subr.bf16.mxu0 0
  %6344 = vmatpush1.bf16.msra.mxu0 %v5978
  %6345 = vmatprep.subr.bf16.mxu0 0
  %6346 = vmatpush1.bf16.msra.mxu0 %v5977
  %6347 = vmatprep.subr.bf16.mxu0 0
  %6348 = vmatpush1.bf16.msra.mxu0 %v5976
  %6349 = vmatprep.subr.bf16.mxu0 0
  %6350 = vmatpush1.bf16.msra.mxu0 %v5975
  %6351 = vmatprep.subr.bf16.mxu0 0
  %6352 = vmatpush2.bf16.msra.mxu0 %v5990
  %6353 = vmatprep.subr.bf16.mxu0 0
  %6354 = vmatpush2.bf16.msra.mxu0 %v5989
  %6355 = vmatprep.subr.bf16.mxu0 0
  %6356 = vmatpush2.bf16.msra.mxu0 %v5988
  %6357 = vmatprep.subr.bf16.mxu0 0
  %6358 = vmatpush2.bf16.msra.mxu0 %v5987
  %6359 = vmatprep.subr.bf16.mxu0 0
  %6360 = vmatpush2.bf16.msra.mxu0 %v5986
  %6361 = vmatprep.subr.bf16.mxu0 0
  %6362 = vmatpush2.bf16.msra.mxu0 %v5985
  %6363 = vmatprep.subr.bf16.mxu0 0
  %6364 = vmatpush2.bf16.msra.mxu0 %v5984
  %6365 = vmatprep.subr.bf16.mxu0 0
  %6366 = vmatpush2.bf16.msra.mxu0 %v5983
  %6367 = vmatprep.mubr.bf16.mxu0 %v5396
  %6368 = vmatmul.mubr.bf16.gmra.mxu0 %v5395
  %v6369 = vpop.f32.mrf.mxu0
  %v6370 = vadd.f32 %v6330, %v6369
  %v6371 = vpop.f32.mrf.mxu0
  %v6372 = vpop.f32.mrf.mxu0
  %v6373 = vpop.f32.mrf.mxu0
  %6374 = vdwg.mxu0
  %6375 = vmatprep.subr.bf16.mxu0 0
  %6376 = vmatpush1.bf16.msra.mxu0 %v5998
  %6377 = vmatprep.subr.bf16.mxu0 0
  %6378 = vmatpush1.bf16.msra.mxu0 %v5997
  %6379 = vmatprep.subr.bf16.mxu0 0
  %6380 = vmatpush1.bf16.msra.mxu0 %v5996
  %6381 = vmatprep.subr.bf16.mxu0 0
  %6382 = vmatpush1.bf16.msra.mxu0 %v5995
  %6383 = vmatprep.subr.bf16.mxu0 0
  %6384 = vmatpush1.bf16.msra.mxu0 %v5994
  %6385 = vmatprep.subr.bf16.mxu0 0
  %6386 = vmatpush1.bf16.msra.mxu0 %v5993
  %6387 = vmatprep.subr.bf16.mxu0 0
  %6388 = vmatpush1.bf16.msra.mxu0 %v5992
  %6389 = vmatprep.subr.bf16.mxu0 0
  %6390 = vmatpush1.bf16.msra.mxu0 %v5991
  %6391 = vmatprep.subr.bf16.mxu0 0
  %6392 = vmatpush2.bf16.msra.mxu0 %v6006
  %6393 = vmatprep.subr.bf16.mxu0 0
  %6394 = vmatpush2.bf16.msra.mxu0 %v6005
  %6395 = vmatprep.subr.bf16.mxu0 0
  %6396 = vmatpush2.bf16.msra.mxu0 %v6004
  %6397 = vmatprep.subr.bf16.mxu0 0
  %6398 = vmatpush2.bf16.msra.mxu0 %v6003
  %6399 = vmatprep.subr.bf16.mxu0 0
  %6400 = vmatpush2.bf16.msra.mxu0 %v6002
  %6401 = vmatprep.subr.bf16.mxu0 0
  %6402 = vmatpush2.bf16.msra.mxu0 %v6001
  %6403 = vmatprep.subr.bf16.mxu0 0
  %6404 = vmatpush2.bf16.msra.mxu0 %v6000
  %6405 = vmatprep.subr.bf16.mxu0 0
  %6406 = vmatpush2.bf16.msra.mxu0 %v5999
  %6407 = vmatprep.mubr.bf16.mxu0 %v5398
  %6408 = vmatmul.mubr.bf16.gmra.mxu0 %v5397
  %v6409 = vpop.f32.mrf.mxu0
  %v6410 = vadd.f32 %v6370, %v6409
  %v6411 = vpop.f32.mrf.mxu0
  %v6412 = vpop.f32.mrf.mxu0
  %v6413 = vpop.f32.mrf.mxu0
  %6414 = vdwg.mxu0
  %6415 = vmatprep.subr.bf16.mxu0 0
  %6416 = vmatpush1.bf16.msra.mxu0 %v6014
  %6417 = vmatprep.subr.bf16.mxu0 0
  %6418 = vmatpush1.bf16.msra.mxu0 %v6013
  %6419 = vmatprep.subr.bf16.mxu0 0
  %6420 = vmatpush1.bf16.msra.mxu0 %v6012
  %6421 = vmatprep.subr.bf16.mxu0 0
  %6422 = vmatpush1.bf16.msra.mxu0 %v6011
  %6423 = vmatprep.subr.bf16.mxu0 0
  %6424 = vmatpush1.bf16.msra.mxu0 %v6010
  %6425 = vmatprep.subr.bf16.mxu0 0
  %6426 = vmatpush1.bf16.msra.mxu0 %v6009
  %6427 = vmatprep.subr.bf16.mxu0 0
  %6428 = vmatpush1.bf16.msra.mxu0 %v6008
  %6429 = vmatprep.subr.bf16.mxu0 0
  %6430 = vmatpush1.bf16.msra.mxu0 %v6007
  %6431 = vmatprep.subr.bf16.mxu0 0
  %6432 = vmatpush2.bf16.msra.mxu0 0
  %6433 = vmatprep.subr.bf16.mxu0 0
  %6434 = vmatpush2.bf16.msra.mxu0 0
  %6435 = vmatprep.subr.bf16.mxu0 0
  %6436 = vmatpush2.bf16.msra.mxu0 0
  %6437 = vmatprep.subr.bf16.mxu0 0
  %6438 = vmatpush2.bf16.msra.mxu0 0
  %6439 = vmatprep.subr.bf16.mxu0 0
  %6440 = vmatpush2.bf16.msra.mxu0 0
  %6441 = vmatprep.subr.bf16.mxu0 0
  %6442 = vmatpush2.bf16.msra.mxu0 0
  %6443 = vmatprep.subr.bf16.mxu0 0
  %6444 = vmatpush2.bf16.msra.mxu0 0
  %6445 = vmatprep.subr.bf16.mxu0 0
  %6446 = vmatpush2.bf16.msra.mxu0 0
  %6447 = vmatprep.mubr.bf16.mxu0 0
  %6448 = vmatmul.mubr.bf16.gmra.mxu0 %v5399
  %v6449 = vpop.f32.mrf.mxu0
  %v6450 = vadd.f32 %v6410, %v6449
  %v6451 = vpop.f32.mrf.mxu0
  %v6452 = vpop.f32.mrf.mxu0
  %v6453 = vpop.f32.mrf.mxu0
  %6454 = vdwg.mxu0
  %6455 = vst [vmem:[%s6] sm:$0xff] %v6450
  // Predicated region
  $region26: #{bert_cnn_forward.1} parent=0 // pred_check
    _
  $region27: #{bert_cnn_forward.1} parent=0 // pred_check_branch
    %6457 = sbr.rel (0) target = $region29
  $region28: #{bert_cnn_forward.1} parent=0 // pred_region
    _
  $region29: #{bert_cnn_forward.1} parent=0 // pred_fallthru
    _
  // Predicated region
  $region30: #{bert_cnn_forward.1} parent=0 // pred_check
    _
  $region31: #{bert_cnn_forward.1} parent=0 // pred_check_branch
    %6459 = sbr.rel (0) target = $region33
  $region32: #{bert_cnn_forward.1} parent=0 // pred_region
    _
  $region33: #{bert_cnn_forward.1} parent=0 // pred_fallthru
    _

</llo_original>
